<compile_context>
chip_gen: v7x
topology: tpu7x:2x2x1
jax: 0.10.0
libtpu: 0.0.40
codegen_flags: <defaults>
</compile_context>

<pallas_src>
import functools
import math

import jax
import jax.numpy as jnp
from jax.experimental import pallas as pl
from jax.experimental.pallas import tpu as pltpu

F32 = jnp.float32


# ----------------------------- Pallas kernels ------------------------------

def _frontend_kernel(frames_ref, dftw_ref, fb_ref, o_ref):
    """Fused mel front-end for one batch element (ATSTTransform).

    One MXU dot against the window-folded [Re | Im] DFT matrix, square,
    one dot against the row-duplicated mel filterbank, power-dB, ATSTNorm —
    all in VMEM, no intermediate HBM round-trips.
    """
    x = frames_ref[0]                                                  # (F, win)
    z = jnp.dot(x, dftw_ref[...], preferred_element_type=jnp.float32)  # (F, 2*NB)
    mel = jnp.dot(z * z, fb_ref[...],
                  preferred_element_type=jnp.float32)                  # (F, n_mels)
    # AmplitudeToDB with stype='power' -> 10*log10 (power scale), top_db=80.
    db = 10.0 * (jnp.log(jnp.maximum(mel, 1e-10)) * (1.0 / math.log(10.0)))
    db = jnp.maximum(db, jnp.max(db) - 80.0)                           # top_db clamp
    db = jnp.clip(db, -50.0, 80.0)                                     # ATSTNorm clamp
    o_ref[0] = (db + 4.26) / 4.57                                      # ATSTNorm affine


def _transformer_kernel(pext_ref, pw_ref, posb_ref,
                        ln1g_ref, ln1b_ref,
                        qw_ref, qb_ref, kw_ref, kb_ref, vw_ref, vb_ref,
                        projw_ref, projb_ref, ln2g_ref, ln2b_ref,
                        fc1w_ref, fc1b_ref, fc2w_ref, fc2b_ref,
                        nfg_ref, nfb_ref, o_ref, x_acc, *, heads):
    """One fused FrameAST encoder step.

    grid = (B, depth): batch element b (parallel, outer), block d (arbitrary,
    inner).  Tokens live in VMEM scratch across the depth axis; the patch
    embed + CLS + pos embed runs at d==0 and norm_frame at d==last.
    """
    d = pl.program_id(1)

    def ln(v, g, b):
        mu = jnp.mean(v, axis=-1, keepdims=True)
        vc = v - mu
        var = jnp.mean(vc * vc, axis=-1, keepdims=True)
        return vc * jax.lax.rsqrt(var + 1e-6) * g + b

    # --- patch embed + CLS token + positional embedding (first block only) ---
    @pl.when(d == 0)
    def _():
        # Row 0 of pext is zero, so row 0 of the matmul is zero and pos_bias
        # supplies cls_token + pos_embed[0] there; rows 1.. get the Conv2d
        # patch embedding (as matmul) + bias + pos_embed[1:].
        x_acc[...] = (jnp.dot(pext_ref[0], pw_ref[...],
                              preferred_element_type=jnp.float32)
                      + posb_ref[...])

    x = x_acc[...]                                                     # (T1, D)
    T1, D = x.shape
    dh = D // heads
    scale = 1.0 / math.sqrt(dh)

    # --- pre-norm multi-head self-attention, all heads in-register ---
    h = ln(x, ln1g_ref[0], ln1b_ref[0])
    q = jnp.dot(h, qw_ref[0], preferred_element_type=jnp.float32) + qb_ref[0]
    k = jnp.dot(h, kw_ref[0], preferred_element_type=jnp.float32) + kb_ref[0]
    v = jnp.dot(h, vw_ref[0], preferred_element_type=jnp.float32) + vb_ref[0]

    col = jax.lax.broadcasted_iota(jnp.int32, (1, D), 1)
    a = jnp.zeros((T1, D), jnp.float32)
    for i in range(heads):
        # Head selection via lane masks (keeps everything lane-dense; the
        # masked columns contribute zero to the contractions).
        m = (col >= i * dh) & (col < (i + 1) * dh)
        qh = jnp.where(m, q, 0.0)
        kh = jnp.where(m, k, 0.0)
        vh = jnp.where(m, v, 0.0)
        s = jax.lax.dot_general(qh, kh, (((1,), (1,)), ((), ())),
                                preferred_element_type=jnp.float32) * scale
        s = s - jnp.max(s, axis=-1, keepdims=True)
        p = jnp.exp(s)
        p = p * pl.reciprocal(jnp.sum(p, axis=-1, keepdims=True), approx=True)
        a = a + jnp.dot(p, vh, preferred_element_type=jnp.float32)

    a = jnp.dot(a, projw_ref[0], preferred_element_type=jnp.float32) + projb_ref[0]
    x = x + a

    # --- pre-norm MLP ---
    h2 = ln(x, ln2g_ref[0], ln2b_ref[0])
    h2 = jnp.dot(h2, fc1w_ref[0], preferred_element_type=jnp.float32) + fc1b_ref[0]
    # TODO(synk): timm ViT MLP uses exact erf GELU; tanh approximation used here.
    c = math.sqrt(2.0 / math.pi)
    h2 = 0.5 * h2 * (1.0 + jnp.tanh(c * (h2 + 0.044715 * h2 * h2 * h2)))
    h2 = jnp.dot(h2, fc2w_ref[0], preferred_element_type=jnp.float32) + fc2b_ref[0]
    x = x + h2
    x_acc[...] = x

    # --- get_intermediate_layers(n=1, scene=False): norm_frame of last block ---
    @pl.when(d == pl.num_programs(1) - 1)
    def _():
        o_ref[0] = ln(x, nfg_ref[...], nfb_ref[...])   # CLS row dropped in wrapper


# ----------------------------- kernel wrappers ------------------------------

def frontend(frames, dft_w, fb_cat, n_mels):
    B, F, win = frames.shape
    two_nb = dft_w.shape[1]
    return pl.pallas_call(
        _frontend_kernel,
        out_shape=jax.ShapeDtypeStruct((B, F, n_mels), F32),
        grid=(B,),
        in_specs=[pl.BlockSpec((1, F, win), lambda b: (b, 0, 0)),
                  pl.BlockSpec((win, two_nb), lambda b: (0, 0)),
                  pl.BlockSpec((two_nb, n_mels), lambda b: (0, 0))],
        out_specs=pl.BlockSpec((1, F, n_mels), lambda b: (b, 0, 0)),
        compiler_params=pltpu.CompilerParams(
            dimension_semantics=("parallel",)),
    )(frames, dft_w, fb_cat)


def transformer(patches_ext, pos_bias, params, cfg):
    B, T1, P = patches_ext.shape
    D = cfg.embed_dim
    Mh = cfg.mlp_hidden
    depth = cfg.depth

    # Split the fused qkv weights once at the JAX level (keeps the parameter
    # layout faithful to the checkpoint while avoiding in-kernel slicing).
    qw = params['qkv_w'][:, :, 0 * D:1 * D]
    kw = params['qkv_w'][:, :, 1 * D:2 * D]
    vw = params['qkv_w'][:, :, 2 * D:3 * D]
    qb = params['qkv_b'][:, :, 0 * D:1 * D]
    kb = params['qkv_b'][:, :, 1 * D:2 * D]
    vb = params['qkv_b'][:, :, 2 * D:3 * D]

    def shared(r, c):
        return pl.BlockSpec((r, c), lambda b, d: (0, 0))

    def per_block(r, c):
        return pl.BlockSpec((1, r, c), lambda b, d: (d, 0, 0))

    kern = functools.partial(_transformer_kernel, heads=cfg.heads)
    return pl.pallas_call(
        kern,
        out_shape=jax.ShapeDtypeStruct((B, T1, D), F32),
        grid=(B, depth),
        in_specs=[
            pl.BlockSpec((1, T1, P), lambda b, d: (b, 0, 0)),  # patches (CLS row zero)
            shared(P, D),                                      # patch_w
            shared(T1, D),                                     # pos_bias
            per_block(1, D), per_block(1, D),                  # ln1 g, b
            per_block(D, D), per_block(1, D),                  # q w, b
            per_block(D, D), per_block(1, D),                  # k w, b
            per_block(D, D), per_block(1, D),                  # v w, b
            per_block(D, D), per_block(1, D),                  # proj w, b
            per_block(1, D), per_block(1, D),                  # ln2 g, b
            per_block(D, Mh), per_block(1, Mh),                # fc1 w, b
            per_block(Mh, D), per_block(1, D),                 # fc2 w, b
            shared(1, D), shared(1, D),                        # norm_frame g, b
        ],
        out_specs=pl.BlockSpec((1, T1, D), lambda b, d: (b, 0, 0)),
        scratch_shapes=[pltpu.VMEM((T1, D), F32)],
        compiler_params=pltpu.CompilerParams(
            dimension_semantics=("parallel", "arbitrary")),
    )(patches_ext, params['patch_w'], pos_bias,
      params['ln1_g'], params['ln1_b'],
      qw, qb, kw, kb, vw, vb,
      params['proj_w'], params['proj_b'],
      params['ln2_g'], params['ln2_b'],
      params['fc1_w'], params['fc1_b'], params['fc2_w'], params['fc2_b'],
      params['norm_frame_g'], params['norm_frame_b'])


# ----------------------------- model definition -----------------------------

class Cfg:
    win = 64          # STFT window / n_fft (torchaudio: 1024)
    hop = 32          # hop_length (torchaudio: 160)
    n_freqs = 33      # win // 2 + 1
    n_mels = 16       # torchaudio: 64
    pw = 4            # patch width of FrameAST Conv2d patch embed
    embed_dim = 32    # FrameAST: 768
    heads = 4         # FrameAST: 12
    depth = 2         # FrameAST: 12
    mlp_hidden = 128  # 4 * embed_dim


def make_consts(cfg):
    n = jnp.arange(cfg.win, dtype=F32)
    window = 0.5 - 0.5 * jnp.cos(2.0 * jnp.pi * n / cfg.win)      # periodic Hann
    k = jnp.arange(cfg.n_freqs, dtype=F32)
    ang = 2.0 * jnp.pi * n[:, None] * k[None, :] / cfg.win
    # Window folded into the DFT; Re and Im columns concatenated so the power
    # spectrum needs only one MXU dot inside the front-end kernel.
    dft_w = window[:, None] * jnp.concatenate([jnp.cos(ang), -jnp.sin(ang)], axis=1)
    # TODO(synk): linear-frequency triangular filterbank stand-in, not
    # torchaudio's HTK/Slaney mel scale.
    freqs = jnp.linspace(0.0, 1.0, cfg.n_freqs)
    pts = jnp.linspace(0.0, 1.0, cfg.n_mels + 2)
    lo, ce, hi = pts[:-2], pts[1:-1], pts[2:]
    up = (freqs[:, None] - lo[None, :]) / (ce - lo)[None, :]
    dn = (hi[None, :] - freqs[:, None]) / (hi - ce)[None, :]
    mel_fb = jnp.maximum(0.0, jnp.minimum(up, dn)).astype(F32)
    # Row-duplicated filterbank: (z*z) @ [fb; fb] == re^2 @ fb + im^2 @ fb.
    fb_cat = jnp.concatenate([mel_fb, mel_fb], axis=0)
    return dict(dft_w=dft_w.astype(F32), fb_cat=fb_cat.astype(F32))


def init_params(key, cfg, num_tokens):
    D = cfg.embed_dim
    P = cfg.n_mels * cfg.pw
    Mh = cfg.mlp_hidden
    dep = cfg.depth
    keys = iter(jax.random.split(key, 16))

    def nrm(shape, scale=0.02):
        return scale * jax.random.normal(next(keys), shape, dtype=F32)

    return {
        'patch_w': nrm((P, D)),
        'patch_b': jnp.zeros((1, D), F32),
        'cls_token': nrm((1, D)),
        'pos_embed': nrm((num_tokens + 1, D)),
        'norm_frame_g': jnp.ones((1, D), F32),
        'norm_frame_b': jnp.zeros((1, D), F32),
        # Per-block weights stacked along a leading depth axis (streamed by the
        # fused transformer kernel's index_map over the depth grid axis).
        'ln1_g': jnp.ones((dep, 1, D), F32), 'ln1_b': jnp.zeros((dep, 1, D), F32),
        'qkv_w': nrm((dep, D, 3 * D)), 'qkv_b': jnp.zeros((dep, 1, 3 * D), F32),
        'proj_w': nrm((dep, D, D)), 'proj_b': jnp.zeros((dep, 1, D), F32),
        'ln2_g': jnp.ones((dep, 1, D), F32), 'ln2_b': jnp.zeros((dep, 1, D), F32),
        'fc1_w': nrm((dep, D, Mh)), 'fc1_b': jnp.zeros((dep, 1, Mh), F32),
        'fc2_w': nrm((dep, Mh, D)), 'fc2_b': jnp.zeros((dep, 1, D), F32),
    }


def atst_forward(waveform, params, consts, cfg):
    """ATST.forward: ATSTTransform mel front-end + FrameAST.get_intermediate_layers(n=1, scene=False)."""
    B, L = waveform.shape
    win, hop = cfg.win, cfg.hop
    F = (L - win) // hop + 1
    T = F // cfg.pw
    P = cfg.n_mels * cfg.pw

    # --- framing (JAX gather; window is folded into the in-kernel DFT matrix) ---
    # TODO(synk): torchaudio Spectrogram center=True reflect padding not applied.
    # TODO(synk): at production hop/win, move framing into the front-end kernel
    # via strided reads instead of this duplicating gather.
    idx = jnp.arange(F)[:, None] * hop + jnp.arange(win)[None, :]
    frames = waveform[:, idx]                                          # (B, F, win)

    mel = frontend(frames, consts['dft_w'], consts['fb_cat'], cfg.n_mels)  # (B,F,n_mels)

    # FrameAST patch embed Conv2d(1, D, (n_mels, pw), stride=(n_mels, pw)):
    # flatten each patch mel-major / time-minor to match the conv weight layout.
    patches = mel.reshape(B, T, cfg.pw, cfg.n_mels)
    patches = jnp.transpose(patches, (0, 1, 3, 2)).reshape(B, T, P)
    # Zero-padded CLS row so the in-kernel patch embed is a single matmul;
    # pos_bias carries cls_token + pos[0] for row 0 and pos[1:] + patch_b else.
    patches_ext = jnp.concatenate([jnp.zeros((B, 1, P), F32), patches], axis=1)
    pos_bias = jnp.concatenate(
        [params['cls_token'] + params['pos_embed'][:1],
         params['pos_embed'][1:] + params['patch_b']], axis=0)         # (T+1, D)

    # TODO(synk): length-based key-padding mask skipped — fake_length=1001 marks every frame valid.
    # TODO(synk): other_emb / set_cls_embed hooks not exercised (None in this forward path).
    out = transformer(patches_ext, pos_bias, params, cfg)              # (B, T+1, D)
    return out[:, 1:, :]                                               # drop CLS -> (B, T, D)


if __name__ == "__main__":
    cfg = Cfg()
    B = 2
    F = 32
    L = cfg.win + (F - 1) * cfg.hop          # 1056 samples
    T = F // cfg.pw                          # 8 tokens

    key = jax.random.PRNGKey(0)
    k_wave, k_par = jax.random.split(key)
    waveform = 0.1 * jax.random.normal(k_wave, (B, L), dtype=F32)

    params = init_params(k_par, cfg, T)
    consts = make_consts(cfg)

    fwd = jax.jit(lambda w, p, c: atst_forward(w, p, c, cfg))
    out = jax.block_until_ready(fwd(waveform, params, consts))

    assert out.shape == (B, T, cfg.embed_dim), out.shape
    assert jnp.all(jnp.isfinite(out))
    print("KERNEL_OK")
</pallas_src>

<mosaic_0001>
module attributes {stable_mosaic.version = 11 : i64} {
  func.func private @main(%arg0: i32) attributes {dimension_semantics = [#tpu.dimension_semantics<core_parallel>], iteration_bounds = array<i64: 2>, tpu.core_type = #tpu.core_type<sc_scalar_subcore>, window_params = []} {
    return
  }
}

module attributes {stable_mosaic.version = 11 : i64} {
  func.func private @main(%arg0: i32) attributes {dimension_semantics = [#tpu.dimension_semantics<core_parallel>], iteration_bounds = array<i64: 2>, tpu.core_type = #tpu.core_type<sc_scalar_subcore>, window_params = []} {
    return
  }
}

module attributes {stable_mosaic.version = 11 : i64} {
  func.func @_frontend_kernel(%arg0: i32, %arg1: memref<1x32x64xf32, #tpu.memory_space<vmem>>, %arg2: memref<64x66xf32, #tpu.memory_space<vmem>>, %arg3: memref<66x16xf32, #tpu.memory_space<vmem>>, %arg4: memref<1x32x16xf32, #tpu.memory_space<vmem>>) attributes {dimension_semantics = [#tpu.dimension_semantics<parallel>], iteration_bounds = array<i64: 2>, scalar_prefetch = 0 : i64, scratch_operands = 0 : i64, tpu.core_type = #tpu.core_type<tc>, window_params = [{transform_indices = @transform_0, window_bounds = array<i64: 1, 32, 64>}, {pipeline_mode = #tpu.pipeline_mode<synchronous>, transform_indices = @transform_1, window_bounds = array<i64: 64, 66>}, {pipeline_mode = #tpu.pipeline_mode<synchronous>, transform_indices = @transform_2, window_bounds = array<i64: 66, 16>}, {transform_indices = @transform_3, window_bounds = array<i64: 1, 32, 16>}]} {
    %c0 = arith.constant 0 : index
    %c0_0 = arith.constant 0 : index
    %c0_1 = arith.constant 0 : index
    %0 = vector.load %arg1[%c0, %c0_0, %c0_1] : memref<1x32x64xf32, #tpu.memory_space<vmem>>, vector<1x32x64xf32>
    %1 = vector.shape_cast %0 : vector<1x32x64xf32> to vector<32x64xf32>
    %c0_2 = arith.constant 0 : index
    %c0_3 = arith.constant 0 : index
    %2 = vector.load %arg2[%c0_2, %c0_3] : memref<64x66xf32, #tpu.memory_space<vmem>>, vector<64x66xf32>
    %cst = arith.constant dense<0.000000e+00> : vector<32x66xf32>
    %3 = tpu.matmul %1, %2, %cst {dimension_numbers = #tpu.dot_dimension_numbers<[1], [0], [0], [1], [0, 0, 1, 1], [], []>} : vector<32x64xf32>, vector<64x66xf32>, vector<32x66xf32> -> vector<32x66xf32>
    %4 = arith.mulf %3, %3 : vector<32x66xf32>
    %c0_4 = arith.constant 0 : index
    %c0_5 = arith.constant 0 : index
    %5 = vector.load %arg3[%c0_4, %c0_5] : memref<66x16xf32, #tpu.memory_space<vmem>>, vector<66x16xf32>
    %cst_6 = arith.constant dense<0.000000e+00> : vector<32x16xf32>
    %6 = tpu.matmul %4, %5, %cst_6 {dimension_numbers = #tpu.dot_dimension_numbers<[1], [0], [0], [1], [0, 0, 1, 1], [], []>} : vector<32x66xf32>, vector<66x16xf32>, vector<32x16xf32> -> vector<32x16xf32>
    %cst_7 = arith.constant 1.000000e-10 : f32
    %7 = vector.broadcast %cst_7 : f32 to vector<32x16xf32>
    %8 = arith.maximumf %6, %7 : vector<32x16xf32>
    %9 = math.log %8 : vector<32x16xf32>
    %cst_8 = arith.constant 0.434294492 : f32
    %10 = vector.broadcast %cst_8 : f32 to vector<32x16xf32>
    %11 = arith.mulf %9, %10 : vector<32x16xf32>
    %cst_9 = arith.constant 1.000000e+01 : f32
    %12 = vector.broadcast %cst_9 : f32 to vector<32x16xf32>
    %13 = arith.mulf %12, %11 : vector<32x16xf32>
    %14 = vector.shape_cast %13 : vector<32x16xf32> to vector<1x32x16xf32>
    %cst_10 = arith.constant dense<0xFF800000> : vector<1xf32>
    %15 = vector.multi_reduction <maximumf>, %14, %cst_10 [1, 2] : vector<1x32x16xf32> to vector<1xf32>
    %16 = vector.shape_cast %15 : vector<1xf32> to vector<1x1x1xf32>
    %17 = vector.extract %16[0, 0, 0] : f32 from vector<1x1x1xf32>
    %cst_11 = arith.constant 8.000000e+01 : f32
    %18 = arith.subf %17, %cst_11 : f32
    %19 = vector.broadcast %18 : f32 to vector<32x16xf32>
    %20 = arith.maximumf %13, %19 : vector<32x16xf32>
    %cst_12 = arith.constant -5.000000e+01 : f32
    %cst_13 = arith.constant 8.000000e+01 : f32
    %21 = vector.broadcast %cst_12 : f32 to vector<32x16xf32>
    %22 = arith.maximumf %21, %20 : vector<32x16xf32>
    %23 = vector.broadcast %cst_13 : f32 to vector<32x16xf32>
    %24 = arith.minimumf %23, %22 : vector<32x16xf32>
    %cst_14 = arith.constant 4.260000e+00 : f32
    %25 = vector.broadcast %cst_14 : f32 to vector<32x16xf32>
    %26 = arith.addf %24, %25 : vector<32x16xf32>
    %cst_15 = arith.constant 4.570000e+00 : f32
    %27 = vector.broadcast %cst_15 : f32 to vector<32x16xf32>
    %28 = arith.divf %26, %27 : vector<32x16xf32>
    %c0_16 = arith.constant 0 : index
    %c0_17 = arith.constant 0 : index
    %c0_18 = arith.constant 0 : index
    %29 = vector.load %arg4[%c0_16, %c0_17, %c0_18] : memref<1x32x16xf32, #tpu.memory_space<vmem>>, vector<1x32x16xf32>
    %30 = vector.shape_cast %29 : vector<1x32x16xf32> to vector<32x16xf32>
    %31 = vector.shape_cast %28 : vector<32x16xf32> to vector<1x32x16xf32>
    tpu.vector_store %arg4[%c0_16, %c0_17, %c0_18], %31 {strides = array<i32>} : memref<1x32x16xf32, #tpu.memory_space<vmem>>, vector<1x32x16xf32>,
    return
  }
  func.func @transform_0(%arg0: i32) -> (i32, i32, i32) {
    %c0_i32 = arith.constant 0 : i32
    %c0_i32_0 = arith.constant 0 : i32
    %c0_i32_1 = arith.constant 0 : i32
    return %arg0, %c0_i32, %c0_i32_0 : i32, i32, i32
  }
  func.func @transform_1(%arg0: i32) -> (i32, i32) {
    %c0_i32 = arith.constant 0 : i32
    %c0_i32_0 = arith.constant 0 : i32
    %c0_i32_1 = arith.constant 0 : i32
    return %c0_i32, %c0_i32_0 : i32, i32
  }
  func.func @transform_2(%arg0: i32) -> (i32, i32) {
    %c0_i32 = arith.constant 0 : i32
    %c0_i32_0 = arith.constant 0 : i32
    %c0_i32_1 = arith.constant 0 : i32
    return %c0_i32, %c0_i32_0 : i32, i32
  }
  func.func @transform_3(%arg0: i32) -> (i32, i32, i32) {
    %c0_i32 = arith.constant 0 : i32
    %c0_i32_0 = arith.constant 0 : i32
    %c0_i32_1 = arith.constant 0 : i32
    return %arg0, %c0_i32, %c0_i32_0 : i32, i32, i32
  }
}

module attributes {stable_mosaic.version = 11 : i64} {
  func.func @_transformer_kernel(%arg0: i32, %arg1: i32, %arg2: memref<1x9x64xf32, #tpu.memory_space<vmem>>, %arg3: memref<64x32xf32, #tpu.memory_space<vmem>>, %arg4: memref<9x32xf32, #tpu.memory_space<vmem>>, %arg5: memref<1x1x32xf32, #tpu.memory_space<vmem>>, %arg6: memref<1x1x32xf32, #tpu.memory_space<vmem>>, %arg7: memref<1x32x32xf32, #tpu.memory_space<vmem>>, %arg8: memref<1x1x32xf32, #tpu.memory_space<vmem>>, %arg9: memref<1x32x32xf32, #tpu.memory_space<vmem>>, %arg10: memref<1x1x32xf32, #tpu.memory_space<vmem>>, %arg11: memref<1x32x32xf32, #tpu.memory_space<vmem>>, %arg12: memref<1x1x32xf32, #tpu.memory_space<vmem>>, %arg13: memref<1x32x32xf32, #tpu.memory_space<vmem>>, %arg14: memref<1x1x32xf32, #tpu.memory_space<vmem>>, %arg15: memref<1x1x32xf32, #tpu.memory_space<vmem>>, %arg16: memref<1x1x32xf32, #tpu.memory_space<vmem>>, %arg17: memref<1x32x128xf32, #tpu.memory_space<vmem>>, %arg18: memref<1x1x128xf32, #tpu.memory_space<vmem>>, %arg19: memref<1x128x32xf32, #tpu.memory_space<vmem>>, %arg20: memref<1x1x32xf32, #tpu.memory_space<vmem>>, %arg21: memref<1x32xf32, #tpu.memory_space<vmem>>, %arg22: memref<1x32xf32, #tpu.memory_space<vmem>>, %arg23: memref<1x9x32xf32, #tpu.memory_space<vmem>>, %arg24: memref<9x32xf32, #tpu.memory_space<vmem>>) attributes {dimension_semantics = [#tpu.dimension_semantics<parallel>, #tpu.dimension_semantics<arbitrary>], iteration_bounds = array<i64: 2, 2>, scalar_prefetch = 0 : i64, scratch_operands = 1 : i64, tpu.core_type = #tpu.core_type<tc>, window_params = [{transform_indices = @transform_0, window_bounds = array<i64: 1, 9, 64>}, {pipeline_mode = #tpu.pipeline_mode<synchronous>, transform_indices = @transform_1, window_bounds = array<i64: 64, 32>}, {pipeline_mode = #tpu.pipeline_mode<synchronous>, transform_indices = @transform_2, window_bounds = array<i64: 9, 32>}, {transform_indices = @transform_3, window_bounds = array<i64: 1, 1, 32>}, {transform_indices = @transform_4, window_bounds = array<i64: 1, 1, 32>}, {transform_indices = @transform_5, window_bounds = array<i64: 1, 32, 32>}, {transform_indices = @transform_6, window_bounds = array<i64: 1, 1, 32>}, {transform_indices = @transform_7, window_bounds = array<i64: 1, 32, 32>}, {transform_indices = @transform_8, window_bounds = array<i64: 1, 1, 32>}, {transform_indices = @transform_9, window_bounds = array<i64: 1, 32, 32>}, {transform_indices = @transform_10, window_bounds = array<i64: 1, 1, 32>}, {transform_indices = @transform_11, window_bounds = array<i64: 1, 32, 32>}, {transform_indices = @transform_12, window_bounds = array<i64: 1, 1, 32>}, {transform_indices = @transform_13, window_bounds = array<i64: 1, 1, 32>}, {transform_indices = @transform_14, window_bounds = array<i64: 1, 1, 32>}, {transform_indices = @transform_15, window_bounds = array<i64: 1, 32, 128>}, {transform_indices = @transform_16, window_bounds = array<i64: 1, 1, 128>}, {transform_indices = @transform_17, window_bounds = array<i64: 1, 128, 32>}, {transform_indices = @transform_18, window_bounds = array<i64: 1, 1, 32>}, {pipeline_mode = #tpu.pipeline_mode<synchronous>, transform_indices = @transform_19, window_bounds = array<i64: 1, 32>}, {pipeline_mode = #tpu.pipeline_mode<synchronous>, transform_indices = @transform_20, window_bounds = array<i64: 1, 32>}, {transform_indices = @transform_21, window_bounds = array<i64: 1, 9, 32>}]} {
    %c0_i32 = arith.constant 0 : i32
    %0 = arith.cmpi eq, %arg1, %c0_i32 : i32
    %1 = arith.extui %0 : i1 to i32
    %c0_i32_0 = arith.constant 0 : i32
    %2 = arith.cmpi ne, %1, %c0_i32_0 : i32
    scf.if %2 {
      %c0_109 = arith.constant 0 : index
      %c0_110 = arith.constant 0 : index
      %c0_111 = arith.constant 0 : index
      %243 = vector.load %arg2[%c0_109, %c0_110, %c0_111] : memref<1x9x64xf32, #tpu.memory_space<vmem>>, vector<1x9x64xf32>
      %244 = vector.shape_cast %243 : vector<1x9x64xf32> to vector<9x64xf32>
      %c0_112 = arith.constant 0 : index
      %c0_113 = arith.constant 0 : index
      %245 = vector.load %arg3[%c0_112, %c0_113] : memref<64x32xf32, #tpu.memory_space<vmem>>, vector<64x32xf32>
      %cst_114 = arith.constant dense<0.000000e+00> : vector<9x32xf32>
      %246 = tpu.matmul %244, %245, %cst_114 {dimension_numbers = #tpu.dot_dimension_numbers<[1], [0], [0], [1], [0, 0, 1, 1], [], []>} : vector<9x64xf32>, vector<64x32xf32>, vector<9x32xf32> -> vector<9x32xf32>
      %c0_115 = arith.constant 0 : index
      %c0_116 = arith.constant 0 : index
      %247 = vector.load %arg4[%c0_115, %c0_116] : memref<9x32xf32, #tpu.memory_space<vmem>>, vector<9x32xf32>
      %248 = arith.addf %246, %247 : vector<9x32xf32>
      %c0_117 = arith.constant 0 : index
      %c0_118 = arith.constant 0 : index
      %249 = vector.load %arg24[%c0_117, %c0_118] : memref<9x32xf32, #tpu.memory_space<vmem>>, vector<9x32xf32>
      tpu.vector_store %arg24[%c0_117, %c0_118], %248 {strides = array<i32>} : memref<9x32xf32, #tpu.memory_space<vmem>>, vector<9x32xf32>,
    } else {
    }
    %c0 = arith.constant 0 : index
    %c0_1 = arith.constant 0 : index
    %3 = vector.load %arg24[%c0, %c0_1] : memref<9x32xf32, #tpu.memory_space<vmem>>, vector<9x32xf32>
    %c0_2 = arith.constant 0 : index
    %c0_3 = arith.constant 0 : index
    %c0_4 = arith.constant 0 : index
    %4 = vector.load %arg5[%c0_2, %c0_3, %c0_4] : memref<1x1x32xf32, #tpu.memory_space<vmem>>, vector<1x1x32xf32>
    %5 = vector.shape_cast %4 : vector<1x1x32xf32> to vector<1x32xf32>
    %c0_5 = arith.constant 0 : index
    %c0_6 = arith.constant 0 : index
    %c0_7 = arith.constant 0 : index
    %6 = vector.load %arg6[%c0_5, %c0_6, %c0_7] : memref<1x1x32xf32, #tpu.memory_space<vmem>>, vector<1x1x32xf32>
    %7 = vector.shape_cast %6 : vector<1x1x32xf32> to vector<1x32xf32>
    %cst = arith.constant dense<0.000000e+00> : vector<9xf32>
    %8 = vector.multi_reduction <add>, %3, %cst [1] : vector<9x32xf32> to vector<9xf32>
    %9 = vector.shape_cast %8 : vector<9xf32> to vector<9x1xf32>
    %cst_8 = arith.constant 3.200000e+01 : f32
    %10 = vector.broadcast %cst_8 : f32 to vector<9x1xf32>
    %11 = arith.divf %9, %10 : vector<9x1xf32>
    %12 = vector.broadcast %11 : vector<9x1xf32> to vector<9x32xf32>
    %13 = arith.subf %3, %12 : vector<9x32xf32>
    %14 = arith.mulf %13, %13 : vector<9x32xf32>
    %cst_9 = arith.constant dense<0.000000e+00> : vector<9xf32>
    %15 = vector.multi_reduction <add>, %14, %cst_9 [1] : vector<9x32xf32> to vector<9xf32>
    %16 = vector.shape_cast %15 : vector<9xf32> to vector<9x1xf32>
    %cst_10 = arith.constant 3.200000e+01 : f32
    %17 = vector.broadcast %cst_10 : f32 to vector<9x1xf32>
    %18 = arith.divf %16, %17 : vector<9x1xf32>
    %cst_11 = arith.constant 9.99999997E-7 : f32
    %19 = vector.broadcast %cst_11 : f32 to vector<9x1xf32>
    %20 = arith.addf %18, %19 : vector<9x1xf32>
    %21 = math.rsqrt %20 : vector<9x1xf32>
    %22 = vector.broadcast %21 : vector<9x1xf32> to vector<9x32xf32>
    %23 = arith.mulf %13, %22 : vector<9x32xf32>
    %24 = vector.broadcast %5 : vector<1x32xf32> to vector<9x32xf32>
    %25 = arith.mulf %23, %24 : vector<9x32xf32>
    %26 = vector.broadcast %7 : vector<1x32xf32> to vector<9x32xf32>
    %27 = arith.addf %25, %26 : vector<9x32xf32>
    %c0_12 = arith.constant 0 : index
    %c0_13 = arith.constant 0 : index
    %c0_14 = arith.constant 0 : index
    %28 = vector.load %arg7[%c0_12, %c0_13, %c0_14] : memref<1x32x32xf32, #tpu.memory_space<vmem>>, vector<1x32x32xf32>
    %29 = vector.shape_cast %28 : vector<1x32x32xf32> to vector<32x32xf32>
    %cst_15 = arith.constant dense<0.000000e+00> : vector<9x32xf32>
    %30 = tpu.matmul %27, %29, %cst_15 {dimension_numbers = #tpu.dot_dimension_numbers<[1], [0], [0], [1], [0, 0, 1, 1], [], []>} : vector<9x32xf32>, vector<32x32xf32>, vector<9x32xf32> -> vector<9x32xf32>
    %c0_16 = arith.constant 0 : index
    %c0_17 = arith.constant 0 : index
    %c0_18 = arith.constant 0 : index
    %31 = vector.load %arg8[%c0_16, %c0_17, %c0_18] : memref<1x1x32xf32, #tpu.memory_space<vmem>>, vector<1x1x32xf32>
    %32 = vector.shape_cast %31 : vector<1x1x32xf32> to vector<1x32xf32>
    %33 = vector.broadcast %32 : vector<1x32xf32> to vector<9x32xf32>
    %34 = arith.addf %30, %33 : vector<9x32xf32>
    %c0_19 = arith.constant 0 : index
    %c0_20 = arith.constant 0 : index
    %c0_21 = arith.constant 0 : index
    %35 = vector.load %arg9[%c0_19, %c0_20, %c0_21] : memref<1x32x32xf32, #tpu.memory_space<vmem>>, vector<1x32x32xf32>
    %36 = vector.shape_cast %35 : vector<1x32x32xf32> to vector<32x32xf32>
    %cst_22 = arith.constant dense<0.000000e+00> : vector<9x32xf32>
    %37 = tpu.matmul %27, %36, %cst_22 {dimension_numbers = #tpu.dot_dimension_numbers<[1], [0], [0], [1], [0, 0, 1, 1], [], []>} : vector<9x32xf32>, vector<32x32xf32>, vector<9x32xf32> -> vector<9x32xf32>
    %c0_23 = arith.constant 0 : index
    %c0_24 = arith.constant 0 : index
    %c0_25 = arith.constant 0 : index
    %38 = vector.load %arg10[%c0_23, %c0_24, %c0_25] : memref<1x1x32xf32, #tpu.memory_space<vmem>>, vector<1x1x32xf32>
    %39 = vector.shape_cast %38 : vector<1x1x32xf32> to vector<1x32xf32>
    %40 = vector.broadcast %39 : vector<1x32xf32> to vector<9x32xf32>
    %41 = arith.addf %37, %40 : vector<9x32xf32>
    %c0_26 = arith.constant 0 : index
    %c0_27 = arith.constant 0 : index
    %c0_28 = arith.constant 0 : index
    %42 = vector.load %arg11[%c0_26, %c0_27, %c0_28] : memref<1x32x32xf32, #tpu.memory_space<vmem>>, vector<1x32x32xf32>
    %43 = vector.shape_cast %42 : vector<1x32x32xf32> to vector<32x32xf32>
    %cst_29 = arith.constant dense<0.000000e+00> : vector<9x32xf32>
    %44 = tpu.matmul %27, %43, %cst_29 {dimension_numbers = #tpu.dot_dimension_numbers<[1], [0], [0], [1], [0, 0, 1, 1], [], []>} : vector<9x32xf32>, vector<32x32xf32>, vector<9x32xf32> -> vector<9x32xf32>
    %c0_30 = arith.constant 0 : index
    %c0_31 = arith.constant 0 : index
    %c0_32 = arith.constant 0 : index
    %45 = vector.load %arg12[%c0_30, %c0_31, %c0_32] : memref<1x1x32xf32, #tpu.memory_space<vmem>>, vector<1x1x32xf32>
    %46 = vector.shape_cast %45 : vector<1x1x32xf32> to vector<1x32xf32>
    %47 = vector.broadcast %46 : vector<1x32xf32> to vector<9x32xf32>
    %48 = arith.addf %44, %47 : vector<9x32xf32>
    %49 = tpu.iota {dimensions = array<i32: 1>} : vector<1x32xi32>
    %cst_33 = arith.constant 0.000000e+00 : f32
    %50 = vector.broadcast %cst_33 : f32 to vector<9x32xf32>
    %c0_i32_34 = arith.constant 0 : i32
    %51 = vector.broadcast %c0_i32_34 : i32 to vector<1x32xi32>
    %52 = arith.cmpi sge, %49, %51 : vector<1x32xi32>
    %c8_i32 = arith.constant 8 : i32
    %53 = vector.broadcast %c8_i32 : i32 to vector<1x32xi32>
    %54 = arith.cmpi slt, %49, %53 : vector<1x32xi32>
    %55 = arith.andi %52, %54 : vector<1x32xi1>
    %cst_35 = arith.constant 0.000000e+00 : f32
    %56 = vector.shape_cast %55 : vector<1x32xi1> to vector<1x32xi1>
    %57 = vector.broadcast %56 : vector<1x32xi1> to vector<9x32xi1>
    %58 = vector.broadcast %cst_35 : f32 to vector<9x32xf32>
    %59 = arith.select %57, %34, %58 : vector<9x32xi1>, vector<9x32xf32>
    %cst_36 = arith.constant 0.000000e+00 : f32
    %60 = vector.shape_cast %55 : vector<1x32xi1> to vector<1x32xi1>
    %61 = vector.broadcast %60 : vector<1x32xi1> to vector<9x32xi1>
    %62 = vector.broadcast %cst_36 : f32 to vector<9x32xf32>
    %63 = arith.select %61, %41, %62 : vector<9x32xi1>, vector<9x32xf32>
    %cst_37 = arith.constant 0.000000e+00 : f32
    %64 = vector.shape_cast %55 : vector<1x32xi1> to vector<1x32xi1>
    %65 = vector.broadcast %64 : vector<1x32xi1> to vector<9x32xi1>
    %66 = vector.broadcast %cst_37 : f32 to vector<9x32xf32>
    %67 = arith.select %65, %48, %66 : vector<9x32xi1>, vector<9x32xf32>
    %cst_38 = arith.constant dense<0.000000e+00> : vector<9x9xf32>
    %68 = tpu.matmul %59, %63, %cst_38 {dimension_numbers = #tpu.dot_dimension_numbers<[1], [1], [0], [0], [0, 0, 1, 0], [], []>} : vector<9x32xf32>, vector<9x32xf32>, vector<9x9xf32> -> vector<9x9xf32>
    %cst_39 = arith.constant 0.353553385 : f32
    %69 = vector.broadcast %cst_39 : f32 to vector<9x9xf32>
    %70 = arith.mulf %68, %69 : vector<9x9xf32>
    %cst_40 = arith.constant dense<0xFF800000> : vector<9xf32>
    %71 = vector.multi_reduction <maximumf>, %70, %cst_40 [1] : vector<9x9xf32> to vector<9xf32>
    %72 = vector.shape_cast %71 : vector<9xf32> to vector<9x1xf32>
    %73 = vector.broadcast %72 : vector<9x1xf32> to vector<9x9xf32>
    %74 = arith.subf %70, %73 : vector<9x9xf32>
    %75 = math.exp %74 : vector<9x9xf32>
    %cst_41 = arith.constant dense<0.000000e+00> : vector<9xf32>
    %76 = vector.multi_reduction <add>, %75, %cst_41 [1] : vector<9x9xf32> to vector<9xf32>
    %77 = vector.shape_cast %76 : vector<9xf32> to vector<9x1xf32>
    %78 = tpu.reciprocal %77 {approx = true} : vector<9x1xf32> -> vector<9x1xf32>
    %79 = vector.broadcast %78 : vector<9x1xf32> to vector<9x9xf32>
    %80 = arith.mulf %75, %79 : vector<9x9xf32>
    %cst_42 = arith.constant dense<0.000000e+00> : vector<9x32xf32>
    %81 = tpu.matmul %80, %67, %cst_42 {dimension_numbers = #tpu.dot_dimension_numbers<[1], [0], [0], [1], [0, 0, 1, 1], [], []>} : vector<9x9xf32>, vector<9x32xf32>, vector<9x32xf32> -> vector<9x32xf32>
    %82 = arith.addf %50, %81 : vector<9x32xf32>
    %c8_i32_43 = arith.constant 8 : i32
    %83 = vector.broadcast %c8_i32_43 : i32 to vector<1x32xi32>
    %84 = arith.cmpi sge, %49, %83 : vector<1x32xi32>
    %c16_i32 = arith.constant 16 : i32
    %85 = vector.broadcast %c16_i32 : i32 to vector<1x32xi32>
    %86 = arith.cmpi slt, %49, %85 : vector<1x32xi32>
    %87 = arith.andi %84, %86 : vector<1x32xi1>
    %cst_44 = arith.constant 0.000000e+00 : f32
    %88 = vector.shape_cast %87 : vector<1x32xi1> to vector<1x32xi1>
    %89 = vector.broadcast %88 : vector<1x32xi1> to vector<9x32xi1>
    %90 = vector.broadcast %cst_44 : f32 to vector<9x32xf32>
    %91 = arith.select %89, %34, %90 : vector<9x32xi1>, vector<9x32xf32>
    %cst_45 = arith.constant 0.000000e+00 : f32
    %92 = vector.shape_cast %87 : vector<1x32xi1> to vector<1x32xi1>
    %93 = vector.broadcast %92 : vector<1x32xi1> to vector<9x32xi1>
    %94 = vector.broadcast %cst_45 : f32 to vector<9x32xf32>
    %95 = arith.select %93, %41, %94 : vector<9x32xi1>, vector<9x32xf32>
    %cst_46 = arith.constant 0.000000e+00 : f32
    %96 = vector.shape_cast %87 : vector<1x32xi1> to vector<1x32xi1>
    %97 = vector.broadcast %96 : vector<1x32xi1> to vector<9x32xi1>
    %98 = vector.broadcast %cst_46 : f32 to vector<9x32xf32>
    %99 = arith.select %97, %48, %98 : vector<9x32xi1>, vector<9x32xf32>
    %cst_47 = arith.constant dense<0.000000e+00> : vector<9x9xf32>
    %100 = tpu.matmul %91, %95, %cst_47 {dimension_numbers = #tpu.dot_dimension_numbers<[1], [1], [0], [0], [0, 0, 1, 0], [], []>} : vector<9x32xf32>, vector<9x32xf32>, vector<9x9xf32> -> vector<9x9xf32>
    %cst_48 = arith.constant 0.353553385 : f32
    %101 = vector.broadcast %cst_48 : f32 to vector<9x9xf32>
    %102 = arith.mulf %100, %101 : vector<9x9xf32>
    %cst_49 = arith.constant dense<0xFF800000> : vector<9xf32>
    %103 = vector.multi_reduction <maximumf>, %102, %cst_49 [1] : vector<9x9xf32> to vector<9xf32>
    %104 = vector.shape_cast %103 : vector<9xf32> to vector<9x1xf32>
    %105 = vector.broadcast %104 : vector<9x1xf32> to vector<9x9xf32>
    %106 = arith.subf %102, %105 : vector<9x9xf32>
    %107 = math.exp %106 : vector<9x9xf32>
    %cst_50 = arith.constant dense<0.000000e+00> : vector<9xf32>
    %108 = vector.multi_reduction <add>, %107, %cst_50 [1] : vector<9x9xf32> to vector<9xf32>
    %109 = vector.shape_cast %108 : vector<9xf32> to vector<9x1xf32>
    %110 = tpu.reciprocal %109 {approx = true} : vector<9x1xf32> -> vector<9x1xf32>
    %111 = vector.broadcast %110 : vector<9x1xf32> to vector<9x9xf32>
    %112 = arith.mulf %107, %111 : vector<9x9xf32>
    %cst_51 = arith.constant dense<0.000000e+00> : vector<9x32xf32>
    %113 = tpu.matmul %112, %99, %cst_51 {dimension_numbers = #tpu.dot_dimension_numbers<[1], [0], [0], [1], [0, 0, 1, 1], [], []>} : vector<9x9xf32>, vector<9x32xf32>, vector<9x32xf32> -> vector<9x32xf32>
    %114 = arith.addf %82, %113 : vector<9x32xf32>
    %c16_i32_52 = arith.constant 16 : i32
    %115 = vector.broadcast %c16_i32_52 : i32 to vector<1x32xi32>
    %116 = arith.cmpi sge, %49, %115 : vector<1x32xi32>
    %c24_i32 = arith.constant 24 : i32
    %117 = vector.broadcast %c24_i32 : i32 to vector<1x32xi32>
    %118 = arith.cmpi slt, %49, %117 : vector<1x32xi32>
    %119 = arith.andi %116, %118 : vector<1x32xi1>
    %cst_53 = arith.constant 0.000000e+00 : f32
    %120 = vector.shape_cast %119 : vector<1x32xi1> to vector<1x32xi1>
    %121 = vector.broadcast %120 : vector<1x32xi1> to vector<9x32xi1>
    %122 = vector.broadcast %cst_53 : f32 to vector<9x32xf32>
    %123 = arith.select %121, %34, %122 : vector<9x32xi1>, vector<9x32xf32>
    %cst_54 = arith.constant 0.000000e+00 : f32
    %124 = vector.shape_cast %119 : vector<1x32xi1> to vector<1x32xi1>
    %125 = vector.broadcast %124 : vector<1x32xi1> to vector<9x32xi1>
    %126 = vector.broadcast %cst_54 : f32 to vector<9x32xf32>
    %127 = arith.select %125, %41, %126 : vector<9x32xi1>, vector<9x32xf32>
    %cst_55 = arith.constant 0.000000e+00 : f32
    %128 = vector.shape_cast %119 : vector<1x32xi1> to vector<1x32xi1>
    %129 = vector.broadcast %128 : vector<1x32xi1> to vector<9x32xi1>
    %130 = vector.broadcast %cst_55 : f32 to vector<9x32xf32>
    %131 = arith.select %129, %48, %130 : vector<9x32xi1>, vector<9x32xf32>
    %cst_56 = arith.constant dense<0.000000e+00> : vector<9x9xf32>
    %132 = tpu.matmul %123, %127, %cst_56 {dimension_numbers = #tpu.dot_dimension_numbers<[1], [1], [0], [0], [0, 0, 1, 0], [], []>} : vector<9x32xf32>, vector<9x32xf32>, vector<9x9xf32> -> vector<9x9xf32>
    %cst_57 = arith.constant 0.353553385 : f32
    %133 = vector.broadcast %cst_57 : f32 to vector<9x9xf32>
    %134 = arith.mulf %132, %133 : vector<9x9xf32>
    %cst_58 = arith.constant dense<0xFF800000> : vector<9xf32>
    %135 = vector.multi_reduction <maximumf>, %134, %cst_58 [1] : vector<9x9xf32> to vector<9xf32>
    %136 = vector.shape_cast %135 : vector<9xf32> to vector<9x1xf32>
    %137 = vector.broadcast %136 : vector<9x1xf32> to vector<9x9xf32>
    %138 = arith.subf %134, %137 : vector<9x9xf32>
    %139 = math.exp %138 : vector<9x9xf32>
    %cst_59 = arith.constant dense<0.000000e+00> : vector<9xf32>
    %140 = vector.multi_reduction <add>, %139, %cst_59 [1] : vector<9x9xf32> to vector<9xf32>
    %141 = vector.shape_cast %140 : vector<9xf32> to vector<9x1xf32>
    %142 = tpu.reciprocal %141 {approx = true} : vector<9x1xf32> -> vector<9x1xf32>
    %143 = vector.broadcast %142 : vector<9x1xf32> to vector<9x9xf32>
    %144 = arith.mulf %139, %143 : vector<9x9xf32>
    %cst_60 = arith.constant dense<0.000000e+00> : vector<9x32xf32>
    %145 = tpu.matmul %144, %131, %cst_60 {dimension_numbers = #tpu.dot_dimension_numbers<[1], [0], [0], [1], [0, 0, 1, 1], [], []>} : vector<9x9xf32>, vector<9x32xf32>, vector<9x32xf32> -> vector<9x32xf32>
    %146 = arith.addf %114, %145 : vector<9x32xf32>
    %c24_i32_61 = arith.constant 24 : i32
    %147 = vector.broadcast %c24_i32_61 : i32 to vector<1x32xi32>
    %148 = arith.cmpi sge, %49, %147 : vector<1x32xi32>
    %c32_i32 = arith.constant 32 : i32
    %149 = vector.broadcast %c32_i32 : i32 to vector<1x32xi32>
    %150 = arith.cmpi slt, %49, %149 : vector<1x32xi32>
    %151 = arith.andi %148, %150 : vector<1x32xi1>
    %cst_62 = arith.constant 0.000000e+00 : f32
    %152 = vector.shape_cast %151 : vector<1x32xi1> to vector<1x32xi1>
    %153 = vector.broadcast %152 : vector<1x32xi1> to vector<9x32xi1>
    %154 = vector.broadcast %cst_62 : f32 to vector<9x32xf32>
    %155 = arith.select %153, %34, %154 : vector<9x32xi1>, vector<9x32xf32>
    %cst_63 = arith.constant 0.000000e+00 : f32
    %156 = vector.shape_cast %151 : vector<1x32xi1> to vector<1x32xi1>
    %157 = vector.broadcast %156 : vector<1x32xi1> to vector<9x32xi1>
    %158 = vector.broadcast %cst_63 : f32 to vector<9x32xf32>
    %159 = arith.select %157, %41, %158 : vector<9x32xi1>, vector<9x32xf32>
    %cst_64 = arith.constant 0.000000e+00 : f32
    %160 = vector.shape_cast %151 : vector<1x32xi1> to vector<1x32xi1>
    %161 = vector.broadcast %160 : vector<1x32xi1> to vector<9x32xi1>
    %162 = vector.broadcast %cst_64 : f32 to vector<9x32xf32>
    %163 = arith.select %161, %48, %162 : vector<9x32xi1>, vector<9x32xf32>
    %cst_65 = arith.constant dense<0.000000e+00> : vector<9x9xf32>
    %164 = tpu.matmul %155, %159, %cst_65 {dimension_numbers = #tpu.dot_dimension_numbers<[1], [1], [0], [0], [0, 0, 1, 0], [], []>} : vector<9x32xf32>, vector<9x32xf32>, vector<9x9xf32> -> vector<9x9xf32>
    %cst_66 = arith.constant 0.353553385 : f32
    %165 = vector.broadcast %cst_66 : f32 to vector<9x9xf32>
    %166 = arith.mulf %164, %165 : vector<9x9xf32>
    %cst_67 = arith.constant dense<0xFF800000> : vector<9xf32>
    %167 = vector.multi_reduction <maximumf>, %166, %cst_67 [1] : vector<9x9xf32> to vector<9xf32>
    %168 = vector.shape_cast %167 : vector<9xf32> to vector<9x1xf32>
    %169 = vector.broadcast %168 : vector<9x1xf32> to vector<9x9xf32>
    %170 = arith.subf %166, %169 : vector<9x9xf32>
    %171 = math.exp %170 : vector<9x9xf32>
    %cst_68 = arith.constant dense<0.000000e+00> : vector<9xf32>
    %172 = vector.multi_reduction <add>, %171, %cst_68 [1] : vector<9x9xf32> to vector<9xf32>
    %173 = vector.shape_cast %172 : vector<9xf32> to vector<9x1xf32>
    %174 = tpu.reciprocal %173 {approx = true} : vector<9x1xf32> -> vector<9x1xf32>
    %175 = vector.broadcast %174 : vector<9x1xf32> to vector<9x9xf32>
    %176 = arith.mulf %171, %175 : vector<9x9xf32>
    %cst_69 = arith.constant dense<0.000000e+00> : vector<9x32xf32>
    %177 = tpu.matmul %176, %163, %cst_69 {dimension_numbers = #tpu.dot_dimension_numbers<[1], [0], [0], [1], [0, 0, 1, 1], [], []>} : vector<9x9xf32>, vector<9x32xf32>, vector<9x32xf32> -> vector<9x32xf32>
    %178 = arith.addf %146, %177 : vector<9x32xf32>
    %c0_70 = arith.constant 0 : index
    %c0_71 = arith.constant 0 : index
    %c0_72 = arith.constant 0 : index
    %179 = vector.load %arg13[%c0_70, %c0_71, %c0_72] : memref<1x32x32xf32, #tpu.memory_space<vmem>>, vector<1x32x32xf32>
    %180 = vector.shape_cast %179 : vector<1x32x32xf32> to vector<32x32xf32>
    %cst_73 = arith.constant dense<0.000000e+00> : vector<9x32xf32>
    %181 = tpu.matmul %178, %180, %cst_73 {dimension_numbers = #tpu.dot_dimension_numbers<[1], [0], [0], [1], [0, 0, 1, 1], [], []>} : vector<9x32xf32>, vector<32x32xf32>, vector<9x32xf32> -> vector<9x32xf32>
    %c0_74 = arith.constant 0 : index
    %c0_75 = arith.constant 0 : index
    %c0_76 = arith.constant 0 : index
    %182 = vector.load %arg14[%c0_74, %c0_75, %c0_76] : memref<1x1x32xf32, #tpu.memory_space<vmem>>, vector<1x1x32xf32>
    %183 = vector.shape_cast %182 : vector<1x1x32xf32> to vector<1x32xf32>
    %184 = vector.broadcast %183 : vector<1x32xf32> to vector<9x32xf32>
    %185 = arith.addf %181, %184 : vector<9x32xf32>
    %186 = arith.addf %3, %185 : vector<9x32xf32>
    %c0_77 = arith.constant 0 : index
    %c0_78 = arith.constant 0 : index
    %c0_79 = arith.constant 0 : index
    %187 = vector.load %arg15[%c0_77, %c0_78, %c0_79] : memref<1x1x32xf32, #tpu.memory_space<vmem>>, vector<1x1x32xf32>
    %188 = vector.shape_cast %187 : vector<1x1x32xf32> to vector<1x32xf32>
    %c0_80 = arith.constant 0 : index
    %c0_81 = arith.constant 0 : index
    %c0_82 = arith.constant 0 : index
    %189 = vector.load %arg16[%c0_80, %c0_81, %c0_82] : memref<1x1x32xf32, #tpu.memory_space<vmem>>, vector<1x1x32xf32>
    %190 = vector.shape_cast %189 : vector<1x1x32xf32> to vector<1x32xf32>
    %cst_83 = arith.constant dense<0.000000e+00> : vector<9xf32>
    %191 = vector.multi_reduction <add>, %186, %cst_83 [1] : vector<9x32xf32> to vector<9xf32>
    %192 = vector.shape_cast %191 : vector<9xf32> to vector<9x1xf32>
    %cst_84 = arith.constant 3.200000e+01 : f32
    %193 = vector.broadcast %cst_84 : f32 to vector<9x1xf32>
    %194 = arith.divf %192, %193 : vector<9x1xf32>
    %195 = vector.broadcast %194 : vector<9x1xf32> to vector<9x32xf32>
    %196 = arith.subf %186, %195 : vector<9x32xf32>
    %197 = arith.mulf %196, %196 : vector<9x32xf32>
    %cst_85 = arith.constant dense<0.000000e+00> : vector<9xf32>
    %198 = vector.multi_reduction <add>, %197, %cst_85 [1] : vector<9x32xf32> to vector<9xf32>
    %199 = vector.shape_cast %198 : vector<9xf32> to vector<9x1xf32>
    %cst_86 = arith.constant 3.200000e+01 : f32
    %200 = vector.broadcast %cst_86 : f32 to vector<9x1xf32>
    %201 = arith.divf %199, %200 : vector<9x1xf32>
    %cst_87 = arith.constant 9.99999997E-7 : f32
    %202 = vector.broadcast %cst_87 : f32 to vector<9x1xf32>
    %203 = arith.addf %201, %202 : vector<9x1xf32>
    %204 = math.rsqrt %203 : vector<9x1xf32>
    %205 = vector.broadcast %204 : vector<9x1xf32> to vector<9x32xf32>
    %206 = arith.mulf %196, %205 : vector<9x32xf32>
    %207 = vector.broadcast %188 : vector<1x32xf32> to vector<9x32xf32>
    %208 = arith.mulf %206, %207 : vector<9x32xf32>
    %209 = vector.broadcast %190 : vector<1x32xf32> to vector<9x32xf32>
    %210 = arith.addf %208, %209 : vector<9x32xf32>
    %c0_88 = arith.constant 0 : index
    %c0_89 = arith.constant 0 : index
    %c0_90 = arith.constant 0 : index
    %211 = vector.load %arg17[%c0_88, %c0_89, %c0_90] : memref<1x32x128xf32, #tpu.memory_space<vmem>>, vector<1x32x128xf32>
    %212 = vector.shape_cast %211 : vector<1x32x128xf32> to vector<32x128xf32>
    %cst_91 = arith.constant dense<0.000000e+00> : vector<9x128xf32>
    %213 = tpu.matmul %210, %212, %cst_91 {dimension_numbers = #tpu.dot_dimension_numbers<[1], [0], [0], [1], [0, 0, 1, 1], [], []>} : vector<9x32xf32>, vector<32x128xf32>, vector<9x128xf32> -> vector<9x128xf32>
    %c0_92 = arith.constant 0 : index
    %c0_93 = arith.constant 0 : index
    %c0_94 = arith.constant 0 : index
    %214 = vector.load %arg18[%c0_92, %c0_93, %c0_94] : memref<1x1x128xf32, #tpu.memory_space<vmem>>, vector<1x1x128xf32>
    %215 = vector.shape_cast %214 : vector<1x1x128xf32> to vector<1x128xf32>
    %216 = vector.broadcast %215 : vector<1x128xf32> to vector<9x128xf32>
    %217 = arith.addf %213, %216 : vector<9x128xf32>
    %cst_95 = arith.constant 5.000000e-01 : f32
    %218 = vector.broadcast %cst_95 : f32 to vector<9x128xf32>
    %219 = arith.mulf %218, %217 : vector<9x128xf32>
    %cst_96 = arith.constant 4.471500e-02 : f32
    %220 = vector.broadcast %cst_96 : f32 to vector<9x128xf32>
    %221 = arith.mulf %220, %217 : vector<9x128xf32>
    %222 = arith.mulf %221, %217 : vector<9x128xf32>
    %223 = arith.mulf %222, %217 : vector<9x128xf32>
    %224 = arith.addf %217, %223 : vector<9x128xf32>
    %cst_97 = arith.constant 0.797884583 : f32
    %225 = vector.broadcast %cst_97 : f32 to vector<9x128xf32>
    %226 = arith.mulf %225, %224 : vector<9x128xf32>
    %227 = math.tanh %226 : vector<9x128xf32>
    %cst_98 = arith.constant 1.000000e+00 : f32
    %228 = vector.broadcast %cst_98 : f32 to vector<9x128xf32>
    %229 = arith.addf %228, %227 : vector<9x128xf32>
    %230 = arith.mulf %219, %229 : vector<9x128xf32>
    %c0_99 = arith.constant 0 : index
    %c0_100 = arith.constant 0 : index
    %c0_101 = arith.constant 0 : index
    %231 = vector.load %arg19[%c0_99, %c0_100, %c0_101] : memref<1x128x32xf32, #tpu.memory_space<vmem>>, vector<1x128x32xf32>
    %232 = vector.shape_cast %231 : vector<1x128x32xf32> to vector<128x32xf32>
    %cst_102 = arith.constant dense<0.000000e+00> : vector<9x32xf32>
    %233 = tpu.matmul %230, %232, %cst_102 {dimension_numbers = #tpu.dot_dimension_numbers<[1], [0], [0], [1], [0, 0, 1, 1], [], []>} : vector<9x128xf32>, vector<128x32xf32>, vector<9x32xf32> -> vector<9x32xf32>
    %c0_103 = arith.constant 0 : index
    %c0_104 = arith.constant 0 : index
    %c0_105 = arith.constant 0 : index
    %234 = vector.load %arg20[%c0_103, %c0_104, %c0_105] : memref<1x1x32xf32, #tpu.memory_space<vmem>>, vector<1x1x32xf32>
    %235 = vector.shape_cast %234 : vector<1x1x32xf32> to vector<1x32xf32>
    %236 = vector.broadcast %235 : vector<1x32xf32> to vector<9x32xf32>
    %237 = arith.addf %233, %236 : vector<9x32xf32>
    %238 = arith.addf %186, %237 : vector<9x32xf32>
    %c0_106 = arith.constant 0 : index
    %c0_107 = arith.constant 0 : index
    %239 = vector.load %arg24[%c0_106, %c0_107] : memref<9x32xf32, #tpu.memory_space<vmem>>, vector<9x32xf32>
    tpu.vector_store %arg24[%c0_106, %c0_107], %238 {strides = array<i32>} : memref<9x32xf32, #tpu.memory_space<vmem>>, vector<9x32xf32>,
    %c1_i32 = arith.constant 1 : i32
    %240 = arith.cmpi eq, %arg1, %c1_i32 : i32
    %241 = arith.extui %240 : i1 to i32
    %c0_i32_108 = arith.constant 0 : i32
    %242 = arith.cmpi ne, %241, %c0_i32_108 : i32
    scf.if %242 {
      %c0_109 = arith.constant 0 : index
      %c0_110 = arith.constant 0 : index
      %243 = vector.load %arg21[%c0_109, %c0_110] : memref<1x32xf32, #tpu.memory_space<vmem>>, vector<1x32xf32>
      %c0_111 = arith.constant 0 : index
      %c0_112 = arith.constant 0 : index
      %244 = vector.load %arg22[%c0_111, %c0_112] : memref<1x32xf32, #tpu.memory_space<vmem>>, vector<1x32xf32>
      %cst_113 = arith.constant dense<0.000000e+00> : vector<9xf32>
      %245 = vector.multi_reduction <add>, %238, %cst_113 [1] : vector<9x32xf32> to vector<9xf32>
      %246 = vector.shape_cast %245 : vector<9xf32> to vector<9x1xf32>
      %cst_114 = arith.constant 3.200000e+01 : f32
      %247 = vector.broadcast %cst_114 : f32 to vector<9x1xf32>
      %248 = arith.divf %246, %247 : vector<9x1xf32>
      %249 = vector.broadcast %248 : vector<9x1xf32> to vector<9x32xf32>
      %250 = arith.subf %238, %249 : vector<9x32xf32>
      %251 = arith.mulf %250, %250 : vector<9x32xf32>
      %cst_115 = arith.constant dense<0.000000e+00> : vector<9xf32>
      %252 = vector.multi_reduction <add>, %251, %cst_115 [1] : vector<9x32xf32> to vector<9xf32>
      %253 = vector.shape_cast %252 : vector<9xf32> to vector<9x1xf32>
      %cst_116 = arith.constant 3.200000e+01 : f32
      %254 = vector.broadcast %cst_116 : f32 to vector<9x1xf32>
      %255 = arith.divf %253, %254 : vector<9x1xf32>
      %cst_117 = arith.constant 9.99999997E-7 : f32
      %256 = vector.broadcast %cst_117 : f32 to vector<9x1xf32>
      %257 = arith.addf %255, %256 : vector<9x1xf32>
      %258 = math.rsqrt %257 : vector<9x1xf32>
      %259 = vector.broadcast %258 : vector<9x1xf32> to vector<9x32xf32>
      %260 = arith.mulf %250, %259 : vector<9x32xf32>
      %261 = vector.broadcast %243 : vector<1x32xf32> to vector<9x32xf32>
      %262 = arith.mulf %260, %261 : vector<9x32xf32>
      %263 = vector.broadcast %244 : vector<1x32xf32> to vector<9x32xf32>
      %264 = arith.addf %262, %263 : vector<9x32xf32>
      %c0_118 = arith.constant 0 : index
      %c0_119 = arith.constant 0 : index
      %c0_120 = arith.constant 0 : index
      %265 = vector.load %arg23[%c0_118, %c0_119, %c0_120] : memref<1x9x32xf32, #tpu.memory_space<vmem>>, vector<1x9x32xf32>
      %266 = vector.shape_cast %265 : vector<1x9x32xf32> to vector<9x32xf32>
      %267 = vector.shape_cast %264 : vector<9x32xf32> to vector<1x9x32xf32>
      tpu.vector_store %arg23[%c0_118, %c0_119, %c0_120], %267 {strides = array<i32>} : memref<1x9x32xf32, #tpu.memory_space<vmem>>, vector<1x9x32xf32>,
    } else {
    }
    return
  }
  func.func @transform_0(%arg0: i32, %arg1: i32) -> (i32, i32, i32) {
    %c0_i32 = arith.constant 0 : i32
    %c0_i32_0 = arith.constant 0 : i32
    %c0_i32_1 = arith.constant 0 : i32
    return %arg0, %c0_i32, %c0_i32_0 : i32, i32, i32
  }
  func.func @transform_1(%arg0: i32, %arg1: i32) -> (i32, i32) {
    %c0_i32 = arith.constant 0 : i32
    %c0_i32_0 = arith.constant 0 : i32
    %c0_i32_1 = arith.constant 0 : i32
    return %c0_i32, %c0_i32_0 : i32, i32
  }
  func.func @transform_2(%arg0: i32, %arg1: i32) -> (i32, i32) {
    %c0_i32 = arith.constant 0 : i32
    %c0_i32_0 = arith.constant 0 : i32
    %c0_i32_1 = arith.constant 0 : i32
    return %c0_i32, %c0_i32_0 : i32, i32
  }
  func.func @transform_3(%arg0: i32, %arg1: i32) -> (i32, i32, i32) {
    %c0_i32 = arith.constant 0 : i32
    %c0_i32_0 = arith.constant 0 : i32
    %c0_i32_1 = arith.constant 0 : i32
    return %arg1, %c0_i32, %c0_i32_0 : i32, i32, i32
  }
  func.func @transform_4(%arg0: i32, %arg1: i32) -> (i32, i32, i32) {
    %c0_i32 = arith.constant 0 : i32
    %c0_i32_0 = arith.constant 0 : i32
    %c0_i32_1 = arith.constant 0 : i32
    return %arg1, %c0_i32, %c0_i32_0 : i32, i32, i32
  }
  func.func @transform_5(%arg0: i32, %arg1: i32) -> (i32, i32, i32) {
    %c0_i32 = arith.constant 0 : i32
    %c0_i32_0 = arith.constant 0 : i32
    %c0_i32_1 = arith.constant 0 : i32
    return %arg1, %c0_i32, %c0_i32_0 : i32, i32, i32
  }
  func.func @transform_6(%arg0: i32, %arg1: i32) -> (i32, i32, i32) {
    %c0_i32 = arith.constant 0 : i32
    %c0_i32_0 = arith.constant 0 : i32
    %c0_i32_1 = arith.constant 0 : i32
    return %arg1, %c0_i32, %c0_i32_0 : i32, i32, i32
  }
  func.func @transform_7(%arg0: i32, %arg1: i32) -> (i32, i32, i32) {
    %c0_i32 = arith.constant 0 : i32
    %c0_i32_0 = arith.constant 0 : i32
    %c0_i32_1 = arith.constant 0 : i32
    return %arg1, %c0_i32, %c0_i32_0 : i32, i32, i32
  }
  func.func @transform_8(%arg0: i32, %arg1: i32) -> (i32, i32, i32) {
    %c0_i32 = arith.constant 0 : i32
    %c0_i32_0 = arith.constant 0 : i32
    %c0_i32_1 = arith.constant 0 : i32
    return %arg1, %c0_i32, %c0_i32_0 : i32, i32, i32
  }
  func.func @transform_9(%arg0: i32, %arg1: i32) -> (i32, i32, i32) {
    %c0_i32 = arith.constant 0 : i32
    %c0_i32_0 = arith.constant 0 : i32
    %c0_i32_1 = arith.constant 0 : i32
    return %arg1, %c0_i32, %c0_i32_0 : i32, i32, i32
  }
  func.func @transform_10(%arg0: i32, %arg1: i32) -> (i32, i32, i32) {
    %c0_i32 = arith.constant 0 : i32
    %c0_i32_0 = arith.constant 0 : i32
    %c0_i32_1 = arith.constant 0 : i32
    return %arg1, %c0_i32, %c0_i32_0 : i32, i32, i32
  }
  func.func @transform_11(%arg0: i32, %arg1: i32) -> (i32, i32, i32) {
    %c0_i32 = arith.constant 0 : i32
    %c0_i32_0 = arith.constant 0 : i32
    %c0_i32_1 = arith.constant 0 : i32
    return %arg1, %c0_i32, %c0_i32_0 : i32, i32, i32
  }
  func.func @transform_12(%arg0: i32, %arg1: i32) -> (i32, i32, i32) {
    %c0_i32 = arith.constant 0 : i32
    %c0_i32_0 = arith.constant 0 : i32
    %c0_i32_1 = arith.constant 0 : i32
    return %arg1, %c0_i32, %c0_i32_0 : i32, i32, i32
  }
  func.func @transform_13(%arg0: i32, %arg1: i32) -> (i32, i32, i32) {
    %c0_i32 = arith.constant 0 : i32
    %c0_i32_0 = arith.constant 0 : i32
    %c0_i32_1 = arith.constant 0 : i32
    return %arg1, %c0_i32, %c0_i32_0 : i32, i32, i32
  }
  func.func @transform_14(%arg0: i32, %arg1: i32) -> (i32, i32, i32) {
    %c0_i32 = arith.constant 0 : i32
    %c0_i32_0 = arith.constant 0 : i32
    %c0_i32_1 = arith.constant 0 : i32
    return %arg1, %c0_i32, %c0_i32_0 : i32, i32, i32
  }
  func.func @transform_15(%arg0: i32, %arg1: i32) -> (i32, i32, i32) {
    %c0_i32 = arith.constant 0 : i32
    %c0_i32_0 = arith.constant 0 : i32
    %c0_i32_1 = arith.constant 0 : i32
    return %arg1, %c0_i32, %c0_i32_0 : i32, i32, i32
  }
  func.func @transform_16(%arg0: i32, %arg1: i32) -> (i32, i32, i32) {
    %c0_i32 = arith.constant 0 : i32
    %c0_i32_0 = arith.constant 0 : i32
    %c0_i32_1 = arith.constant 0 : i32
    return %arg1, %c0_i32, %c0_i32_0 : i32, i32, i32
  }
  func.func @transform_17(%arg0: i32, %arg1: i32) -> (i32, i32, i32) {
    %c0_i32 = arith.constant 0 : i32
    %c0_i32_0 = arith.constant 0 : i32
    %c0_i32_1 = arith.constant 0 : i32
    return %arg1, %c0_i32, %c0_i32_0 : i32, i32, i32
  }
  func.func @transform_18(%arg0: i32, %arg1: i32) -> (i32, i32, i32) {
    %c0_i32 = arith.constant 0 : i32
    %c0_i32_0 = arith.constant 0 : i32
    %c0_i32_1 = arith.constant 0 : i32
    return %arg1, %c0_i32, %c0_i32_0 : i32, i32, i32
  }
  func.func @transform_19(%arg0: i32, %arg1: i32) -> (i32, i32) {
    %c0_i32 = arith.constant 0 : i32
    %c0_i32_0 = arith.constant 0 : i32
    %c0_i32_1 = arith.constant 0 : i32
    return %c0_i32, %c0_i32_0 : i32, i32
  }
  func.func @transform_20(%arg0: i32, %arg1: i32) -> (i32, i32) {
    %c0_i32 = arith.constant 0 : i32
    %c0_i32_0 = arith.constant 0 : i32
    %c0_i32_1 = arith.constant 0 : i32
    return %c0_i32, %c0_i32_0 : i32, i32
  }
  func.func @transform_21(%arg0: i32, %arg1: i32) -> (i32, i32, i32) {
    %c0_i32 = arith.constant 0 : i32
    %c0_i32_0 = arith.constant 0 : i32
    %c0_i32_1 = arith.constant 0 : i32
    return %arg0, %c0_i32, %c0_i32_0 : i32, i32, i32
  }
}

</mosaic_0001>

<llo_original>
// kernel: _lambda_.2
$region0: #{_lambda_.2}
  #allocation0 [shape = 'u32[]', space=smem, size = 0x4, offset = 0x4, fixed_abs, tag = 'smem constant byte address 0x4 - core index']
  #allocation1 [shape = 'u32[144,128]{1,0:T(1,128)}', space=vmem, size = 0x12000, scoped, tag = 'internal scratch']
  %s0 = inlined_call_operand.vmem [shape: f32[2,32,64], index: 0, kind: input, shape index: {}]
  %s1 = inlined_call_operand.vmem [shape: f32[64,66], index: 1, kind: input, shape index: {}]
  %s2 = inlined_call_operand.vmem [shape: f32[66,16], index: 2, kind: input, shape index: {}]
  %s3 = inlined_call_operand.vmem [shape: f32[2,32,16], index: 3, kind: output, shape index: {}]
  %s4 = sld [smem:[#allocation0]]
  $region45: #{_lambda_.2} parent=0
    _
  %s6 = ssub.s32 1, %s4
  %s7 = scalar_select 0, %s6, %s4
  loop: start=0, step=1, limit=4
  $region2: #{_lambda_.2} parent=0 // loop_pre_header
    _
  $region3: #{_lambda_.2} parent=0 // loop_header
    %s9 = sphi 0, %s13
    %p10 = scmp.ge.s32.totalorder %s9, 4
    %s19 = sphi 0, %s21
    %s22 = sphi 0, %s19
    %s23 = sphi 0, %s22
    %s39 = sphi 0, %s23
    %s43 = sphi 0, %s43
    %s45 = sphi 0, %s43
    %s46 = sphi 0, %s45
    %s60 = sphi 0, %s46
    %s64 = sphi 0, %s64
    %s66 = sphi 0, %s64
    %s67 = sphi 0, %s66
    %s81 = sphi 0, %s67
    %s87 = sphi 0, %s89
    %s90 = sphi 0, %s87
    %s91 = sphi 0, %s90
    %s107 = sphi 0, %s91
  $region4: #{_lambda_.2} parent=0 // loop_header_branch
    %12 = sbr.rel (%p10) target = $region8
  $region5: #{_lambda_.2} parent=0 // loop_body
    %s14 = ssub.s32 %s9, 1
    %s15 = ssub.s32 %s9, 2
    %s16 = sadd.s32 %s9, 1
    %s17 = ssub.s32 %s9, %s16
    %p18 = scmp.eq.s32.totalorder %s17, 0
    %s20 = sadd.s32 %s19, 1
    %s21 = scalar_select %p18, %s19, %s20
    %p24 = pneg %p18
    %p25 = scmp.eq.s32.totalorder %s9, 1
    %p26 = por %p24, %p25
    %p27 = scmp.ne.s32.totalorder %s19, %s22
    %p28 = scmp.eq.s32.totalorder %s9, 0
    %p29 = por %p27, %p28
    %p30 = scmp.ne.s32.totalorder %s19, %s22
    %p31 = scmp.eq.s32.totalorder %s14, 1
    %p32 = por %p30, %p31
    %p33 = scmp.ne.s32.totalorder %s22, %s23
    %p34 = scmp.eq.s32.totalorder %s14, 0
    %p35 = por %p33, %p34
    %p36 = scmp.ne.s32.totalorder %s22, %s23
    %p37 = scmp.eq.s32.totalorder %s15, 1
    %p38 = por %p36, %p37
    %p40 = scmp.ne.s32.totalorder %s23, %s39
    %p41 = scmp.eq.s32.totalorder %s15, 0
    %p42 = por %p40, %p41
    %s44 = sadd.s32 %s43, 1
    %p47 = scmp.eq.s32.totalorder %s9, 1
    %p48 = scmp.ne.s32.totalorder %s43, %s45
    %p49 = scmp.eq.s32.totalorder %s9, 0
    %p50 = por %p48, %p49
    %p51 = scmp.ne.s32.totalorder %s43, %s45
    %p52 = scmp.eq.s32.totalorder %s14, 1
    %p53 = por %p51, %p52
    %p54 = scmp.ne.s32.totalorder %s45, %s46
    %p55 = scmp.eq.s32.totalorder %s14, 0
    %p56 = por %p54, %p55
    %p57 = scmp.ne.s32.totalorder %s45, %s46
    %p58 = scmp.eq.s32.totalorder %s15, 1
    %p59 = por %p57, %p58
    %p61 = scmp.ne.s32.totalorder %s46, %s60
    %p62 = scmp.eq.s32.totalorder %s15, 0
    %p63 = por %p61, %p62
    %s65 = sadd.s32 %s64, 1
    %p68 = scmp.eq.s32.totalorder %s9, 1
    %p69 = scmp.ne.s32.totalorder %s64, %s66
    %p70 = scmp.eq.s32.totalorder %s9, 0
    %p71 = por %p69, %p70
    %p72 = scmp.ne.s32.totalorder %s64, %s66
    %p73 = scmp.eq.s32.totalorder %s14, 1
    %p74 = por %p72, %p73
    %p75 = scmp.ne.s32.totalorder %s66, %s67
    %p76 = scmp.eq.s32.totalorder %s14, 0
    %p77 = por %p75, %p76
    %p78 = scmp.ne.s32.totalorder %s66, %s67
    %p79 = scmp.eq.s32.totalorder %s15, 1
    %p80 = por %p78, %p79
    %p82 = scmp.ne.s32.totalorder %s67, %s81
    %p83 = scmp.eq.s32.totalorder %s15, 0
    %p84 = por %p82, %p83
    %s85 = ssub.s32 %s9, %s16
    %p86 = scmp.eq.s32.totalorder %s85, 0
    %s88 = sadd.s32 %s87, 1
    %s89 = scalar_select %p86, %s87, %s88
    %p92 = pneg %p86
    %p93 = scmp.eq.s32.totalorder %s9, 1
    %p94 = por %p92, %p93
    %p95 = scmp.ne.s32.totalorder %s87, %s90
    %p96 = scmp.eq.s32.totalorder %s9, 0
    %p97 = por %p95, %p96
    %p98 = scmp.ne.s32.totalorder %s87, %s90
    %p99 = scmp.eq.s32.totalorder %s14, 1
    %p100 = por %p98, %p99
    %p101 = scmp.ne.s32.totalorder %s90, %s91
    %p102 = scmp.eq.s32.totalorder %s14, 0
    %p103 = por %p101, %p102
    %p104 = scmp.ne.s32.totalorder %s90, %s91
    %p105 = scmp.eq.s32.totalorder %s15, 1
    %p106 = por %p104, %p105
    %p108 = scmp.ne.s32.totalorder %s91, %s107
    %p109 = scmp.eq.s32.totalorder %s15, 0
    %p110 = por %p108, %p109
    %p111 = scmp.le.s32.totalorder 1, %s9
    %p112 = scmp.lt.s32.totalorder %s9, 3
    %p113 = pnand %p111, %p112
    %p114 = pneg %p113
    // Predicated region
    $region9: #{_lambda_.2} parent=5 // pred_check
      _
    $region10: #{_lambda_.2} parent=5 // pred_check_branch
      %116 = sbr.rel (%p113) target = $region12
    $region11: #{_lambda_.2} parent=5 // pred_region
      %s117 = ssub.s32 %s9, 1
      // Predicated region
      $region13: #{_lambda_.2} parent=11 // pred_check
        %p118 = pneg %p56
      $region14: #{_lambda_.2} parent=11 // pred_check_branch
        %120 = sbr.rel (%p118) target = $region16
      $region15: #{_lambda_.2} parent=11 // pred_region
        _
      $region16: #{_lambda_.2} parent=11 // pred_fallthru
        _
      // Predicated region
      $region17: #{_lambda_.2} parent=11 // pred_check
        %p121 = pneg %p77
      $region18: #{_lambda_.2} parent=11 // pred_check_branch
        %123 = sbr.rel (%p121) target = $region20
      $region19: #{_lambda_.2} parent=11 // pred_region
        _
      $region20: #{_lambda_.2} parent=11 // pred_fallthru
        _
    $region12: #{_lambda_.2} parent=5 // pred_fallthru
      _
    %p124 = scmp.lt.s32.totalorder %s9, 2
    // Predicated region
    $region21: #{_lambda_.2} parent=5 // pred_check
      %p125 = pneg %p124
    $region22: #{_lambda_.2} parent=5 // pred_check_branch
      %127 = sbr.rel (%p125) target = $region24
    $region23: #{_lambda_.2} parent=5 // pred_region
      // Predicated region
      $region25: #{_lambda_.2} parent=23 // pred_check
        %p128 = pneg %p29
      $region26: #{_lambda_.2} parent=23 // pred_check_branch
        %130 = sbr.rel (%p128) target = $region28
      $region27: #{_lambda_.2} parent=23 // pred_region
        %p131 = scmp.lt.s32.totalorder %s9, 1
        %s132 = scalar_select %p131, %s9, 1
        %s133 = smul.addr %s132, 4
        %s134 = smul.addr %s133, 8
        %s135 = scalar_lea.vmem %s0, %s134
      $region28: #{_lambda_.2} parent=23 // pred_fallthru
        _
    $region24: #{_lambda_.2} parent=5 // pred_fallthru
      _
    %p136 = scmp.le.s32.totalorder 1, %s9
    %p137 = scmp.lt.s32.totalorder %s9, 3
    %p138 = pnand %p136, %p137
    %p139 = pneg %p138
    // Predicated region
    $region29: #{_lambda_.2} parent=5 // pred_check
      _
    $region30: #{_lambda_.2} parent=5 // pred_check_branch
      %141 = sbr.rel (%p138) target = $region32
    $region31: #{_lambda_.2} parent=5 // pred_region
      %s142 = ssub.s32 %s9, 1
      %p143 = scmp.lt.s32.totalorder %s14, 1
      %s144 = scalar_select %p143, %s14, 1
      %s145 = smul.addr %s144, 4
      %s146 = smul.addr %s145, 8
      %s147 = scalar_lea.vmem %s0, %s146
      %p148 = pneg %p35
      %p149 = pneg %p32
      %p150 = pneg %p56
      %p151 = pneg %p53
      %p152 = pneg %p77
      %p153 = pneg %p74
      %p154 = pneg %p103
      %p155 = pneg %p100
      %p156 = scmp.lt.s32.totalorder %s14, 1
      %s157 = scalar_select %p156, %s14, 1
      %s158 = smul.addr %s157, 4
      %s159 = smul.addr %s158, 8
      %s160 = scalar_lea.vmem %s3, %s159
      %p161 = scmp.lt.s32.totalorder %s14, 1
      %s162 = scalar_select %p161, %s14, 1
      %s163 = smul.addr %s162, 4
      %s164 = smul.addr %s163, 8
      %s165 = scalar_lea.vmem %s0, %s164
      %p166 = scmp.lt.s32.totalorder %s14, 1
      %s167 = scalar_select %p166, %s14, 1
      %s168 = smul.addr %s167, 4
      %s169 = smul.addr %s168, 8
      %s170 = scalar_lea.vmem %s3, %s169
      %v171 = vld [vmem:[%s165] sm:$0xff]
      %v172 = vld [vmem:[%s165 + $0x8] sm:$0xff]
      %v173 = vld [vmem:[%s165 + $0x10] sm:$0xff]
      %v174 = vld [vmem:[%s165 + $0x18] sm:$0xff]
      %v175 = vld [vmem:[%s1] sm:$0xff]
      %v176 = vld [vmem:[%s1 + $0x8] sm:$0xff]
      %v177 = vld [vmem:[%s1 + $0x10] sm:$0xff]
      %v178 = vld [vmem:[%s1 + $0x18] sm:$0xff]
      %v179 = vld [vmem:[%s1 + $0x20] sm:$0xff]
      %v180 = vld [vmem:[%s1 + $0x28] sm:$0xff]
      %v181 = vld [vmem:[%s1 + $0x30] sm:$0xff]
      %v182 = vld [vmem:[%s1 + $0x38] sm:$0xff]
      %vm183 = vcmask 523264
      %v185 = vsel %vm183, %v171, 0
      %v188 = vsel %vm183, %v172, 0
      %v191 = vsel %vm183, %v173, 0
      %v194 = vsel %vm183, %v174, 0
      %196 = vmatprep.subr.mxu0 0.0
      %197 = vmatpush1.msra.mxu0 %v175
      %198 = vmatprep.subr.mxu0 0.0
      %199 = vmatpush1.msra.mxu0 %v176
      %200 = vmatprep.subr.mxu0 0.0
      %201 = vmatpush1.msra.mxu0 %v177
      %202 = vmatprep.subr.mxu0 0.0
      %203 = vmatpush1.msra.mxu0 %v178
      %204 = vmatprep.subr.mxu0 0.0
      %205 = vmatpush1.msra.mxu0 %v179
      %206 = vmatprep.subr.mxu0 0.0
      %207 = vmatpush1.msra.mxu0 %v180
      %208 = vmatprep.subr.mxu0 0.0
      %209 = vmatpush1.msra.mxu0 %v181
      %210 = vmatprep.subr.mxu0 0.0
      %211 = vmatpush1.msra.mxu0 %v182
      %212 = vmatprep.subr.mxu0 0.0
      %213 = vmatpush1.msra.mxu0 0.0
      %214 = vmatprep.subr.mxu0 0.0
      %215 = vmatpush1.msra.mxu0 0.0
      %216 = vmatprep.subr.mxu0 0.0
      %217 = vmatpush1.msra.mxu0 0.0
      %218 = vmatprep.subr.mxu0 0.0
      %219 = vmatpush1.msra.mxu0 0.0
      %220 = vmatprep.subr.mxu0 0.0
      %221 = vmatpush1.msra.mxu0 0.0
      %222 = vmatprep.subr.mxu0 0.0
      %223 = vmatpush1.msra.mxu0 0.0
      %224 = vmatprep.subr.mxu0 0.0
      %225 = vmatpush1.msra.mxu0 0.0
      %226 = vmatprep.subr.mxu0 0.0
      %227 = vmatpush1.msra.mxu0 0.0
      %228 = vmatprep.subr.mxu0 0.0
      %229 = vmatpush1.msra.mxu0 0.0
      %230 = vmatprep.subr.mxu0 0.0
      %231 = vmatpush1.msra.mxu0 0.0
      %232 = vmatprep.subr.mxu0 0.0
      %233 = vmatpush1.msra.mxu0 0.0
      %234 = vmatprep.subr.mxu0 0.0
      %235 = vmatpush1.msra.mxu0 0.0
      %236 = vmatprep.subr.mxu0 0.0
      %237 = vmatpush1.msra.mxu0 0.0
      %238 = vmatprep.subr.mxu0 0.0
      %239 = vmatpush1.msra.mxu0 0.0
      %240 = vmatprep.subr.mxu0 0.0
      %241 = vmatpush1.msra.mxu0 0.0
      %242 = vmatprep.subr.mxu0 0.0
      %243 = vmatpush1.msra.mxu0 0.0
      %244 = vmatprep.subr.mxu0 0.0
      %245 = vmatpush1.msra.mxu0 0.0
      %246 = vmatprep.subr.mxu0 0.0
      %247 = vmatpush1.msra.mxu0 0.0
      %248 = vmatprep.subr.mxu0 0.0
      %249 = vmatpush1.msra.mxu0 0.0
      %250 = vmatprep.subr.mxu0 0.0
      %251 = vmatpush1.msra.mxu0 0.0
      %252 = vmatprep.subr.mxu0 0.0
      %253 = vmatpush1.msra.mxu0 0.0
      %254 = vmatprep.subr.mxu0 0.0
      %255 = vmatpush1.msra.mxu0 0.0
      %256 = vmatprep.subr.mxu0 0.0
      %257 = vmatpush1.msra.mxu0 0.0
      %258 = vmatprep.subr.mxu0 0.0
      %259 = vmatpush1.msra.mxu0 0.0
      %260 = vmatprep.mubr.f32.mxu0 0.0
      %261 = vmatmul.mubr.f32.gmra.mrb[0].mxu0 %v185
      %v262 = vpop.f32.mrb[0].mxu0
      %v263 = vadd.f32 0.0, %v262
      %v264 = vpop.f32.mrb[0].mxu0
      %265 = vmatprep.mubr.f32.mxu0 0.0
      %266 = vmatmul.mubr.f32.gmra.mrb[0].mxu0 %v188
      %v267 = vpop.f32.mrb[0].mxu0
      %v268 = vadd.f32 0.0, %v267
      %v269 = vpop.f32.mrb[0].mxu0
      %270 = vmatprep.mubr.f32.mxu0 0.0
      %271 = vmatmul.mubr.f32.gmra.mrb[0].mxu0 %v191
      %v272 = vpop.f32.mrb[0].mxu0
      %v273 = vadd.f32 0.0, %v272
      %v274 = vpop.f32.mrb[0].mxu0
      %275 = vmatprep.mubr.f32.mxu0 0.0
      %276 = vmatmul.mubr.f32.gmra.mrb[0].mxu0 %v194
      %v277 = vpop.f32.mrb[0].mxu0
      %v278 = vadd.f32 0.0, %v277
      %v279 = vpop.f32.mrb[0].mxu0
      %280 = vdwg.mxu0
      %v281 = vmul.f32 %v263, %v263
      %v282 = vmul.f32 %v268, %v268
      %v283 = vmul.f32 %v273, %v273
      %v284 = vmul.f32 %v278, %v278
      %v285 = vld [vmem:[%s2] sm:$0xff]
      %v286 = vld [vmem:[%s2 + $0x8] sm:$0xff]
      %v287 = vld [vmem:[%s2 + $0x10] sm:$0xff]
      %v288 = vld [vmem:[%s2 + $0x18] sm:$0xff]
      %v289 = vld [vmem:[%s2 + $0x20] sm:$0xff]
      %v290 = vld [vmem:[%s2 + $0x28] sm:$0xff]
      %v291 = vld [vmem:[%s2 + $0x30] sm:$0xff]
      %v292 = vld [vmem:[%s2 + $0x38] sm:$0xff]
      %v293 = vld [vmem:[%s2 + $0x40] sm:$0x3]
      %vm294 = vcmask 539648
      %v296 = vsel %vm294, %v281, 0
      %v299 = vsel %vm294, %v282, 0
      %v302 = vsel %vm294, %v283, 0
      %v305 = vsel %vm294, %v284, 0
      %vm307 = vcmask 1041408
      %v309 = vsel %vm307, %v293, 0
      %311 = vmatprep.subr.mxu0 0.0
      %312 = vmatpush1.msra.mxu0 %v285
      %313 = vmatprep.subr.mxu0 0.0
      %314 = vmatpush1.msra.mxu0 %v286
      %315 = vmatprep.subr.mxu0 0.0
      %316 = vmatpush1.msra.mxu0 %v287
      %317 = vmatprep.subr.mxu0 0.0
      %318 = vmatpush1.msra.mxu0 %v288
      %319 = vmatprep.subr.mxu0 0.0
      %320 = vmatpush1.msra.mxu0 %v289
      %321 = vmatprep.subr.mxu0 0.0
      %322 = vmatpush1.msra.mxu0 %v290
      %323 = vmatprep.subr.mxu0 0.0
      %324 = vmatpush1.msra.mxu0 %v291
      %325 = vmatprep.subr.mxu0 0.0
      %326 = vmatpush1.msra.mxu0 %v292
      %327 = vmatprep.subr.mxu0 0.0
      %328 = vmatpush1.msra.mxu0 %v309
      %329 = vmatprep.subr.mxu0 0.0
      %330 = vmatpush1.msra.mxu0 0.0
      %331 = vmatprep.subr.mxu0 0.0
      %332 = vmatpush1.msra.mxu0 0.0
      %333 = vmatprep.subr.mxu0 0.0
      %334 = vmatpush1.msra.mxu0 0.0
      %335 = vmatprep.subr.mxu0 0.0
      %336 = vmatpush1.msra.mxu0 0.0
      %337 = vmatprep.subr.mxu0 0.0
      %338 = vmatpush1.msra.mxu0 0.0
      %339 = vmatprep.subr.mxu0 0.0
      %340 = vmatpush1.msra.mxu0 0.0
      %341 = vmatprep.subr.mxu0 0.0
      %342 = vmatpush1.msra.mxu0 0.0
      %343 = vmatprep.subr.mxu0 0.0
      %344 = vmatpush1.msra.mxu0 0.0
      %345 = vmatprep.subr.mxu0 0.0
      %346 = vmatpush1.msra.mxu0 0.0
      %347 = vmatprep.subr.mxu0 0.0
      %348 = vmatpush1.msra.mxu0 0.0
      %349 = vmatprep.subr.mxu0 0.0
      %350 = vmatpush1.msra.mxu0 0.0
      %351 = vmatprep.subr.mxu0 0.0
      %352 = vmatpush1.msra.mxu0 0.0
      %353 = vmatprep.subr.mxu0 0.0
      %354 = vmatpush1.msra.mxu0 0.0
      %355 = vmatprep.subr.mxu0 0.0
      %356 = vmatpush1.msra.mxu0 0.0
      %357 = vmatprep.subr.mxu0 0.0
      %358 = vmatpush1.msra.mxu0 0.0
      %359 = vmatprep.subr.mxu0 0.0
      %360 = vmatpush1.msra.mxu0 0.0
      %361 = vmatprep.subr.mxu0 0.0
      %362 = vmatpush1.msra.mxu0 0.0
      %363 = vmatprep.subr.mxu0 0.0
      %364 = vmatpush1.msra.mxu0 0.0
      %365 = vmatprep.subr.mxu0 0.0
      %366 = vmatpush1.msra.mxu0 0.0
      %367 = vmatprep.subr.mxu0 0.0
      %368 = vmatpush1.msra.mxu0 0.0
      %369 = vmatprep.subr.mxu0 0.0
      %370 = vmatpush1.msra.mxu0 0.0
      %371 = vmatprep.subr.mxu0 0.0
      %372 = vmatpush1.msra.mxu0 0.0
      %373 = vmatprep.subr.mxu0 0.0
      %374 = vmatpush1.msra.mxu0 0.0
      %375 = vmatprep.mubr.f32.mxu0 0.0
      %376 = vmatmul.mubr.f32.gmra.mrb[0].mxu0 %v296
      %v377 = vpop.f32.mrb[0].mxu0
      %v378 = vadd.f32 0.0, %v377
      %v379 = vpop.f32.mrb[0].mxu0
      %380 = vmatprep.mubr.f32.mxu0 0.0
      %381 = vmatmul.mubr.f32.gmra.mrb[0].mxu0 %v299
      %v382 = vpop.f32.mrb[0].mxu0
      %v383 = vadd.f32 0.0, %v382
      %v384 = vpop.f32.mrb[0].mxu0
      %385 = vmatprep.mubr.f32.mxu0 0.0
      %386 = vmatmul.mubr.f32.gmra.mrb[0].mxu0 %v302
      %v387 = vpop.f32.mrb[0].mxu0
      %v388 = vadd.f32 0.0, %v387
      %v389 = vpop.f32.mrb[0].mxu0
      %390 = vmatprep.mubr.f32.mxu0 0.0
      %391 = vmatmul.mubr.f32.gmra.mrb[0].mxu0 %v305
      %v392 = vpop.f32.mrb[0].mxu0
      %v393 = vadd.f32 0.0, %v392
      %v394 = vpop.f32.mrb[0].mxu0
      %395 = vdwg.mxu0
      %v396 = vmax.f32 %v378, 1e-10
      %v397 = vmax.f32 %v383, 1e-10
      %v398 = vmax.f32 %v388, 1e-10
      %v399 = vmax.f32 %v393, 1e-10
      %v400 = vlog2.pop %v396
      %v401 = vmul.f32 %v400, 0.6931472
      %v402 = vlog2.pop %v397
      %v403 = vmul.f32 %v402, 0.6931472
      %v404 = vlog2.pop %v398
      %v405 = vmul.f32 %v404, 0.6931472
      %v406 = vlog2.pop %v399
      %v407 = vmul.f32 %v406, 0.6931472
      %v408 = vmul.f32 %v401, 0.4342945
      %v409 = vmul.f32 %v403, 0.4342945
      %v410 = vmul.f32 %v405, 0.4342945
      %v411 = vmul.f32 %v407, 0.4342945
      %v412 = vmul.f32 %v408, 10.0
      %v413 = vmul.f32 %v409, 10.0
      %v414 = vmul.f32 %v410, 10.0
      %v415 = vmul.f32 %v411, 10.0
      %vm416 = vcmask 130048
      %v417 = vsel %vm416, %v412, -inf
      %v418 = vsel %vm416, %v413, -inf
      %v419 = vsel %vm416, %v414, -inf
      %v420 = vsel %vm416, %v415, -inf
      %v421 = vmax.f32 %v417, %v418
      %v422 = vmax.f32 %v419, %v420
      %v423 = vmax.f32 %v421, %v422
      %424 = vmax.xlane.f32.xlu0 %v423
      %v425 = vpop.xlane.xlu0 %424
      %v426 = vrot.slane %v425, 4
      %v427 = vmax.f32 %v425, %v426
      %v428 = vrot.slane %v427, 2
      %v429 = vmax.f32 %v427, %v428
      %v430 = vrot.slane %v429, 1
      %v431 = vmax.f32 %v429, %v430
      %s432 = vtos %v431
      %s433 = ssub.f32 %s432, 80.0
      %v434 = vstv %s433
      %v435 = vmax.f32 %v412, %v434
      %v436 = vmax.f32 %v413, %v434
      %v437 = vmax.f32 %v414, %v434
      %v438 = vmax.f32 %v415, %v434
      %v439 = vmax.f32 %v435, -50.0
      %v440 = vmax.f32 %v436, -50.0
      %v441 = vmax.f32 %v437, -50.0
      %v442 = vmax.f32 %v438, -50.0
      %v443 = vmin.f32 %v439, 80.0
      %v444 = vmin.f32 %v440, 80.0
      %v445 = vmin.f32 %v441, 80.0
      %v446 = vmin.f32 %v442, 80.0
      %v447 = vadd.f32 %v443, 4.26
      %v448 = vadd.f32 %v444, 4.26
      %v449 = vadd.f32 %v445, 4.26
      %v450 = vadd.f32 %v446, 4.26
      %v451 = vrcp.pop 4.57
      %v452 = vmul.f32 %v447, %v451
      %v453 = vmul.f32 %v448, %v451
      %v454 = vmul.f32 %v449, %v451
      %v455 = vmul.f32 %v450, %v451
      %456 = vst.msk [vmem:[%s170] sm:$0xff] %vm416, %v452
      %457 = vst.msk [vmem:[%s170 + $0x8] sm:$0xff] %vm416, %v453
      %458 = vst.msk [vmem:[%s170 + $0x10] sm:$0xff] %vm416, %v454
      %459 = vst.msk [vmem:[%s170 + $0x18] sm:$0xff] %vm416, %v455
      %p460 = scmp.lt.s32.totalorder %s14, 1
      %s461 = scalar_select %p460, %s14, 1
      %s462 = smul.addr %s461, 4
      %s463 = smul.addr %s462, 8
      %s464 = scalar_lea.vmem %s3, %s463
      // Predicated region
      $region33: #{_lambda_.2} parent=31 // pred_check
        %p465 = pneg %p100
      $region34: #{_lambda_.2} parent=31 // pred_check_branch
        %467 = sbr.rel (%p465) target = $region36
      $region35: #{_lambda_.2} parent=31 // pred_region
        _
      $region36: #{_lambda_.2} parent=31 // pred_fallthru
        _
    $region32: #{_lambda_.2} parent=5 // pred_fallthru
      _
    %p468 = scmp.le.s32.totalorder 2, %s9
    // Predicated region
    $region37: #{_lambda_.2} parent=5 // pred_check
      %p469 = pneg %p468
    $region38: #{_lambda_.2} parent=5 // pred_check_branch
      %471 = sbr.rel (%p469) target = $region40
    $region39: #{_lambda_.2} parent=5 // pred_region
      %s472 = ssub.s32 %s9, 2
      // Predicated region
      $region41: #{_lambda_.2} parent=39 // pred_check
        %p473 = pneg %p106
      $region42: #{_lambda_.2} parent=39 // pred_check_branch
        %475 = sbr.rel (%p473) target = $region44
      $region43: #{_lambda_.2} parent=39 // pred_region
        %p476 = scmp.lt.s32.totalorder %s15, 1
        %s477 = scalar_select %p476, %s15, 1
        %s478 = smul.addr %s477, 4
        %s479 = smul.addr %s478, 8
        %s480 = scalar_lea.vmem %s3, %s479
      $region44: #{_lambda_.2} parent=39 // pred_fallthru
        _
    $region40: #{_lambda_.2} parent=5 // pred_fallthru
      _
  $region6: #{_lambda_.2} parent=0 // loop_footer
    %s13 = sadd.s32 1, %s9
  $region7: #{_lambda_.2} parent=0 // loop_footer_branch
    %8 = sbr.rel target = $region3
  $region8: #{_lambda_.2} parent=0 // loop_exit
    _

// kernel: _lambda_.3
$region0: #{_lambda_.3}
  #allocation0 [shape = 'u32[]', space=smem, size = 0x4, offset = 0x4, fixed_abs, tag = 'smem constant byte address 0x4 - core index']
  #allocation1 [shape = 'u32[144,128]{1,0:T(1,128)}', space=vmem, size = 0x12000, scoped, tag = 'internal scratch']
  #allocation2 [shape = 'f32[9,32]{1,0:T(8,128)}', space=vmem, size = 0x2000, scoped, tag = 'scratch operand']
  %s0 = inlined_call_operand.vmem [shape: f32[2,9,64], index: 0, kind: input, shape index: {}]
  %s1 = inlined_call_operand.vmem [shape: f32[64,32], index: 1, kind: input, shape index: {}]
  %s2 = inlined_call_operand.vmem [shape: f32[9,32], index: 2, kind: input, shape index: {}]
  %s3 = inlined_call_operand.vmem [shape: f32[2,1,32], index: 3, kind: input, shape index: {}]
  %s4 = inlined_call_operand.vmem [shape: f32[2,1,32], index: 4, kind: input, shape index: {}]
  %s5 = inlined_call_operand.vmem [shape: f32[2,32,32], index: 5, kind: input, shape index: {}]
  %s6 = inlined_call_operand.vmem [shape: f32[2,1,32], index: 6, kind: input, shape index: {}]
  %s7 = inlined_call_operand.vmem [shape: f32[2,32,32], index: 7, kind: input, shape index: {}]
  %s8 = inlined_call_operand.vmem [shape: f32[2,1,32], index: 8, kind: input, shape index: {}]
  %s9 = inlined_call_operand.vmem [shape: f32[2,32,32], index: 9, kind: input, shape index: {}]
  %s10 = inlined_call_operand.vmem [shape: f32[2,1,32], index: 10, kind: input, shape index: {}]
  %s11 = inlined_call_operand.vmem [shape: f32[2,32,32], index: 11, kind: input, shape index: {}]
  %s12 = inlined_call_operand.vmem [shape: f32[2,1,32], index: 12, kind: input, shape index: {}]
  %s13 = inlined_call_operand.vmem [shape: f32[2,1,32], index: 13, kind: input, shape index: {}]
  %s14 = inlined_call_operand.vmem [shape: f32[2,1,32], index: 14, kind: input, shape index: {}]
  %s15 = inlined_call_operand.vmem [shape: f32[2,32,128], index: 15, kind: input, shape index: {}]
  %s16 = inlined_call_operand.vmem [shape: f32[2,1,128], index: 16, kind: input, shape index: {}]
  %s17 = inlined_call_operand.vmem [shape: f32[2,128,32], index: 17, kind: input, shape index: {}]
  %s18 = inlined_call_operand.vmem [shape: f32[2,1,32], index: 18, kind: input, shape index: {}]
  %s19 = inlined_call_operand.vmem [shape: f32[1,32], index: 19, kind: input, shape index: {}]
  %s20 = inlined_call_operand.vmem [shape: f32[1,32], index: 20, kind: input, shape index: {}]
  %s21 = inlined_call_operand.vmem [shape: f32[2,9,32], index: 21, kind: output, shape index: {}]
  %s22 = sld [smem:[#allocation0]]
  $region125: #{_lambda_.3} parent=0
    _
  %s24 = ssub.s32 1, %s22
  %s25 = scalar_select 0, %s24, %s22
  loop: start=0, step=1, limit=6
  $region2: #{_lambda_.3} parent=0 // loop_pre_header
    _
  $region3: #{_lambda_.3} parent=0 // loop_header
    %s27 = sphi 0, %s31
    %p28 = scmp.ge.s32.totalorder %s27, 6
    %s34 = sphi 0, %s46
    %s35 = sphi 0, %s42
    %s36 = sphi 0, %s34
    %s37 = sphi 0, %s35
    %s38 = sphi 0, %s36
    %s39 = sphi 0, %s37
    %s49 = sphi 0, %s51
    %s52 = sphi 0, %s49
    %s53 = sphi 0, %s52
    %s69 = sphi 0, %s53
    %s73 = sphi 0, %s73
    %s75 = sphi 0, %s73
    %s76 = sphi 0, %s75
    %s90 = sphi 0, %s76
    %s94 = sphi 0, %s94
    %s96 = sphi 0, %s94
    %s97 = sphi 0, %s96
    %s111 = sphi 0, %s97
    %s117 = sphi 0, %s119
    %s120 = sphi 0, %s117
    %s121 = sphi 0, %s120
    %s137 = sphi 0, %s121
    %s143 = sphi 0, %s145
    %s146 = sphi 0, %s143
    %s147 = sphi 0, %s146
    %s163 = sphi 0, %s147
    %s169 = sphi 0, %s171
    %s172 = sphi 0, %s169
    %s173 = sphi 0, %s172
    %s189 = sphi 0, %s173
    %s195 = sphi 0, %s197
    %s198 = sphi 0, %s195
    %s199 = sphi 0, %s198
    %s215 = sphi 0, %s199
    %s221 = sphi 0, %s223
    %s224 = sphi 0, %s221
    %s225 = sphi 0, %s224
    %s241 = sphi 0, %s225
    %s247 = sphi 0, %s249
    %s250 = sphi 0, %s247
    %s251 = sphi 0, %s250
    %s267 = sphi 0, %s251
    %s273 = sphi 0, %s275
    %s276 = sphi 0, %s273
    %s277 = sphi 0, %s276
    %s293 = sphi 0, %s277
    %s299 = sphi 0, %s301
    %s302 = sphi 0, %s299
    %s303 = sphi 0, %s302
    %s319 = sphi 0, %s303
    %s325 = sphi 0, %s327
    %s328 = sphi 0, %s325
    %s329 = sphi 0, %s328
    %s345 = sphi 0, %s329
    %s351 = sphi 0, %s353
    %s354 = sphi 0, %s351
    %s355 = sphi 0, %s354
    %s371 = sphi 0, %s355
    %s377 = sphi 0, %s379
    %s380 = sphi 0, %s377
    %s381 = sphi 0, %s380
    %s397 = sphi 0, %s381
    %s403 = sphi 0, %s405
    %s406 = sphi 0, %s403
    %s407 = sphi 0, %s406
    %s423 = sphi 0, %s407
    %s429 = sphi 0, %s431
    %s432 = sphi 0, %s429
    %s433 = sphi 0, %s432
    %s449 = sphi 0, %s433
    %s455 = sphi 0, %s457
    %s458 = sphi 0, %s455
    %s459 = sphi 0, %s458
    %s475 = sphi 0, %s459
    %s481 = sphi 0, %s483
    %s484 = sphi 0, %s481
    %s485 = sphi 0, %s484
    %s501 = sphi 0, %s485
    %s507 = sphi 0, %s509
    %s510 = sphi 0, %s507
    %s511 = sphi 0, %s510
    %s527 = sphi 0, %s511
    %s531 = sphi 0, %s531
    %s533 = sphi 0, %s531
    %s534 = sphi 0, %s533
    %s548 = sphi 0, %s534
    %s552 = sphi 0, %s552
    %s554 = sphi 0, %s552
    %s555 = sphi 0, %s554
    %s569 = sphi 0, %s555
    %s575 = sphi 0, %s577
    %s578 = sphi 0, %s575
    %s579 = sphi 0, %s578
    %s595 = sphi 0, %s579
  $region4: #{_lambda_.3} parent=0 // loop_header_branch
    %30 = sbr.rel (%p28) target = $region8
  $region5: #{_lambda_.3} parent=0 // loop_body
    %s32 = ssub.s32 %s27, 1
    %s33 = ssub.s32 %s27, 2
    %s40 = sadd.s32 1, %s35
    %p41 = scmp.ge.s32.totalorder %s40, 2
    %s42 = scalar_select %p41, 0, %s40
    %s43 = sadd.s32 1, %s34
    %s44 = scalar_select %p41, %s43, %s34
    %p45 = scmp.ge.s32.totalorder %s44, 2
    %s46 = scalar_select %p45, 0, %s44
    %s47 = ssub.s32 %s34, %s46
    %p48 = scmp.eq.s32.totalorder %s47, 0
    %s50 = sadd.s32 %s49, 1
    %s51 = scalar_select %p48, %s49, %s50
    %p54 = pneg %p48
    %p55 = scmp.eq.s32.totalorder %s27, 3
    %p56 = por %p54, %p55
    %p57 = scmp.ne.s32.totalorder %s49, %s52
    %p58 = scmp.eq.s32.totalorder %s27, 0
    %p59 = por %p57, %p58
    %p60 = scmp.ne.s32.totalorder %s49, %s52
    %p61 = scmp.eq.s32.totalorder %s32, 3
    %p62 = por %p60, %p61
    %p63 = scmp.ne.s32.totalorder %s52, %s53
    %p64 = scmp.eq.s32.totalorder %s32, 0
    %p65 = por %p63, %p64
    %p66 = scmp.ne.s32.totalorder %s52, %s53
    %p67 = scmp.eq.s32.totalorder %s33, 3
    %p68 = por %p66, %p67
    %p70 = scmp.ne.s32.totalorder %s53, %s69
    %p71 = scmp.eq.s32.totalorder %s33, 0
    %p72 = por %p70, %p71
    %s74 = sadd.s32 %s73, 1
    %p77 = scmp.eq.s32.totalorder %s27, 3
    %p78 = scmp.ne.s32.totalorder %s73, %s75
    %p79 = scmp.eq.s32.totalorder %s27, 0
    %p80 = por %p78, %p79
    %p81 = scmp.ne.s32.totalorder %s73, %s75
    %p82 = scmp.eq.s32.totalorder %s32, 3
    %p83 = por %p81, %p82
    %p84 = scmp.ne.s32.totalorder %s75, %s76
    %p85 = scmp.eq.s32.totalorder %s32, 0
    %p86 = por %p84, %p85
    %p87 = scmp.ne.s32.totalorder %s75, %s76
    %p88 = scmp.eq.s32.totalorder %s33, 3
    %p89 = por %p87, %p88
    %p91 = scmp.ne.s32.totalorder %s76, %s90
    %p92 = scmp.eq.s32.totalorder %s33, 0
    %p93 = por %p91, %p92
    %s95 = sadd.s32 %s94, 1
    %p98 = scmp.eq.s32.totalorder %s27, 3
    %p99 = scmp.ne.s32.totalorder %s94, %s96
    %p100 = scmp.eq.s32.totalorder %s27, 0
    %p101 = por %p99, %p100
    %p102 = scmp.ne.s32.totalorder %s94, %s96
    %p103 = scmp.eq.s32.totalorder %s32, 3
    %p104 = por %p102, %p103
    %p105 = scmp.ne.s32.totalorder %s96, %s97
    %p106 = scmp.eq.s32.totalorder %s32, 0
    %p107 = por %p105, %p106
    %p108 = scmp.ne.s32.totalorder %s96, %s97
    %p109 = scmp.eq.s32.totalorder %s33, 3
    %p110 = por %p108, %p109
    %p112 = scmp.ne.s32.totalorder %s97, %s111
    %p113 = scmp.eq.s32.totalorder %s33, 0
    %p114 = por %p112, %p113
    %s115 = ssub.s32 %s35, %s42
    %p116 = scmp.eq.s32.totalorder %s115, 0
    %s118 = sadd.s32 %s117, 1
    %s119 = scalar_select %p116, %s117, %s118
    %p122 = pneg %p116
    %p123 = scmp.eq.s32.totalorder %s27, 3
    %p124 = por %p122, %p123
    %p125 = scmp.ne.s32.totalorder %s117, %s120
    %p126 = scmp.eq.s32.totalorder %s27, 0
    %p127 = por %p125, %p126
    %p128 = scmp.ne.s32.totalorder %s117, %s120
    %p129 = scmp.eq.s32.totalorder %s32, 3
    %p130 = por %p128, %p129
    %p131 = scmp.ne.s32.totalorder %s120, %s121
    %p132 = scmp.eq.s32.totalorder %s32, 0
    %p133 = por %p131, %p132
    %p134 = scmp.ne.s32.totalorder %s120, %s121
    %p135 = scmp.eq.s32.totalorder %s33, 3
    %p136 = por %p134, %p135
    %p138 = scmp.ne.s32.totalorder %s121, %s137
    %p139 = scmp.eq.s32.totalorder %s33, 0
    %p140 = por %p138, %p139
    %s141 = ssub.s32 %s35, %s42
    %p142 = scmp.eq.s32.totalorder %s141, 0
    %s144 = sadd.s32 %s143, 1
    %s145 = scalar_select %p142, %s143, %s144
    %p148 = pneg %p142
    %p149 = scmp.eq.s32.totalorder %s27, 3
    %p150 = por %p148, %p149
    %p151 = scmp.ne.s32.totalorder %s143, %s146
    %p152 = scmp.eq.s32.totalorder %s27, 0
    %p153 = por %p151, %p152
    %p154 = scmp.ne.s32.totalorder %s143, %s146
    %p155 = scmp.eq.s32.totalorder %s32, 3
    %p156 = por %p154, %p155
    %p157 = scmp.ne.s32.totalorder %s146, %s147
    %p158 = scmp.eq.s32.totalorder %s32, 0
    %p159 = por %p157, %p158
    %p160 = scmp.ne.s32.totalorder %s146, %s147
    %p161 = scmp.eq.s32.totalorder %s33, 3
    %p162 = por %p160, %p161
    %p164 = scmp.ne.s32.totalorder %s147, %s163
    %p165 = scmp.eq.s32.totalorder %s33, 0
    %p166 = por %p164, %p165
    %s167 = ssub.s32 %s35, %s42
    %p168 = scmp.eq.s32.totalorder %s167, 0
    %s170 = sadd.s32 %s169, 1
    %s171 = scalar_select %p168, %s169, %s170
    %p174 = pneg %p168
    %p175 = scmp.eq.s32.totalorder %s27, 3
    %p176 = por %p174, %p175
    %p177 = scmp.ne.s32.totalorder %s169, %s172
    %p178 = scmp.eq.s32.totalorder %s27, 0
    %p179 = por %p177, %p178
    %p180 = scmp.ne.s32.totalorder %s169, %s172
    %p181 = scmp.eq.s32.totalorder %s32, 3
    %p182 = por %p180, %p181
    %p183 = scmp.ne.s32.totalorder %s172, %s173
    %p184 = scmp.eq.s32.totalorder %s32, 0
    %p185 = por %p183, %p184
    %p186 = scmp.ne.s32.totalorder %s172, %s173
    %p187 = scmp.eq.s32.totalorder %s33, 3
    %p188 = por %p186, %p187
    %p190 = scmp.ne.s32.totalorder %s173, %s189
    %p191 = scmp.eq.s32.totalorder %s33, 0
    %p192 = por %p190, %p191
    %s193 = ssub.s32 %s35, %s42
    %p194 = scmp.eq.s32.totalorder %s193, 0
    %s196 = sadd.s32 %s195, 1
    %s197 = scalar_select %p194, %s195, %s196
    %p200 = pneg %p194
    %p201 = scmp.eq.s32.totalorder %s27, 3
    %p202 = por %p200, %p201
    %p203 = scmp.ne.s32.totalorder %s195, %s198
    %p204 = scmp.eq.s32.totalorder %s27, 0
    %p205 = por %p203, %p204
    %p206 = scmp.ne.s32.totalorder %s195, %s198
    %p207 = scmp.eq.s32.totalorder %s32, 3
    %p208 = por %p206, %p207
    %p209 = scmp.ne.s32.totalorder %s198, %s199
    %p210 = scmp.eq.s32.totalorder %s32, 0
    %p211 = por %p209, %p210
    %p212 = scmp.ne.s32.totalorder %s198, %s199
    %p213 = scmp.eq.s32.totalorder %s33, 3
    %p214 = por %p212, %p213
    %p216 = scmp.ne.s32.totalorder %s199, %s215
    %p217 = scmp.eq.s32.totalorder %s33, 0
    %p218 = por %p216, %p217
    %s219 = ssub.s32 %s35, %s42
    %p220 = scmp.eq.s32.totalorder %s219, 0
    %s222 = sadd.s32 %s221, 1
    %s223 = scalar_select %p220, %s221, %s222
    %p226 = pneg %p220
    %p227 = scmp.eq.s32.totalorder %s27, 3
    %p228 = por %p226, %p227
    %p229 = scmp.ne.s32.totalorder %s221, %s224
    %p230 = scmp.eq.s32.totalorder %s27, 0
    %p231 = por %p229, %p230
    %p232 = scmp.ne.s32.totalorder %s221, %s224
    %p233 = scmp.eq.s32.totalorder %s32, 3
    %p234 = por %p232, %p233
    %p235 = scmp.ne.s32.totalorder %s224, %s225
    %p236 = scmp.eq.s32.totalorder %s32, 0
    %p237 = por %p235, %p236
    %p238 = scmp.ne.s32.totalorder %s224, %s225
    %p239 = scmp.eq.s32.totalorder %s33, 3
    %p240 = por %p238, %p239
    %p242 = scmp.ne.s32.totalorder %s225, %s241
    %p243 = scmp.eq.s32.totalorder %s33, 0
    %p244 = por %p242, %p243
    %s245 = ssub.s32 %s35, %s42
    %p246 = scmp.eq.s32.totalorder %s245, 0
    %s248 = sadd.s32 %s247, 1
    %s249 = scalar_select %p246, %s247, %s248
    %p252 = pneg %p246
    %p253 = scmp.eq.s32.totalorder %s27, 3
    %p254 = por %p252, %p253
    %p255 = scmp.ne.s32.totalorder %s247, %s250
    %p256 = scmp.eq.s32.totalorder %s27, 0
    %p257 = por %p255, %p256
    %p258 = scmp.ne.s32.totalorder %s247, %s250
    %p259 = scmp.eq.s32.totalorder %s32, 3
    %p260 = por %p258, %p259
    %p261 = scmp.ne.s32.totalorder %s250, %s251
    %p262 = scmp.eq.s32.totalorder %s32, 0
    %p263 = por %p261, %p262
    %p264 = scmp.ne.s32.totalorder %s250, %s251
    %p265 = scmp.eq.s32.totalorder %s33, 3
    %p266 = por %p264, %p265
    %p268 = scmp.ne.s32.totalorder %s251, %s267
    %p269 = scmp.eq.s32.totalorder %s33, 0
    %p270 = por %p268, %p269
    %s271 = ssub.s32 %s35, %s42
    %p272 = scmp.eq.s32.totalorder %s271, 0
    %s274 = sadd.s32 %s273, 1
    %s275 = scalar_select %p272, %s273, %s274
    %p278 = pneg %p272
    %p279 = scmp.eq.s32.totalorder %s27, 3
    %p280 = por %p278, %p279
    %p281 = scmp.ne.s32.totalorder %s273, %s276
    %p282 = scmp.eq.s32.totalorder %s27, 0
    %p283 = por %p281, %p282
    %p284 = scmp.ne.s32.totalorder %s273, %s276
    %p285 = scmp.eq.s32.totalorder %s32, 3
    %p286 = por %p284, %p285
    %p287 = scmp.ne.s32.totalorder %s276, %s277
    %p288 = scmp.eq.s32.totalorder %s32, 0
    %p289 = por %p287, %p288
    %p290 = scmp.ne.s32.totalorder %s276, %s277
    %p291 = scmp.eq.s32.totalorder %s33, 3
    %p292 = por %p290, %p291
    %p294 = scmp.ne.s32.totalorder %s277, %s293
    %p295 = scmp.eq.s32.totalorder %s33, 0
    %p296 = por %p294, %p295
    %s297 = ssub.s32 %s35, %s42
    %p298 = scmp.eq.s32.totalorder %s297, 0
    %s300 = sadd.s32 %s299, 1
    %s301 = scalar_select %p298, %s299, %s300
    %p304 = pneg %p298
    %p305 = scmp.eq.s32.totalorder %s27, 3
    %p306 = por %p304, %p305
    %p307 = scmp.ne.s32.totalorder %s299, %s302
    %p308 = scmp.eq.s32.totalorder %s27, 0
    %p309 = por %p307, %p308
    %p310 = scmp.ne.s32.totalorder %s299, %s302
    %p311 = scmp.eq.s32.totalorder %s32, 3
    %p312 = por %p310, %p311
    %p313 = scmp.ne.s32.totalorder %s302, %s303
    %p314 = scmp.eq.s32.totalorder %s32, 0
    %p315 = por %p313, %p314
    %p316 = scmp.ne.s32.totalorder %s302, %s303
    %p317 = scmp.eq.s32.totalorder %s33, 3
    %p318 = por %p316, %p317
    %p320 = scmp.ne.s32.totalorder %s303, %s319
    %p321 = scmp.eq.s32.totalorder %s33, 0
    %p322 = por %p320, %p321
    %s323 = ssub.s32 %s35, %s42
    %p324 = scmp.eq.s32.totalorder %s323, 0
    %s326 = sadd.s32 %s325, 1
    %s327 = scalar_select %p324, %s325, %s326
    %p330 = pneg %p324
    %p331 = scmp.eq.s32.totalorder %s27, 3
    %p332 = por %p330, %p331
    %p333 = scmp.ne.s32.totalorder %s325, %s328
    %p334 = scmp.eq.s32.totalorder %s27, 0
    %p335 = por %p333, %p334
    %p336 = scmp.ne.s32.totalorder %s325, %s328
    %p337 = scmp.eq.s32.totalorder %s32, 3
    %p338 = por %p336, %p337
    %p339 = scmp.ne.s32.totalorder %s328, %s329
    %p340 = scmp.eq.s32.totalorder %s32, 0
    %p341 = por %p339, %p340
    %p342 = scmp.ne.s32.totalorder %s328, %s329
    %p343 = scmp.eq.s32.totalorder %s33, 3
    %p344 = por %p342, %p343
    %p346 = scmp.ne.s32.totalorder %s329, %s345
    %p347 = scmp.eq.s32.totalorder %s33, 0
    %p348 = por %p346, %p347
    %s349 = ssub.s32 %s35, %s42
    %p350 = scmp.eq.s32.totalorder %s349, 0
    %s352 = sadd.s32 %s351, 1
    %s353 = scalar_select %p350, %s351, %s352
    %p356 = pneg %p350
    %p357 = scmp.eq.s32.totalorder %s27, 3
    %p358 = por %p356, %p357
    %p359 = scmp.ne.s32.totalorder %s351, %s354
    %p360 = scmp.eq.s32.totalorder %s27, 0
    %p361 = por %p359, %p360
    %p362 = scmp.ne.s32.totalorder %s351, %s354
    %p363 = scmp.eq.s32.totalorder %s32, 3
    %p364 = por %p362, %p363
    %p365 = scmp.ne.s32.totalorder %s354, %s355
    %p366 = scmp.eq.s32.totalorder %s32, 0
    %p367 = por %p365, %p366
    %p368 = scmp.ne.s32.totalorder %s354, %s355
    %p369 = scmp.eq.s32.totalorder %s33, 3
    %p370 = por %p368, %p369
    %p372 = scmp.ne.s32.totalorder %s355, %s371
    %p373 = scmp.eq.s32.totalorder %s33, 0
    %p374 = por %p372, %p373
    %s375 = ssub.s32 %s35, %s42
    %p376 = scmp.eq.s32.totalorder %s375, 0
    %s378 = sadd.s32 %s377, 1
    %s379 = scalar_select %p376, %s377, %s378
    %p382 = pneg %p376
    %p383 = scmp.eq.s32.totalorder %s27, 3
    %p384 = por %p382, %p383
    %p385 = scmp.ne.s32.totalorder %s377, %s380
    %p386 = scmp.eq.s32.totalorder %s27, 0
    %p387 = por %p385, %p386
    %p388 = scmp.ne.s32.totalorder %s377, %s380
    %p389 = scmp.eq.s32.totalorder %s32, 3
    %p390 = por %p388, %p389
    %p391 = scmp.ne.s32.totalorder %s380, %s381
    %p392 = scmp.eq.s32.totalorder %s32, 0
    %p393 = por %p391, %p392
    %p394 = scmp.ne.s32.totalorder %s380, %s381
    %p395 = scmp.eq.s32.totalorder %s33, 3
    %p396 = por %p394, %p395
    %p398 = scmp.ne.s32.totalorder %s381, %s397
    %p399 = scmp.eq.s32.totalorder %s33, 0
    %p400 = por %p398, %p399
    %s401 = ssub.s32 %s35, %s42
    %p402 = scmp.eq.s32.totalorder %s401, 0
    %s404 = sadd.s32 %s403, 1
    %s405 = scalar_select %p402, %s403, %s404
    %p408 = pneg %p402
    %p409 = scmp.eq.s32.totalorder %s27, 3
    %p410 = por %p408, %p409
    %p411 = scmp.ne.s32.totalorder %s403, %s406
    %p412 = scmp.eq.s32.totalorder %s27, 0
    %p413 = por %p411, %p412
    %p414 = scmp.ne.s32.totalorder %s403, %s406
    %p415 = scmp.eq.s32.totalorder %s32, 3
    %p416 = por %p414, %p415
    %p417 = scmp.ne.s32.totalorder %s406, %s407
    %p418 = scmp.eq.s32.totalorder %s32, 0
    %p419 = por %p417, %p418
    %p420 = scmp.ne.s32.totalorder %s406, %s407
    %p421 = scmp.eq.s32.totalorder %s33, 3
    %p422 = por %p420, %p421
    %p424 = scmp.ne.s32.totalorder %s407, %s423
    %p425 = scmp.eq.s32.totalorder %s33, 0
    %p426 = por %p424, %p425
    %s427 = ssub.s32 %s35, %s42
    %p428 = scmp.eq.s32.totalorder %s427, 0
    %s430 = sadd.s32 %s429, 1
    %s431 = scalar_select %p428, %s429, %s430
    %p434 = pneg %p428
    %p435 = scmp.eq.s32.totalorder %s27, 3
    %p436 = por %p434, %p435
    %p437 = scmp.ne.s32.totalorder %s429, %s432
    %p438 = scmp.eq.s32.totalorder %s27, 0
    %p439 = por %p437, %p438
    %p440 = scmp.ne.s32.totalorder %s429, %s432
    %p441 = scmp.eq.s32.totalorder %s32, 3
    %p442 = por %p440, %p441
    %p443 = scmp.ne.s32.totalorder %s432, %s433
    %p444 = scmp.eq.s32.totalorder %s32, 0
    %p445 = por %p443, %p444
    %p446 = scmp.ne.s32.totalorder %s432, %s433
    %p447 = scmp.eq.s32.totalorder %s33, 3
    %p448 = por %p446, %p447
    %p450 = scmp.ne.s32.totalorder %s433, %s449
    %p451 = scmp.eq.s32.totalorder %s33, 0
    %p452 = por %p450, %p451
    %s453 = ssub.s32 %s35, %s42
    %p454 = scmp.eq.s32.totalorder %s453, 0
    %s456 = sadd.s32 %s455, 1
    %s457 = scalar_select %p454, %s455, %s456
    %p460 = pneg %p454
    %p461 = scmp.eq.s32.totalorder %s27, 3
    %p462 = por %p460, %p461
    %p463 = scmp.ne.s32.totalorder %s455, %s458
    %p464 = scmp.eq.s32.totalorder %s27, 0
    %p465 = por %p463, %p464
    %p466 = scmp.ne.s32.totalorder %s455, %s458
    %p467 = scmp.eq.s32.totalorder %s32, 3
    %p468 = por %p466, %p467
    %p469 = scmp.ne.s32.totalorder %s458, %s459
    %p470 = scmp.eq.s32.totalorder %s32, 0
    %p471 = por %p469, %p470
    %p472 = scmp.ne.s32.totalorder %s458, %s459
    %p473 = scmp.eq.s32.totalorder %s33, 3
    %p474 = por %p472, %p473
    %p476 = scmp.ne.s32.totalorder %s459, %s475
    %p477 = scmp.eq.s32.totalorder %s33, 0
    %p478 = por %p476, %p477
    %s479 = ssub.s32 %s35, %s42
    %p480 = scmp.eq.s32.totalorder %s479, 0
    %s482 = sadd.s32 %s481, 1
    %s483 = scalar_select %p480, %s481, %s482
    %p486 = pneg %p480
    %p487 = scmp.eq.s32.totalorder %s27, 3
    %p488 = por %p486, %p487
    %p489 = scmp.ne.s32.totalorder %s481, %s484
    %p490 = scmp.eq.s32.totalorder %s27, 0
    %p491 = por %p489, %p490
    %p492 = scmp.ne.s32.totalorder %s481, %s484
    %p493 = scmp.eq.s32.totalorder %s32, 3
    %p494 = por %p492, %p493
    %p495 = scmp.ne.s32.totalorder %s484, %s485
    %p496 = scmp.eq.s32.totalorder %s32, 0
    %p497 = por %p495, %p496
    %p498 = scmp.ne.s32.totalorder %s484, %s485
    %p499 = scmp.eq.s32.totalorder %s33, 3
    %p500 = por %p498, %p499
    %p502 = scmp.ne.s32.totalorder %s485, %s501
    %p503 = scmp.eq.s32.totalorder %s33, 0
    %p504 = por %p502, %p503
    %s505 = ssub.s32 %s35, %s42
    %p506 = scmp.eq.s32.totalorder %s505, 0
    %s508 = sadd.s32 %s507, 1
    %s509 = scalar_select %p506, %s507, %s508
    %p512 = pneg %p506
    %p513 = scmp.eq.s32.totalorder %s27, 3
    %p514 = por %p512, %p513
    %p515 = scmp.ne.s32.totalorder %s507, %s510
    %p516 = scmp.eq.s32.totalorder %s27, 0
    %p517 = por %p515, %p516
    %p518 = scmp.ne.s32.totalorder %s507, %s510
    %p519 = scmp.eq.s32.totalorder %s32, 3
    %p520 = por %p518, %p519
    %p521 = scmp.ne.s32.totalorder %s510, %s511
    %p522 = scmp.eq.s32.totalorder %s32, 0
    %p523 = por %p521, %p522
    %p524 = scmp.ne.s32.totalorder %s510, %s511
    %p525 = scmp.eq.s32.totalorder %s33, 3
    %p526 = por %p524, %p525
    %p528 = scmp.ne.s32.totalorder %s511, %s527
    %p529 = scmp.eq.s32.totalorder %s33, 0
    %p530 = por %p528, %p529
    %s532 = sadd.s32 %s531, 1
    %p535 = scmp.eq.s32.totalorder %s27, 3
    %p536 = scmp.ne.s32.totalorder %s531, %s533
    %p537 = scmp.eq.s32.totalorder %s27, 0
    %p538 = por %p536, %p537
    %p539 = scmp.ne.s32.totalorder %s531, %s533
    %p540 = scmp.eq.s32.totalorder %s32, 3
    %p541 = por %p539, %p540
    %p542 = scmp.ne.s32.totalorder %s533, %s534
    %p543 = scmp.eq.s32.totalorder %s32, 0
    %p544 = por %p542, %p543
    %p545 = scmp.ne.s32.totalorder %s533, %s534
    %p546 = scmp.eq.s32.totalorder %s33, 3
    %p547 = por %p545, %p546
    %p549 = scmp.ne.s32.totalorder %s534, %s548
    %p550 = scmp.eq.s32.totalorder %s33, 0
    %p551 = por %p549, %p550
    %s553 = sadd.s32 %s552, 1
    %p556 = scmp.eq.s32.totalorder %s27, 3
    %p557 = scmp.ne.s32.totalorder %s552, %s554
    %p558 = scmp.eq.s32.totalorder %s27, 0
    %p559 = por %p557, %p558
    %p560 = scmp.ne.s32.totalorder %s552, %s554
    %p561 = scmp.eq.s32.totalorder %s32, 3
    %p562 = por %p560, %p561
    %p563 = scmp.ne.s32.totalorder %s554, %s555
    %p564 = scmp.eq.s32.totalorder %s32, 0
    %p565 = por %p563, %p564
    %p566 = scmp.ne.s32.totalorder %s554, %s555
    %p567 = scmp.eq.s32.totalorder %s33, 3
    %p568 = por %p566, %p567
    %p570 = scmp.ne.s32.totalorder %s555, %s569
    %p571 = scmp.eq.s32.totalorder %s33, 0
    %p572 = por %p570, %p571
    %s573 = ssub.s32 %s34, %s46
    %p574 = scmp.eq.s32.totalorder %s573, 0
    %s576 = sadd.s32 %s575, 1
    %s577 = scalar_select %p574, %s575, %s576
    %p580 = pneg %p574
    %p581 = scmp.eq.s32.totalorder %s27, 3
    %p582 = por %p580, %p581
    %p583 = scmp.ne.s32.totalorder %s575, %s578
    %p584 = scmp.eq.s32.totalorder %s27, 0
    %p585 = por %p583, %p584
    %p586 = scmp.ne.s32.totalorder %s575, %s578
    %p587 = scmp.eq.s32.totalorder %s32, 3
    %p588 = por %p586, %p587
    %p589 = scmp.ne.s32.totalorder %s578, %s579
    %p590 = scmp.eq.s32.totalorder %s32, 0
    %p591 = por %p589, %p590
    %p592 = scmp.ne.s32.totalorder %s578, %s579
    %p593 = scmp.eq.s32.totalorder %s33, 3
    %p594 = por %p592, %p593
    %p596 = scmp.ne.s32.totalorder %s579, %s595
    %p597 = scmp.eq.s32.totalorder %s33, 0
    %p598 = por %p596, %p597
    %p599 = scmp.le.s32.totalorder 1, %s27
    %p600 = scmp.lt.s32.totalorder %s27, 5
    %p601 = pnand %p599, %p600
    %p602 = pneg %p601
    // Predicated region
    $region9: #{_lambda_.3} parent=5 // pred_check
      _
    $region10: #{_lambda_.3} parent=5 // pred_check_branch
      %604 = sbr.rel (%p601) target = $region12
    $region11: #{_lambda_.3} parent=5 // pred_region
      %s605 = ssub.s32 %s27, 1
      // Predicated region
      $region13: #{_lambda_.3} parent=11 // pred_check
        %p606 = pneg %p86
      $region14: #{_lambda_.3} parent=11 // pred_check_branch
        %608 = sbr.rel (%p606) target = $region16
      $region15: #{_lambda_.3} parent=11 // pred_region
        _
      $region16: #{_lambda_.3} parent=11 // pred_fallthru
        _
      // Predicated region
      $region17: #{_lambda_.3} parent=11 // pred_check
        %p609 = pneg %p107
      $region18: #{_lambda_.3} parent=11 // pred_check_branch
        %611 = sbr.rel (%p609) target = $region20
      $region19: #{_lambda_.3} parent=11 // pred_region
        _
      $region20: #{_lambda_.3} parent=11 // pred_fallthru
        _
      // Predicated region
      $region21: #{_lambda_.3} parent=11 // pred_check
        %p612 = pneg %p544
      $region22: #{_lambda_.3} parent=11 // pred_check_branch
        %614 = sbr.rel (%p612) target = $region24
      $region23: #{_lambda_.3} parent=11 // pred_region
        _
      $region24: #{_lambda_.3} parent=11 // pred_fallthru
        _
      // Predicated region
      $region25: #{_lambda_.3} parent=11 // pred_check
        %p615 = pneg %p565
      $region26: #{_lambda_.3} parent=11 // pred_check_branch
        %617 = sbr.rel (%p615) target = $region28
      $region27: #{_lambda_.3} parent=11 // pred_region
        _
      $region28: #{_lambda_.3} parent=11 // pred_fallthru
        _
    $region12: #{_lambda_.3} parent=5 // pred_fallthru
      _
    %p618 = scmp.lt.s32.totalorder %s27, 4
    // Predicated region
    $region29: #{_lambda_.3} parent=5 // pred_check
      %p619 = pneg %p618
    $region30: #{_lambda_.3} parent=5 // pred_check_branch
      %621 = sbr.rel (%p619) target = $region32
    $region31: #{_lambda_.3} parent=5 // pred_region
      // Predicated region
      $region33: #{_lambda_.3} parent=31 // pred_check
        %p622 = pneg %p59
      $region34: #{_lambda_.3} parent=31 // pred_check_branch
        %624 = sbr.rel (%p622) target = $region36
      $region35: #{_lambda_.3} parent=31 // pred_region
        %p625 = scmp.lt.s32.totalorder %s34, 1
        %s626 = scalar_select %p625, %s34, 1
        %s627 = smul.addr %s626, 2
        %s628 = smul.addr %s627, 8
        %s629 = scalar_lea.vmem %s0, %s628
      $region36: #{_lambda_.3} parent=31 // pred_fallthru
        _
      // Predicated region
      $region37: #{_lambda_.3} parent=31 // pred_check
        %p630 = pneg %p127
      $region38: #{_lambda_.3} parent=31 // pred_check_branch
        %632 = sbr.rel (%p630) target = $region40
      $region39: #{_lambda_.3} parent=31 // pred_region
        %p633 = scmp.lt.s32.totalorder %s35, 1
        %s634 = scalar_select %p633, %s35, 1
        %s635 = scalar_lea.vmem %s3, %s634
      $region40: #{_lambda_.3} parent=31 // pred_fallthru
        _
      // Predicated region
      $region41: #{_lambda_.3} parent=31 // pred_check
        %p636 = pneg %p153
      $region42: #{_lambda_.3} parent=31 // pred_check_branch
        %638 = sbr.rel (%p636) target = $region44
      $region43: #{_lambda_.3} parent=31 // pred_region
        %p639 = scmp.lt.s32.totalorder %s35, 1
        %s640 = scalar_select %p639, %s35, 1
        %s641 = scalar_lea.vmem %s4, %s640
      $region44: #{_lambda_.3} parent=31 // pred_fallthru
        _
      // Predicated region
      $region45: #{_lambda_.3} parent=31 // pred_check
        %p642 = pneg %p179
      $region46: #{_lambda_.3} parent=31 // pred_check_branch
        %644 = sbr.rel (%p642) target = $region48
      $region47: #{_lambda_.3} parent=31 // pred_region
        %p645 = scmp.lt.s32.totalorder %s35, 1
        %s646 = scalar_select %p645, %s35, 1
        %s647 = smul.addr %s646, 4
        %s648 = smul.addr %s647, 8
        %s649 = scalar_lea.vmem %s5, %s648
      $region48: #{_lambda_.3} parent=31 // pred_fallthru
        _
      // Predicated region
      $region49: #{_lambda_.3} parent=31 // pred_check
        %p650 = pneg %p205
      $region50: #{_lambda_.3} parent=31 // pred_check_branch
        %652 = sbr.rel (%p650) target = $region52
      $region51: #{_lambda_.3} parent=31 // pred_region
        %p653 = scmp.lt.s32.totalorder %s35, 1
        %s654 = scalar_select %p653, %s35, 1
        %s655 = scalar_lea.vmem %s6, %s654
      $region52: #{_lambda_.3} parent=31 // pred_fallthru
        _
      // Predicated region
      $region53: #{_lambda_.3} parent=31 // pred_check
        %p656 = pneg %p231
      $region54: #{_lambda_.3} parent=31 // pred_check_branch
        %658 = sbr.rel (%p656) target = $region56
      $region55: #{_lambda_.3} parent=31 // pred_region
        %p659 = scmp.lt.s32.totalorder %s35, 1
        %s660 = scalar_select %p659, %s35, 1
        %s661 = smul.addr %s660, 4
        %s662 = smul.addr %s661, 8
        %s663 = scalar_lea.vmem %s7, %s662
      $region56: #{_lambda_.3} parent=31 // pred_fallthru
        _
      // Predicated region
      $region57: #{_lambda_.3} parent=31 // pred_check
        %p664 = pneg %p257
      $region58: #{_lambda_.3} parent=31 // pred_check_branch
        %666 = sbr.rel (%p664) target = $region60
      $region59: #{_lambda_.3} parent=31 // pred_region
        %p667 = scmp.lt.s32.totalorder %s35, 1
        %s668 = scalar_select %p667, %s35, 1
        %s669 = scalar_lea.vmem %s8, %s668
      $region60: #{_lambda_.3} parent=31 // pred_fallthru
        _
      // Predicated region
      $region61: #{_lambda_.3} parent=31 // pred_check
        %p670 = pneg %p283
      $region62: #{_lambda_.3} parent=31 // pred_check_branch
        %672 = sbr.rel (%p670) target = $region64
      $region63: #{_lambda_.3} parent=31 // pred_region
        %p673 = scmp.lt.s32.totalorder %s35, 1
        %s674 = scalar_select %p673, %s35, 1
        %s675 = smul.addr %s674, 4
        %s676 = smul.addr %s675, 8
        %s677 = scalar_lea.vmem %s9, %s676
      $region64: #{_lambda_.3} parent=31 // pred_fallthru
        _
      // Predicated region
      $region65: #{_lambda_.3} parent=31 // pred_check
        %p678 = pneg %p309
      $region66: #{_lambda_.3} parent=31 // pred_check_branch
        %680 = sbr.rel (%p678) target = $region68
      $region67: #{_lambda_.3} parent=31 // pred_region
        %p681 = scmp.lt.s32.totalorder %s35, 1
        %s682 = scalar_select %p681, %s35, 1
        %s683 = scalar_lea.vmem %s10, %s682
      $region68: #{_lambda_.3} parent=31 // pred_fallthru
        _
      // Predicated region
      $region69: #{_lambda_.3} parent=31 // pred_check
        %p684 = pneg %p335
      $region70: #{_lambda_.3} parent=31 // pred_check_branch
        %686 = sbr.rel (%p684) target = $region72
      $region71: #{_lambda_.3} parent=31 // pred_region
        %p687 = scmp.lt.s32.totalorder %s35, 1
        %s688 = scalar_select %p687, %s35, 1
        %s689 = smul.addr %s688, 4
        %s690 = smul.addr %s689, 8
        %s691 = scalar_lea.vmem %s11, %s690
      $region72: #{_lambda_.3} parent=31 // pred_fallthru
        _
      // Predicated region
      $region73: #{_lambda_.3} parent=31 // pred_check
        %p692 = pneg %p361
      $region74: #{_lambda_.3} parent=31 // pred_check_branch
        %694 = sbr.rel (%p692) target = $region76
      $region75: #{_lambda_.3} parent=31 // pred_region
        %p695 = scmp.lt.s32.totalorder %s35, 1
        %s696 = scalar_select %p695, %s35, 1
        %s697 = scalar_lea.vmem %s12, %s696
      $region76: #{_lambda_.3} parent=31 // pred_fallthru
        _
      // Predicated region
      $region77: #{_lambda_.3} parent=31 // pred_check
        %p698 = pneg %p387
      $region78: #{_lambda_.3} parent=31 // pred_check_branch
        %700 = sbr.rel (%p698) target = $region80
      $region79: #{_lambda_.3} parent=31 // pred_region
        %p701 = scmp.lt.s32.totalorder %s35, 1
        %s702 = scalar_select %p701, %s35, 1
        %s703 = scalar_lea.vmem %s13, %s702
      $region80: #{_lambda_.3} parent=31 // pred_fallthru
        _
      // Predicated region
      $region81: #{_lambda_.3} parent=31 // pred_check
        %p704 = pneg %p413
      $region82: #{_lambda_.3} parent=31 // pred_check_branch
        %706 = sbr.rel (%p704) target = $region84
      $region83: #{_lambda_.3} parent=31 // pred_region
        %p707 = scmp.lt.s32.totalorder %s35, 1
        %s708 = scalar_select %p707, %s35, 1
        %s709 = scalar_lea.vmem %s14, %s708
      $region84: #{_lambda_.3} parent=31 // pred_fallthru
        _
      // Predicated region
      $region85: #{_lambda_.3} parent=31 // pred_check
        %p710 = pneg %p439
      $region86: #{_lambda_.3} parent=31 // pred_check_branch
        %712 = sbr.rel (%p710) target = $region88
      $region87: #{_lambda_.3} parent=31 // pred_region
        %p713 = scmp.lt.s32.totalorder %s35, 1
        %s714 = scalar_select %p713, %s35, 1
        %s715 = smul.addr %s714, 4
        %s716 = smul.addr %s715, 8
        %s717 = scalar_lea.vmem %s15, %s716
      $region88: #{_lambda_.3} parent=31 // pred_fallthru
        _
      // Predicated region
      $region89: #{_lambda_.3} parent=31 // pred_check
        %p718 = pneg %p465
      $region90: #{_lambda_.3} parent=31 // pred_check_branch
        %720 = sbr.rel (%p718) target = $region92
      $region91: #{_lambda_.3} parent=31 // pred_region
        %p721 = scmp.lt.s32.totalorder %s35, 1
        %s722 = scalar_select %p721, %s35, 1
        %s723 = scalar_lea.vmem %s16, %s722
      $region92: #{_lambda_.3} parent=31 // pred_fallthru
        _
      // Predicated region
      $region93: #{_lambda_.3} parent=31 // pred_check
        %p724 = pneg %p491
      $region94: #{_lambda_.3} parent=31 // pred_check_branch
        %726 = sbr.rel (%p724) target = $region96
      $region95: #{_lambda_.3} parent=31 // pred_region
        %p727 = scmp.lt.s32.totalorder %s35, 1
        %s728 = scalar_select %p727, %s35, 1
        %s729 = smul.addr %s728, 16
        %s730 = smul.addr %s729, 8
        %s731 = scalar_lea.vmem %s17, %s730
      $region96: #{_lambda_.3} parent=31 // pred_fallthru
        _
      // Predicated region
      $region97: #{_lambda_.3} parent=31 // pred_check
        %p732 = pneg %p517
      $region98: #{_lambda_.3} parent=31 // pred_check_branch
        %734 = sbr.rel (%p732) target = $region100
      $region99: #{_lambda_.3} parent=31 // pred_region
        %p735 = scmp.lt.s32.totalorder %s35, 1
        %s736 = scalar_select %p735, %s35, 1
        %s737 = scalar_lea.vmem %s18, %s736
      $region100: #{_lambda_.3} parent=31 // pred_fallthru
        _
    $region32: #{_lambda_.3} parent=5 // pred_fallthru
      _
    %p738 = scmp.le.s32.totalorder 1, %s27
    %p739 = scmp.lt.s32.totalorder %s27, 5
    %p740 = pnand %p738, %p739
    %p741 = pneg %p740
    // Predicated region
    $region101: #{_lambda_.3} parent=5 // pred_check
      _
    $region102: #{_lambda_.3} parent=5 // pred_check_branch
      %743 = sbr.rel (%p740) target = $region104
    $region103: #{_lambda_.3} parent=5 // pred_region
      %s744 = ssub.s32 %s27, 1
      %p745 = scmp.lt.s32.totalorder %s36, 1
      %s746 = scalar_select %p745, %s36, 1
      %s747 = smul.addr %s746, 2
      %s748 = smul.addr %s747, 8
      %s749 = scalar_lea.vmem %s0, %s748
      %p750 = pneg %p65
      %p751 = pneg %p62
      %p752 = pneg %p86
      %p753 = pneg %p83
      %p754 = pneg %p107
      %p755 = pneg %p104
      %p756 = scmp.lt.s32.totalorder %s37, 1
      %s757 = scalar_select %p756, %s37, 1
      %s758 = scalar_lea.vmem %s3, %s757
      %p759 = pneg %p133
      %p760 = pneg %p130
      %p761 = scmp.lt.s32.totalorder %s37, 1
      %s762 = scalar_select %p761, %s37, 1
      %s763 = scalar_lea.vmem %s4, %s762
      %p764 = pneg %p159
      %p765 = pneg %p156
      %p766 = scmp.lt.s32.totalorder %s37, 1
      %s767 = scalar_select %p766, %s37, 1
      %s768 = smul.addr %s767, 4
      %s769 = smul.addr %s768, 8
      %s770 = scalar_lea.vmem %s5, %s769
      %p771 = pneg %p185
      %p772 = pneg %p182
      %p773 = scmp.lt.s32.totalorder %s37, 1
      %s774 = scalar_select %p773, %s37, 1
      %s775 = scalar_lea.vmem %s6, %s774
      %p776 = pneg %p211
      %p777 = pneg %p208
      %p778 = scmp.lt.s32.totalorder %s37, 1
      %s779 = scalar_select %p778, %s37, 1
      %s780 = smul.addr %s779, 4
      %s781 = smul.addr %s780, 8
      %s782 = scalar_lea.vmem %s7, %s781
      %p783 = pneg %p237
      %p784 = pneg %p234
      %p785 = scmp.lt.s32.totalorder %s37, 1
      %s786 = scalar_select %p785, %s37, 1
      %s787 = scalar_lea.vmem %s8, %s786
      %p788 = pneg %p263
      %p789 = pneg %p260
      %p790 = scmp.lt.s32.totalorder %s37, 1
      %s791 = scalar_select %p790, %s37, 1
      %s792 = smul.addr %s791, 4
      %s793 = smul.addr %s792, 8
      %s794 = scalar_lea.vmem %s9, %s793
      %p795 = pneg %p289
      %p796 = pneg %p286
      %p797 = scmp.lt.s32.totalorder %s37, 1
      %s798 = scalar_select %p797, %s37, 1
      %s799 = scalar_lea.vmem %s10, %s798
      %p800 = pneg %p315
      %p801 = pneg %p312
      %p802 = scmp.lt.s32.totalorder %s37, 1
      %s803 = scalar_select %p802, %s37, 1
      %s804 = smul.addr %s803, 4
      %s805 = smul.addr %s804, 8
      %s806 = scalar_lea.vmem %s11, %s805
      %p807 = pneg %p341
      %p808 = pneg %p338
      %p809 = scmp.lt.s32.totalorder %s37, 1
      %s810 = scalar_select %p809, %s37, 1
      %s811 = scalar_lea.vmem %s12, %s810
      %p812 = pneg %p367
      %p813 = pneg %p364
      %p814 = scmp.lt.s32.totalorder %s37, 1
      %s815 = scalar_select %p814, %s37, 1
      %s816 = scalar_lea.vmem %s13, %s815
      %p817 = pneg %p393
      %p818 = pneg %p390
      %p819 = scmp.lt.s32.totalorder %s37, 1
      %s820 = scalar_select %p819, %s37, 1
      %s821 = scalar_lea.vmem %s14, %s820
      %p822 = pneg %p419
      %p823 = pneg %p416
      %p824 = scmp.lt.s32.totalorder %s37, 1
      %s825 = scalar_select %p824, %s37, 1
      %s826 = smul.addr %s825, 4
      %s827 = smul.addr %s826, 8
      %s828 = scalar_lea.vmem %s15, %s827
      %p829 = pneg %p445
      %p830 = pneg %p442
      %p831 = scmp.lt.s32.totalorder %s37, 1
      %s832 = scalar_select %p831, %s37, 1
      %s833 = scalar_lea.vmem %s16, %s832
      %p834 = pneg %p471
      %p835 = pneg %p468
      %p836 = scmp.lt.s32.totalorder %s37, 1
      %s837 = scalar_select %p836, %s37, 1
      %s838 = smul.addr %s837, 16
      %s839 = smul.addr %s838, 8
      %s840 = scalar_lea.vmem %s17, %s839
      %p841 = pneg %p497
      %p842 = pneg %p494
      %p843 = scmp.lt.s32.totalorder %s37, 1
      %s844 = scalar_select %p843, %s37, 1
      %s845 = scalar_lea.vmem %s18, %s844
      %p846 = pneg %p523
      %p847 = pneg %p520
      %p848 = pneg %p544
      %p849 = pneg %p541
      %p850 = pneg %p565
      %p851 = pneg %p562
      %p852 = pneg %p591
      %p853 = pneg %p588
      %p854 = scmp.lt.s32.totalorder %s36, 1
      %s855 = scalar_select %p854, %s36, 1
      %s856 = smul.addr %s855, 2
      %s857 = smul.addr %s856, 8
      %s858 = scalar_lea.vmem %s21, %s857
      %p859 = scmp.lt.s32.totalorder %s36, 1
      %s860 = scalar_select %p859, %s36, 1
      %s861 = smul.addr %s860, 2
      %s862 = smul.addr %s861, 8
      %s863 = scalar_lea.vmem %s0, %s862
      %p864 = scmp.lt.s32.totalorder %s37, 1
      %s865 = scalar_select %p864, %s37, 1
      %s866 = scalar_lea.vmem %s3, %s865
      %p867 = scmp.lt.s32.totalorder %s37, 1
      %s868 = scalar_select %p867, %s37, 1
      %s869 = scalar_lea.vmem %s4, %s868
      %p870 = scmp.lt.s32.totalorder %s37, 1
      %s871 = scalar_select %p870, %s37, 1
      %s872 = smul.addr %s871, 4
      %s873 = smul.addr %s872, 8
      %s874 = scalar_lea.vmem %s5, %s873
      %p875 = scmp.lt.s32.totalorder %s37, 1
      %s876 = scalar_select %p875, %s37, 1
      %s877 = scalar_lea.vmem %s6, %s876
      %p878 = scmp.lt.s32.totalorder %s37, 1
      %s879 = scalar_select %p878, %s37, 1
      %s880 = smul.addr %s879, 4
      %s881 = smul.addr %s880, 8
      %s882 = scalar_lea.vmem %s7, %s881
      %p883 = scmp.lt.s32.totalorder %s37, 1
      %s884 = scalar_select %p883, %s37, 1
      %s885 = scalar_lea.vmem %s8, %s884
      %p886 = scmp.lt.s32.totalorder %s37, 1
      %s887 = scalar_select %p886, %s37, 1
      %s888 = smul.addr %s887, 4
      %s889 = smul.addr %s888, 8
      %s890 = scalar_lea.vmem %s9, %s889
      %p891 = scmp.lt.s32.totalorder %s37, 1
      %s892 = scalar_select %p891, %s37, 1
      %s893 = scalar_lea.vmem %s10, %s892
      %p894 = scmp.lt.s32.totalorder %s37, 1
      %s895 = scalar_select %p894, %s37, 1
      %s896 = smul.addr %s895, 4
      %s897 = smul.addr %s896, 8
      %s898 = scalar_lea.vmem %s11, %s897
      %p899 = scmp.lt.s32.totalorder %s37, 1
      %s900 = scalar_select %p899, %s37, 1
      %s901 = scalar_lea.vmem %s12, %s900
      %p902 = scmp.lt.s32.totalorder %s37, 1
      %s903 = scalar_select %p902, %s37, 1
      %s904 = scalar_lea.vmem %s13, %s903
      %p905 = scmp.lt.s32.totalorder %s37, 1
      %s906 = scalar_select %p905, %s37, 1
      %s907 = scalar_lea.vmem %s14, %s906
      %p908 = scmp.lt.s32.totalorder %s37, 1
      %s909 = scalar_select %p908, %s37, 1
      %s910 = smul.addr %s909, 4
      %s911 = smul.addr %s910, 8
      %s912 = scalar_lea.vmem %s15, %s911
      %p913 = scmp.lt.s32.totalorder %s37, 1
      %s914 = scalar_select %p913, %s37, 1
      %s915 = scalar_lea.vmem %s16, %s914
      %p916 = scmp.lt.s32.totalorder %s37, 1
      %s917 = scalar_select %p916, %s37, 1
      %s918 = smul.addr %s917, 16
      %s919 = smul.addr %s918, 8
      %s920 = scalar_lea.vmem %s17, %s919
      %p921 = scmp.lt.s32.totalorder %s37, 1
      %s922 = scalar_select %p921, %s37, 1
      %s923 = scalar_lea.vmem %s18, %s922
      %p924 = scmp.lt.s32.totalorder %s36, 1
      %s925 = scalar_select %p924, %s36, 1
      %s926 = smul.addr %s925, 2
      %s927 = smul.addr %s926, 8
      %s928 = scalar_lea.vmem %s21, %s927
      %p929 = scmp.eq.s32.totalorder %s37, 0
      // Predicated region
      $region105: #{_lambda_.3} parent=103 // pred_check
        %p930 = pneg %p929
      $region106: #{_lambda_.3} parent=103 // pred_check_branch
        %932 = sbr.rel (%p930) target = $region108
      $region107: #{_lambda_.3} parent=103 // pred_region
        %v933 = vld [vmem:[%s863] sm:$0xff]
        %v934 = vld [vmem:[%s863 + $0x8] sm:$0x1]
        %v935 = vld [vmem:[%s1] sm:$0xff]
        %v936 = vld [vmem:[%s1 + $0x8] sm:$0xff]
        %v937 = vld [vmem:[%s1 + $0x10] sm:$0xff]
        %v938 = vld [vmem:[%s1 + $0x18] sm:$0xff]
        %v939 = vld [vmem:[%s1 + $0x20] sm:$0xff]
        %v940 = vld [vmem:[%s1 + $0x28] sm:$0xff]
        %v941 = vld [vmem:[%s1 + $0x30] sm:$0xff]
        %v942 = vld [vmem:[%s1 + $0x38] sm:$0xff]
        %v943 = vld [vmem:[%s2] sm:$0xff]
        %v944 = vld [vmem:[%s2 + $0x8] sm:$0x1]
        %vm945 = vcmask 523264
        %v947 = vsel %vm945, %v933, 0
        %v950 = vsel %vm945, %v934, 0
        %952 = vmatprep.subr.mxu0 0.0
        %953 = vmatpush1.msra.mxu0 %v935
        %954 = vmatprep.subr.mxu0 0.0
        %955 = vmatpush1.msra.mxu0 %v936
        %956 = vmatprep.subr.mxu0 0.0
        %957 = vmatpush1.msra.mxu0 %v937
        %958 = vmatprep.subr.mxu0 0.0
        %959 = vmatpush1.msra.mxu0 %v938
        %960 = vmatprep.subr.mxu0 0.0
        %961 = vmatpush1.msra.mxu0 %v939
        %962 = vmatprep.subr.mxu0 0.0
        %963 = vmatpush1.msra.mxu0 %v940
        %964 = vmatprep.subr.mxu0 0.0
        %965 = vmatpush1.msra.mxu0 %v941
        %966 = vmatprep.subr.mxu0 0.0
        %967 = vmatpush1.msra.mxu0 %v942
        %968 = vmatprep.subr.mxu0 0.0
        %969 = vmatpush1.msra.mxu0 0.0
        %970 = vmatprep.subr.mxu0 0.0
        %971 = vmatpush1.msra.mxu0 0.0
        %972 = vmatprep.subr.mxu0 0.0
        %973 = vmatpush1.msra.mxu0 0.0
        %974 = vmatprep.subr.mxu0 0.0
        %975 = vmatpush1.msra.mxu0 0.0
        %976 = vmatprep.subr.mxu0 0.0
        %977 = vmatpush1.msra.mxu0 0.0
        %978 = vmatprep.subr.mxu0 0.0
        %979 = vmatpush1.msra.mxu0 0.0
        %980 = vmatprep.subr.mxu0 0.0
        %981 = vmatpush1.msra.mxu0 0.0
        %982 = vmatprep.subr.mxu0 0.0
        %983 = vmatpush1.msra.mxu0 0.0
        %984 = vmatprep.subr.mxu0 0.0
        %985 = vmatpush1.msra.mxu0 0.0
        %986 = vmatprep.subr.mxu0 0.0
        %987 = vmatpush1.msra.mxu0 0.0
        %988 = vmatprep.subr.mxu0 0.0
        %989 = vmatpush1.msra.mxu0 0.0
        %990 = vmatprep.subr.mxu0 0.0
        %991 = vmatpush1.msra.mxu0 0.0
        %992 = vmatprep.subr.mxu0 0.0
        %993 = vmatpush1.msra.mxu0 0.0
        %994 = vmatprep.subr.mxu0 0.0
        %995 = vmatpush1.msra.mxu0 0.0
        %996 = vmatprep.subr.mxu0 0.0
        %997 = vmatpush1.msra.mxu0 0.0
        %998 = vmatprep.subr.mxu0 0.0
        %999 = vmatpush1.msra.mxu0 0.0
        %1000 = vmatprep.subr.mxu0 0.0
        %1001 = vmatpush1.msra.mxu0 0.0
        %1002 = vmatprep.subr.mxu0 0.0
        %1003 = vmatpush1.msra.mxu0 0.0
        %1004 = vmatprep.subr.mxu0 0.0
        %1005 = vmatpush1.msra.mxu0 0.0
        %1006 = vmatprep.subr.mxu0 0.0
        %1007 = vmatpush1.msra.mxu0 0.0
        %1008 = vmatprep.subr.mxu0 0.0
        %1009 = vmatpush1.msra.mxu0 0.0
        %1010 = vmatprep.subr.mxu0 0.0
        %1011 = vmatpush1.msra.mxu0 0.0
        %1012 = vmatprep.subr.mxu0 0.0
        %1013 = vmatpush1.msra.mxu0 0.0
        %1014 = vmatprep.subr.mxu0 0.0
        %1015 = vmatpush1.msra.mxu0 0.0
        %1016 = vmatprep.mubr.f32.mxu0 0.0
        %1017 = vmatmul.mubr.f32.gmra.mrb[0].mxu0 %v947
        %v1018 = vpop.f32.mrb[0].mxu0
        %v1019 = vadd.f32 %v943, %v1018
        %v1020 = vpop.f32.mrb[0].mxu0
        %1021 = vmatprep.mubr.f32.mxu0 0.0
        %1022 = vmatmul.mubr.f32.gmra.mrb[0].mxu0 %v950
        %v1023 = vpop.f32.mrb[0].mxu0
        %v1024 = vadd.f32 %v944, %v1023
        %v1025 = vpop.f32.mrb[0].mxu0
        %1026 = vdwg.mxu0
        %vm1027 = vcmask 261120
        %1028 = vst.msk [vmem:[#allocation2] sm:$0xff] %vm1027, %v1019
        %vm1029 = vcmask 253952
        %1030 = vst.msk [vmem:[#allocation2 + $0x8] sm:$0x1] %vm1029, %v1024
      $region108: #{_lambda_.3} parent=103 // pred_fallthru
        _
      %v1031 = vld [vmem:[#allocation2] sm:$0xff]
      %v1032 = vld [vmem:[#allocation2 + $0x8] sm:$0x1]
      %v1033 = vld [vmem:[%s866] sm:$0x1]
      %v1034 = vld [vmem:[%s869] sm:$0x1]
      %vm1035 = vcmask 261120
      %v1036 = vsel %vm1035, %v1031, 0.0
      %1037 = vadd.xlane.f32.xlu0 %v1036
      %v1038 = vpop.xlane.xlu0 %1037
      %vm1039 = vcmask 253952
      %v1040 = vsel %vm1039, %v1032, 0.0
      %1041 = vadd.xlane.f32.xlu0 %v1040
      %v1042 = vpop.xlane.xlu0 %1041
      %v1043 = vrcp.pop 32.0
      %v1044 = vmul.f32 %v1038, %v1043
      %v1045 = vmul.f32 %v1042, %v1043
      %v1046 = vsub.f32 %v1031, %v1044
      %v1047 = vsub.f32 %v1032, %v1045
      %v1048 = vmul.f32 %v1046, %v1046
      %v1049 = vmul.f32 %v1047, %v1047
      %v1050 = vsel %vm1035, %v1048, 0.0
      %1051 = vadd.xlane.f32.xlu0 %v1050
      %v1052 = vpop.xlane.xlu0 %1051
      %v1053 = vsel %vm1039, %v1049, 0.0
      %1054 = vadd.xlane.f32.xlu0 %v1053
      %v1055 = vpop.xlane.xlu0 %1054
      %v1056 = vmul.f32 %v1052, %v1043
      %v1057 = vmul.f32 %v1055, %v1043
      %v1058 = vadd.f32 %v1056, 1e-06
      %v1059 = vadd.f32 %v1057, 1e-06
      %v1060 = vrsqrt.pop %v1058
      %v1061 = vrsqrt.pop %v1059
      %v1062 = vmul.f32 %v1046, %v1060
      %v1063 = vmul.f32 %v1047, %v1061
      %v1065 = vlaneseq
      %v1066 = vshrl.u32 %v1065, 7
      %v1067 = vsub.s32 0, %v1066
      %v1068 = vrot.slane %v1033, %v1067
      %v1070 = vmul.f32 %v1062, %v1068
      %v1071 = vmul.f32 %v1063, %v1068
      %v1073 = vlaneseq
      %v1074 = vshrl.u32 %v1073, 7
      %v1075 = vsub.s32 0, %v1074
      %v1076 = vrot.slane %v1034, %v1075
      %v1078 = vadd.f32 %v1070, %v1076
      %v1079 = vadd.f32 %v1071, %v1076
      %v1080 = vld [vmem:[%s874] sm:$0xff]
      %v1081 = vld [vmem:[%s874 + $0x8] sm:$0xff]
      %v1082 = vld [vmem:[%s874 + $0x10] sm:$0xff]
      %v1083 = vld [vmem:[%s874 + $0x18] sm:$0xff]
      %v1084 = vld [vmem:[%s877] sm:$0x1]
      %v1086 = vlaneseq
      %v1087 = vshrl.u32 %v1086, 7
      %v1088 = vsub.s32 0, %v1087
      %v1089 = vrot.slane %v1084, %v1088
      %v1092 = vsel %vm1035, %v1078, 0
      %v1095 = vsel %vm1035, %v1079, 0
      %1097 = vmatprep.subr.mxu0 0.0
      %1098 = vmatpush1.msra.mxu0 %v1080
      %1099 = vmatprep.subr.mxu0 0.0
      %1100 = vmatpush1.msra.mxu0 %v1081
      %1101 = vmatprep.subr.mxu0 0.0
      %1102 = vmatpush1.msra.mxu0 %v1082
      %1103 = vmatprep.subr.mxu0 0.0
      %1104 = vmatpush1.msra.mxu0 %v1083
      %1105 = vmatprep.subr.mxu0 0.0
      %1106 = vmatpush1.msra.mxu0 0.0
      %1107 = vmatprep.subr.mxu0 0.0
      %1108 = vmatpush1.msra.mxu0 0.0
      %1109 = vmatprep.subr.mxu0 0.0
      %1110 = vmatpush1.msra.mxu0 0.0
      %1111 = vmatprep.subr.mxu0 0.0
      %1112 = vmatpush1.msra.mxu0 0.0
      %1113 = vmatprep.subr.mxu0 0.0
      %1114 = vmatpush1.msra.mxu0 0.0
      %1115 = vmatprep.subr.mxu0 0.0
      %1116 = vmatpush1.msra.mxu0 0.0
      %1117 = vmatprep.subr.mxu0 0.0
      %1118 = vmatpush1.msra.mxu0 0.0
      %1119 = vmatprep.subr.mxu0 0.0
      %1120 = vmatpush1.msra.mxu0 0.0
      %1121 = vmatprep.subr.mxu0 0.0
      %1122 = vmatpush1.msra.mxu0 0.0
      %1123 = vmatprep.subr.mxu0 0.0
      %1124 = vmatpush1.msra.mxu0 0.0
      %1125 = vmatprep.subr.mxu0 0.0
      %1126 = vmatpush1.msra.mxu0 0.0
      %1127 = vmatprep.subr.mxu0 0.0
      %1128 = vmatpush1.msra.mxu0 0.0
      %1129 = vmatprep.subr.mxu0 0.0
      %1130 = vmatpush1.msra.mxu0 0.0
      %1131 = vmatprep.subr.mxu0 0.0
      %1132 = vmatpush1.msra.mxu0 0.0
      %1133 = vmatprep.subr.mxu0 0.0
      %1134 = vmatpush1.msra.mxu0 0.0
      %1135 = vmatprep.subr.mxu0 0.0
      %1136 = vmatpush1.msra.mxu0 0.0
      %1137 = vmatprep.subr.mxu0 0.0
      %1138 = vmatpush1.msra.mxu0 0.0
      %1139 = vmatprep.subr.mxu0 0.0
      %1140 = vmatpush1.msra.mxu0 0.0
      %1141 = vmatprep.subr.mxu0 0.0
      %1142 = vmatpush1.msra.mxu0 0.0
      %1143 = vmatprep.subr.mxu0 0.0
      %1144 = vmatpush1.msra.mxu0 0.0
      %1145 = vmatprep.subr.mxu0 0.0
      %1146 = vmatpush1.msra.mxu0 0.0
      %1147 = vmatprep.subr.mxu0 0.0
      %1148 = vmatpush1.msra.mxu0 0.0
      %1149 = vmatprep.subr.mxu0 0.0
      %1150 = vmatpush1.msra.mxu0 0.0
      %1151 = vmatprep.subr.mxu0 0.0
      %1152 = vmatpush1.msra.mxu0 0.0
      %1153 = vmatprep.subr.mxu0 0.0
      %1154 = vmatpush1.msra.mxu0 0.0
      %1155 = vmatprep.subr.mxu0 0.0
      %1156 = vmatpush1.msra.mxu0 0.0
      %1157 = vmatprep.subr.mxu0 0.0
      %1158 = vmatpush1.msra.mxu0 0.0
      %1159 = vmatprep.subr.mxu0 0.0
      %1160 = vmatpush1.msra.mxu0 0.0
      %1161 = vmatprep.mubr.f32.mxu0 0.0
      %1162 = vmatmul.mubr.f32.gmra.mrb[0].mxu0 %v1092
      %v1163 = vpop.f32.mrb[0].mxu0
      %v1164 = vadd.f32 %v1089, %v1163
      %v1165 = vpop.f32.mrb[0].mxu0
      %1166 = vmatprep.mubr.f32.mxu0 0.0
      %1167 = vmatmul.mubr.f32.gmra.mrb[0].mxu0 %v1095
      %v1168 = vpop.f32.mrb[0].mxu0
      %v1169 = vadd.f32 %v1089, %v1168
      %v1170 = vpop.f32.mrb[0].mxu0
      %1171 = vdwg.mxu0
      %v1172 = vld [vmem:[%s882] sm:$0xff]
      %v1173 = vld [vmem:[%s882 + $0x8] sm:$0xff]
      %v1174 = vld [vmem:[%s882 + $0x10] sm:$0xff]
      %v1175 = vld [vmem:[%s882 + $0x18] sm:$0xff]
      %v1176 = vld [vmem:[%s885] sm:$0x1]
      %v1178 = vlaneseq
      %v1179 = vshrl.u32 %v1178, 7
      %v1180 = vsub.s32 0, %v1179
      %v1181 = vrot.slane %v1176, %v1180
      %1183 = vmatprep.subr.mxu0 0.0
      %1184 = vmatpush1.msra.mxu0 %v1172
      %1185 = vmatprep.subr.mxu0 0.0
      %1186 = vmatpush1.msra.mxu0 %v1173
      %1187 = vmatprep.subr.mxu0 0.0
      %1188 = vmatpush1.msra.mxu0 %v1174
      %1189 = vmatprep.subr.mxu0 0.0
      %1190 = vmatpush1.msra.mxu0 %v1175
      %1191 = vmatprep.subr.mxu0 0.0
      %1192 = vmatpush1.msra.mxu0 0.0
      %1193 = vmatprep.subr.mxu0 0.0
      %1194 = vmatpush1.msra.mxu0 0.0
      %1195 = vmatprep.subr.mxu0 0.0
      %1196 = vmatpush1.msra.mxu0 0.0
      %1197 = vmatprep.subr.mxu0 0.0
      %1198 = vmatpush1.msra.mxu0 0.0
      %1199 = vmatprep.subr.mxu0 0.0
      %1200 = vmatpush1.msra.mxu0 0.0
      %1201 = vmatprep.subr.mxu0 0.0
      %1202 = vmatpush1.msra.mxu0 0.0
      %1203 = vmatprep.subr.mxu0 0.0
      %1204 = vmatpush1.msra.mxu0 0.0
      %1205 = vmatprep.subr.mxu0 0.0
      %1206 = vmatpush1.msra.mxu0 0.0
      %1207 = vmatprep.subr.mxu0 0.0
      %1208 = vmatpush1.msra.mxu0 0.0
      %1209 = vmatprep.subr.mxu0 0.0
      %1210 = vmatpush1.msra.mxu0 0.0
      %1211 = vmatprep.subr.mxu0 0.0
      %1212 = vmatpush1.msra.mxu0 0.0
      %1213 = vmatprep.subr.mxu0 0.0
      %1214 = vmatpush1.msra.mxu0 0.0
      %1215 = vmatprep.subr.mxu0 0.0
      %1216 = vmatpush1.msra.mxu0 0.0
      %1217 = vmatprep.subr.mxu0 0.0
      %1218 = vmatpush1.msra.mxu0 0.0
      %1219 = vmatprep.subr.mxu0 0.0
      %1220 = vmatpush1.msra.mxu0 0.0
      %1221 = vmatprep.subr.mxu0 0.0
      %1222 = vmatpush1.msra.mxu0 0.0
      %1223 = vmatprep.subr.mxu0 0.0
      %1224 = vmatpush1.msra.mxu0 0.0
      %1225 = vmatprep.subr.mxu0 0.0
      %1226 = vmatpush1.msra.mxu0 0.0
      %1227 = vmatprep.subr.mxu0 0.0
      %1228 = vmatpush1.msra.mxu0 0.0
      %1229 = vmatprep.subr.mxu0 0.0
      %1230 = vmatpush1.msra.mxu0 0.0
      %1231 = vmatprep.subr.mxu0 0.0
      %1232 = vmatpush1.msra.mxu0 0.0
      %1233 = vmatprep.subr.mxu0 0.0
      %1234 = vmatpush1.msra.mxu0 0.0
      %1235 = vmatprep.subr.mxu0 0.0
      %1236 = vmatpush1.msra.mxu0 0.0
      %1237 = vmatprep.subr.mxu0 0.0
      %1238 = vmatpush1.msra.mxu0 0.0
      %1239 = vmatprep.subr.mxu0 0.0
      %1240 = vmatpush1.msra.mxu0 0.0
      %1241 = vmatprep.subr.mxu0 0.0
      %1242 = vmatpush1.msra.mxu0 0.0
      %1243 = vmatprep.subr.mxu0 0.0
      %1244 = vmatpush1.msra.mxu0 0.0
      %1245 = vmatprep.subr.mxu0 0.0
      %1246 = vmatpush1.msra.mxu0 0.0
      %1247 = vmatprep.mubr.f32.mxu0 0.0
      %1248 = vmatmul.mubr.f32.gmra.mrb[0].mxu0 %v1092
      %v1249 = vpop.f32.mrb[0].mxu0
      %v1250 = vadd.f32 %v1181, %v1249
      %v1251 = vpop.f32.mrb[0].mxu0
      %1252 = vmatprep.mubr.f32.mxu0 0.0
      %1253 = vmatmul.mubr.f32.gmra.mrb[0].mxu0 %v1095
      %v1254 = vpop.f32.mrb[0].mxu0
      %v1255 = vadd.f32 %v1181, %v1254
      %v1256 = vpop.f32.mrb[0].mxu0
      %1257 = vdwg.mxu0
      %v1258 = vld [vmem:[%s890] sm:$0xff]
      %v1259 = vld [vmem:[%s890 + $0x8] sm:$0xff]
      %v1260 = vld [vmem:[%s890 + $0x10] sm:$0xff]
      %v1261 = vld [vmem:[%s890 + $0x18] sm:$0xff]
      %v1262 = vld [vmem:[%s893] sm:$0x1]
      %v1264 = vlaneseq
      %v1265 = vshrl.u32 %v1264, 7
      %v1266 = vsub.s32 0, %v1265
      %v1267 = vrot.slane %v1262, %v1266
      %1269 = vmatprep.subr.mxu0 0.0
      %1270 = vmatpush1.msra.mxu0 %v1258
      %1271 = vmatprep.subr.mxu0 0.0
      %1272 = vmatpush1.msra.mxu0 %v1259
      %1273 = vmatprep.subr.mxu0 0.0
      %1274 = vmatpush1.msra.mxu0 %v1260
      %1275 = vmatprep.subr.mxu0 0.0
      %1276 = vmatpush1.msra.mxu0 %v1261
      %1277 = vmatprep.subr.mxu0 0.0
      %1278 = vmatpush1.msra.mxu0 0.0
      %1279 = vmatprep.subr.mxu0 0.0
      %1280 = vmatpush1.msra.mxu0 0.0
      %1281 = vmatprep.subr.mxu0 0.0
      %1282 = vmatpush1.msra.mxu0 0.0
      %1283 = vmatprep.subr.mxu0 0.0
      %1284 = vmatpush1.msra.mxu0 0.0
      %1285 = vmatprep.subr.mxu0 0.0
      %1286 = vmatpush1.msra.mxu0 0.0
      %1287 = vmatprep.subr.mxu0 0.0
      %1288 = vmatpush1.msra.mxu0 0.0
      %1289 = vmatprep.subr.mxu0 0.0
      %1290 = vmatpush1.msra.mxu0 0.0
      %1291 = vmatprep.subr.mxu0 0.0
      %1292 = vmatpush1.msra.mxu0 0.0
      %1293 = vmatprep.subr.mxu0 0.0
      %1294 = vmatpush1.msra.mxu0 0.0
      %1295 = vmatprep.subr.mxu0 0.0
      %1296 = vmatpush1.msra.mxu0 0.0
      %1297 = vmatprep.subr.mxu0 0.0
      %1298 = vmatpush1.msra.mxu0 0.0
      %1299 = vmatprep.subr.mxu0 0.0
      %1300 = vmatpush1.msra.mxu0 0.0
      %1301 = vmatprep.subr.mxu0 0.0
      %1302 = vmatpush1.msra.mxu0 0.0
      %1303 = vmatprep.subr.mxu0 0.0
      %1304 = vmatpush1.msra.mxu0 0.0
      %1305 = vmatprep.subr.mxu0 0.0
      %1306 = vmatpush1.msra.mxu0 0.0
      %1307 = vmatprep.subr.mxu0 0.0
      %1308 = vmatpush1.msra.mxu0 0.0
      %1309 = vmatprep.subr.mxu0 0.0
      %1310 = vmatpush1.msra.mxu0 0.0
      %1311 = vmatprep.subr.mxu0 0.0
      %1312 = vmatpush1.msra.mxu0 0.0
      %1313 = vmatprep.subr.mxu0 0.0
      %1314 = vmatpush1.msra.mxu0 0.0
      %1315 = vmatprep.subr.mxu0 0.0
      %1316 = vmatpush1.msra.mxu0 0.0
      %1317 = vmatprep.subr.mxu0 0.0
      %1318 = vmatpush1.msra.mxu0 0.0
      %1319 = vmatprep.subr.mxu0 0.0
      %1320 = vmatpush1.msra.mxu0 0.0
      %1321 = vmatprep.subr.mxu0 0.0
      %1322 = vmatpush1.msra.mxu0 0.0
      %1323 = vmatprep.subr.mxu0 0.0
      %1324 = vmatpush1.msra.mxu0 0.0
      %1325 = vmatprep.subr.mxu0 0.0
      %1326 = vmatpush1.msra.mxu0 0.0
      %1327 = vmatprep.subr.mxu0 0.0
      %1328 = vmatpush1.msra.mxu0 0.0
      %1329 = vmatprep.subr.mxu0 0.0
      %1330 = vmatpush1.msra.mxu0 0.0
      %1331 = vmatprep.subr.mxu0 0.0
      %1332 = vmatpush1.msra.mxu0 0.0
      %1333 = vmatprep.mubr.f32.mxu0 0.0
      %1334 = vmatmul.mubr.f32.gmra.mrb[0].mxu0 %v1092
      %v1335 = vpop.f32.mrb[0].mxu0
      %v1336 = vadd.f32 %v1267, %v1335
      %v1337 = vpop.f32.mrb[0].mxu0
      %1338 = vmatprep.mubr.f32.mxu0 0.0
      %1339 = vmatmul.mubr.f32.gmra.mrb[0].mxu0 %v1095
      %v1340 = vpop.f32.mrb[0].mxu0
      %v1341 = vadd.f32 %v1267, %v1340
      %v1342 = vpop.f32.mrb[0].mxu0
      %1343 = vdwg.mxu0
      %v1344 = vlaneseq
      %v1345 = vand.u32 %v1344, 127
      %vm1346 = vcmp.ge.s32.totalorder %v1345, 0
      %vm1347 = vcmp.lt.s32.totalorder %v1345, 8
      %vm1348 = vmand %vm1346, %vm1347
      %v1349 = vsel %vm1348, 1, 0
      %vm1350 = vcmp.eq.s32.totalorder %v1349, 1
      %v1351 = vsel %vm1350, %v1164, 0.0
      %v1352 = vsel %vm1350, %v1169, 0.0
      %v1353 = vsel %vm1350, %v1250, 0.0
      %v1354 = vsel %vm1350, %v1255, 0.0
      %v1355 = vsel %vm1350, %v1336, 0.0
      %v1356 = vsel %vm1350, %v1341, 0.0
      %v1358 = vsel %vm1035, %v1351, 0
      %v1361 = vsel %vm1035, %v1352, 0
      %v1364 = vsel %vm1035, %v1353, 0
      %v1367 = vsel %vm1035, %v1354, 0
      %1369 = vmatprep.subr.mxu0 0.0
      %1370 = vmatpush1.xpose.msra.mxu0 %v1364
      %1371 = vmatprep.subr.mxu0 0.0
      %1372 = vmatpush1.xpose.msra.mxu0 %v1367
      %1373 = vmatprep.subr.mxu0 0.0
      %1374 = vmatpush1.xpose.msra.mxu0 0.0
      %1375 = vmatprep.subr.mxu0 0.0
      %1376 = vmatpush1.xpose.msra.mxu0 0.0
      %1377 = vmatprep.subr.mxu0 0.0
      %1378 = vmatpush1.xpose.msra.mxu0 0.0
      %1379 = vmatprep.subr.mxu0 0.0
      %1380 = vmatpush1.xpose.msra.mxu0 0.0
      %1381 = vmatprep.subr.mxu0 0.0
      %1382 = vmatpush1.xpose.msra.mxu0 0.0
      %1383 = vmatprep.subr.mxu0 0.0
      %1384 = vmatpush1.xpose.msra.mxu0 0.0
      %1385 = vmatprep.subr.mxu0 0.0
      %1386 = vmatpush1.xpose.msra.mxu0 0.0
      %1387 = vmatprep.subr.mxu0 0.0
      %1388 = vmatpush1.xpose.msra.mxu0 0.0
      %1389 = vmatprep.subr.mxu0 0.0
      %1390 = vmatpush1.xpose.msra.mxu0 0.0
      %1391 = vmatprep.subr.mxu0 0.0
      %1392 = vmatpush1.xpose.msra.mxu0 0.0
      %1393 = vmatprep.subr.mxu0 0.0
      %1394 = vmatpush1.xpose.msra.mxu0 0.0
      %1395 = vmatprep.subr.mxu0 0.0
      %1396 = vmatpush1.xpose.msra.mxu0 0.0
      %1397 = vmatprep.subr.mxu0 0.0
      %1398 = vmatpush1.xpose.msra.mxu0 0.0
      %1399 = vmatprep.subr.mxu0 0.0
      %1400 = vmatpush1.xpose.msra.mxu0 0.0
      %1401 = vmatprep.subr.mxu0 0.0
      %1402 = vmatpush1.xpose.msra.mxu0 0.0
      %1403 = vmatprep.subr.mxu0 0.0
      %1404 = vmatpush1.xpose.msra.mxu0 0.0
      %1405 = vmatprep.subr.mxu0 0.0
      %1406 = vmatpush1.xpose.msra.mxu0 0.0
      %1407 = vmatprep.subr.mxu0 0.0
      %1408 = vmatpush1.xpose.msra.mxu0 0.0
      %1409 = vmatprep.subr.mxu0 0.0
      %1410 = vmatpush1.xpose.msra.mxu0 0.0
      %1411 = vmatprep.subr.mxu0 0.0
      %1412 = vmatpush1.xpose.msra.mxu0 0.0
      %1413 = vmatprep.subr.mxu0 0.0
      %1414 = vmatpush1.xpose.msra.mxu0 0.0
      %1415 = vmatprep.subr.mxu0 0.0
      %1416 = vmatpush1.xpose.msra.mxu0 0.0
      %1417 = vmatprep.subr.mxu0 0.0
      %1418 = vmatpush1.xpose.msra.mxu0 0.0
      %1419 = vmatprep.subr.mxu0 0.0
      %1420 = vmatpush1.xpose.msra.mxu0 0.0
      %1421 = vmatprep.subr.mxu0 0.0
      %1422 = vmatpush1.xpose.msra.mxu0 0.0
      %1423 = vmatprep.subr.mxu0 0.0
      %1424 = vmatpush1.xpose.msra.mxu0 0.0
      %1425 = vmatprep.subr.mxu0 0.0
      %1426 = vmatpush1.xpose.msra.mxu0 0.0
      %1427 = vmatprep.subr.mxu0 0.0
      %1428 = vmatpush1.xpose.msra.mxu0 0.0
      %1429 = vmatprep.subr.mxu0 0.0
      %1430 = vmatpush1.xpose.msra.mxu0 0.0
      %1431 = vmatprep.subr.mxu0 0.0
      %1432 = vmatpush1.xpose.msra.mxu0 0.0
      %1433 = vmatprep.mubr.f32.mxu0 0.0
      %1434 = vmatmul.mubr.f32.gmra.mrb[0].mxu0 %v1358
      %v1435 = vpop.f32.mrb[0].mxu0
      %v1436 = vadd.f32 0.0, %v1435
      %v1437 = vpop.f32.mrb[0].mxu0
      %1438 = vmatprep.mubr.f32.mxu0 0.0
      %1439 = vmatmul.mubr.f32.gmra.mrb[0].mxu0 %v1361
      %v1440 = vpop.f32.mrb[0].mxu0
      %v1441 = vadd.f32 0.0, %v1440
      %v1442 = vpop.f32.mrb[0].mxu0
      %1443 = vdwg.mxu0
      %v1444 = vmul.f32 %v1436, 0.35355338
      %v1445 = vmul.f32 %v1441, 0.35355338
      %vm1446 = vcmask 72704
      %v1447 = vsel %vm1446, %v1444, -inf
      %1448 = vmax.xlane.f32.xlu0 %v1447
      %v1449 = vpop.xlane.xlu0 %1448
      %vm1450 = vcmask 65536
      %v1451 = vsel %vm1450, %v1445, -inf
      %1452 = vmax.xlane.f32.xlu0 %v1451
      %v1453 = vpop.xlane.xlu0 %1452
      %v1454 = vsub.f32 %v1444, %v1449
      %v1455 = vsub.f32 %v1445, %v1453
      %v1456 = vmul.f32 %v1454, 1.442695
      %v1457 = vpow.pop %v1456
      %v1458 = vmul.f32 %v1455, 1.442695
      %v1459 = vpow.pop %v1458
      %v1460 = vsel %vm1446, %v1457, 0.0
      %1461 = vadd.xlane.f32.xlu0 %v1460
      %v1462 = vpop.xlane.xlu0 %1461
      %v1463 = vsel %vm1450, %v1459, 0.0
      %1464 = vadd.xlane.f32.xlu0 %v1463
      %v1465 = vpop.xlane.xlu0 %1464
      %v1466 = vrcp.pop %v1462
      %v1467 = vrcp.pop %v1465
      %v1468 = vmul.f32 %v1457, %v1466
      %v1469 = vmul.f32 %v1459, %v1467
      %vm1470 = vcmp.ge.s32.totalorder %v1345, 8
      %vm1471 = vcmp.lt.s32.totalorder %v1345, 16
      %vm1472 = vmand %vm1470, %vm1471
      %v1473 = vsel %vm1472, 1, 0
      %vm1474 = vcmp.eq.s32.totalorder %v1473, 1
      %v1475 = vsel %vm1474, %v1164, 0.0
      %v1476 = vsel %vm1474, %v1169, 0.0
      %v1477 = vsel %vm1474, %v1250, 0.0
      %v1478 = vsel %vm1474, %v1255, 0.0
      %v1479 = vsel %vm1474, %v1336, 0.0
      %v1480 = vsel %vm1474, %v1341, 0.0
      %v1482 = vsel %vm1035, %v1475, 0
      %v1485 = vsel %vm1035, %v1476, 0
      %v1488 = vsel %vm1035, %v1477, 0
      %v1491 = vsel %vm1035, %v1478, 0
      %1493 = vmatprep.subr.mxu0 0.0
      %1494 = vmatpush1.xpose.msra.mxu0 %v1488
      %1495 = vmatprep.subr.mxu0 0.0
      %1496 = vmatpush1.xpose.msra.mxu0 %v1491
      %1497 = vmatprep.subr.mxu0 0.0
      %1498 = vmatpush1.xpose.msra.mxu0 0.0
      %1499 = vmatprep.subr.mxu0 0.0
      %1500 = vmatpush1.xpose.msra.mxu0 0.0
      %1501 = vmatprep.subr.mxu0 0.0
      %1502 = vmatpush1.xpose.msra.mxu0 0.0
      %1503 = vmatprep.subr.mxu0 0.0
      %1504 = vmatpush1.xpose.msra.mxu0 0.0
      %1505 = vmatprep.subr.mxu0 0.0
      %1506 = vmatpush1.xpose.msra.mxu0 0.0
      %1507 = vmatprep.subr.mxu0 0.0
      %1508 = vmatpush1.xpose.msra.mxu0 0.0
      %1509 = vmatprep.subr.mxu0 0.0
      %1510 = vmatpush1.xpose.msra.mxu0 0.0
      %1511 = vmatprep.subr.mxu0 0.0
      %1512 = vmatpush1.xpose.msra.mxu0 0.0
      %1513 = vmatprep.subr.mxu0 0.0
      %1514 = vmatpush1.xpose.msra.mxu0 0.0
      %1515 = vmatprep.subr.mxu0 0.0
      %1516 = vmatpush1.xpose.msra.mxu0 0.0
      %1517 = vmatprep.subr.mxu0 0.0
      %1518 = vmatpush1.xpose.msra.mxu0 0.0
      %1519 = vmatprep.subr.mxu0 0.0
      %1520 = vmatpush1.xpose.msra.mxu0 0.0
      %1521 = vmatprep.subr.mxu0 0.0
      %1522 = vmatpush1.xpose.msra.mxu0 0.0
      %1523 = vmatprep.subr.mxu0 0.0
      %1524 = vmatpush1.xpose.msra.mxu0 0.0
      %1525 = vmatprep.subr.mxu0 0.0
      %1526 = vmatpush1.xpose.msra.mxu0 0.0
      %1527 = vmatprep.subr.mxu0 0.0
      %1528 = vmatpush1.xpose.msra.mxu0 0.0
      %1529 = vmatprep.subr.mxu0 0.0
      %1530 = vmatpush1.xpose.msra.mxu0 0.0
      %1531 = vmatprep.subr.mxu0 0.0
      %1532 = vmatpush1.xpose.msra.mxu0 0.0
      %1533 = vmatprep.subr.mxu0 0.0
      %1534 = vmatpush1.xpose.msra.mxu0 0.0
      %1535 = vmatprep.subr.mxu0 0.0
      %1536 = vmatpush1.xpose.msra.mxu0 0.0
      %1537 = vmatprep.subr.mxu0 0.0
      %1538 = vmatpush1.xpose.msra.mxu0 0.0
      %1539 = vmatprep.subr.mxu0 0.0
      %1540 = vmatpush1.xpose.msra.mxu0 0.0
      %1541 = vmatprep.subr.mxu0 0.0
      %1542 = vmatpush1.xpose.msra.mxu0 0.0
      %1543 = vmatprep.subr.mxu0 0.0
      %1544 = vmatpush1.xpose.msra.mxu0 0.0
      %1545 = vmatprep.subr.mxu0 0.0
      %1546 = vmatpush1.xpose.msra.mxu0 0.0
      %1547 = vmatprep.subr.mxu0 0.0
      %1548 = vmatpush1.xpose.msra.mxu0 0.0
      %1549 = vmatprep.subr.mxu0 0.0
      %1550 = vmatpush1.xpose.msra.mxu0 0.0
      %1551 = vmatprep.subr.mxu0 0.0
      %1552 = vmatpush1.xpose.msra.mxu0 0.0
      %1553 = vmatprep.subr.mxu0 0.0
      %1554 = vmatpush1.xpose.msra.mxu0 0.0
      %1555 = vmatprep.subr.mxu0 0.0
      %1556 = vmatpush1.xpose.msra.mxu0 0.0
      %1557 = vmatprep.mubr.f32.mxu0 0.0
      %1558 = vmatmul.mubr.f32.gmra.mrb[0].mxu0 %v1482
      %v1559 = vpop.f32.mrb[0].mxu0
      %v1560 = vadd.f32 0.0, %v1559
      %v1561 = vpop.f32.mrb[0].mxu0
      %1562 = vmatprep.mubr.f32.mxu0 0.0
      %1563 = vmatmul.mubr.f32.gmra.mrb[0].mxu0 %v1485
      %v1564 = vpop.f32.mrb[0].mxu0
      %v1565 = vadd.f32 0.0, %v1564
      %v1566 = vpop.f32.mrb[0].mxu0
      %1567 = vdwg.mxu0
      %v1568 = vmul.f32 %v1560, 0.35355338
      %v1569 = vmul.f32 %v1565, 0.35355338
      %v1570 = vsel %vm1446, %v1568, -inf
      %1571 = vmax.xlane.f32.xlu0 %v1570
      %v1572 = vpop.xlane.xlu0 %1571
      %v1573 = vsel %vm1450, %v1569, -inf
      %1574 = vmax.xlane.f32.xlu0 %v1573
      %v1575 = vpop.xlane.xlu0 %1574
      %v1576 = vsub.f32 %v1568, %v1572
      %v1577 = vsub.f32 %v1569, %v1575
      %v1578 = vmul.f32 %v1576, 1.442695
      %v1579 = vpow.pop %v1578
      %v1580 = vmul.f32 %v1577, 1.442695
      %v1581 = vpow.pop %v1580
      %v1582 = vsel %vm1446, %v1579, 0.0
      %1583 = vadd.xlane.f32.xlu0 %v1582
      %v1584 = vpop.xlane.xlu0 %1583
      %v1585 = vsel %vm1450, %v1581, 0.0
      %1586 = vadd.xlane.f32.xlu0 %v1585
      %v1587 = vpop.xlane.xlu0 %1586
      %v1588 = vrcp.pop %v1584
      %v1589 = vrcp.pop %v1587
      %v1590 = vmul.f32 %v1579, %v1588
      %v1591 = vmul.f32 %v1581, %v1589
      %v1593 = vsel %vm1446, %v1590, 0
      %v1596 = vsel %vm1446, %v1591, 0
      %vm1598 = vcmask 1040384
      %v1600 = vsel %vm1598, %v1480, 0
      %1602 = vmatprep.subr.mxu0 0.0
      %1603 = vmatpush1.msra.mxu0 %v1479
      %1604 = vmatprep.subr.mxu0 0.0
      %1605 = vmatpush1.msra.mxu0 %v1600
      %1606 = vmatprep.subr.mxu0 0.0
      %1607 = vmatpush1.msra.mxu0 0.0
      %1608 = vmatprep.subr.mxu0 0.0
      %1609 = vmatpush1.msra.mxu0 0.0
      %1610 = vmatprep.subr.mxu0 0.0
      %1611 = vmatpush1.msra.mxu0 0.0
      %1612 = vmatprep.subr.mxu0 0.0
      %1613 = vmatpush1.msra.mxu0 0.0
      %1614 = vmatprep.subr.mxu0 0.0
      %1615 = vmatpush1.msra.mxu0 0.0
      %1616 = vmatprep.subr.mxu0 0.0
      %1617 = vmatpush1.msra.mxu0 0.0
      %1618 = vmatprep.subr.mxu0 0.0
      %1619 = vmatpush1.msra.mxu0 0.0
      %1620 = vmatprep.subr.mxu0 0.0
      %1621 = vmatpush1.msra.mxu0 0.0
      %1622 = vmatprep.subr.mxu0 0.0
      %1623 = vmatpush1.msra.mxu0 0.0
      %1624 = vmatprep.subr.mxu0 0.0
      %1625 = vmatpush1.msra.mxu0 0.0
      %1626 = vmatprep.subr.mxu0 0.0
      %1627 = vmatpush1.msra.mxu0 0.0
      %1628 = vmatprep.subr.mxu0 0.0
      %1629 = vmatpush1.msra.mxu0 0.0
      %1630 = vmatprep.subr.mxu0 0.0
      %1631 = vmatpush1.msra.mxu0 0.0
      %1632 = vmatprep.subr.mxu0 0.0
      %1633 = vmatpush1.msra.mxu0 0.0
      %1634 = vmatprep.subr.mxu0 0.0
      %1635 = vmatpush1.msra.mxu0 0.0
      %1636 = vmatprep.subr.mxu0 0.0
      %1637 = vmatpush1.msra.mxu0 0.0
      %1638 = vmatprep.subr.mxu0 0.0
      %1639 = vmatpush1.msra.mxu0 0.0
      %1640 = vmatprep.subr.mxu0 0.0
      %1641 = vmatpush1.msra.mxu0 0.0
      %1642 = vmatprep.subr.mxu0 0.0
      %1643 = vmatpush1.msra.mxu0 0.0
      %1644 = vmatprep.subr.mxu0 0.0
      %1645 = vmatpush1.msra.mxu0 0.0
      %1646 = vmatprep.subr.mxu0 0.0
      %1647 = vmatpush1.msra.mxu0 0.0
      %1648 = vmatprep.subr.mxu0 0.0
      %1649 = vmatpush1.msra.mxu0 0.0
      %1650 = vmatprep.subr.mxu0 0.0
      %1651 = vmatpush1.msra.mxu0 0.0
      %1652 = vmatprep.subr.mxu0 0.0
      %1653 = vmatpush1.msra.mxu0 0.0
      %1654 = vmatprep.subr.mxu0 0.0
      %1655 = vmatpush1.msra.mxu0 0.0
      %1656 = vmatprep.subr.mxu0 0.0
      %1657 = vmatpush1.msra.mxu0 0.0
      %1658 = vmatprep.subr.mxu0 0.0
      %1659 = vmatpush1.msra.mxu0 0.0
      %1660 = vmatprep.subr.mxu0 0.0
      %1661 = vmatpush1.msra.mxu0 0.0
      %1662 = vmatprep.subr.mxu0 0.0
      %1663 = vmatpush1.msra.mxu0 0.0
      %1664 = vmatprep.subr.mxu0 0.0
      %1665 = vmatpush1.msra.mxu0 0.0
      %1666 = vmatprep.mubr.f32.mxu0 0.0
      %1667 = vmatmul.mubr.f32.gmra.mrb[0].mxu0 %v1593
      %v1668 = vpop.f32.mrb[0].mxu0
      %v1669 = vadd.f32 0.0, %v1668
      %v1670 = vpop.f32.mrb[0].mxu0
      %1671 = vmatprep.mubr.f32.mxu0 0.0
      %1672 = vmatmul.mubr.f32.gmra.mrb[0].mxu0 %v1596
      %v1673 = vpop.f32.mrb[0].mxu0
      %v1674 = vadd.f32 0.0, %v1673
      %v1675 = vpop.f32.mrb[0].mxu0
      %1676 = vdwg.mxu0
      %v1678 = vsel %vm1446, %v1468, 0
      %v1681 = vsel %vm1446, %v1469, 0
      %v1684 = vsel %vm1598, %v1356, 0
      %1686 = vmatprep.subr.mxu0 0.0
      %1687 = vmatpush1.msra.mxu0 %v1355
      %1688 = vmatprep.subr.mxu0 0.0
      %1689 = vmatpush1.msra.mxu0 %v1684
      %1690 = vmatprep.subr.mxu0 0.0
      %1691 = vmatpush1.msra.mxu0 0.0
      %1692 = vmatprep.subr.mxu0 0.0
      %1693 = vmatpush1.msra.mxu0 0.0
      %1694 = vmatprep.subr.mxu0 0.0
      %1695 = vmatpush1.msra.mxu0 0.0
      %1696 = vmatprep.subr.mxu0 0.0
      %1697 = vmatpush1.msra.mxu0 0.0
      %1698 = vmatprep.subr.mxu0 0.0
      %1699 = vmatpush1.msra.mxu0 0.0
      %1700 = vmatprep.subr.mxu0 0.0
      %1701 = vmatpush1.msra.mxu0 0.0
      %1702 = vmatprep.subr.mxu0 0.0
      %1703 = vmatpush1.msra.mxu0 0.0
      %1704 = vmatprep.subr.mxu0 0.0
      %1705 = vmatpush1.msra.mxu0 0.0
      %1706 = vmatprep.subr.mxu0 0.0
      %1707 = vmatpush1.msra.mxu0 0.0
      %1708 = vmatprep.subr.mxu0 0.0
      %1709 = vmatpush1.msra.mxu0 0.0
      %1710 = vmatprep.subr.mxu0 0.0
      %1711 = vmatpush1.msra.mxu0 0.0
      %1712 = vmatprep.subr.mxu0 0.0
      %1713 = vmatpush1.msra.mxu0 0.0
      %1714 = vmatprep.subr.mxu0 0.0
      %1715 = vmatpush1.msra.mxu0 0.0
      %1716 = vmatprep.subr.mxu0 0.0
      %1717 = vmatpush1.msra.mxu0 0.0
      %1718 = vmatprep.subr.mxu0 0.0
      %1719 = vmatpush1.msra.mxu0 0.0
      %1720 = vmatprep.subr.mxu0 0.0
      %1721 = vmatpush1.msra.mxu0 0.0
      %1722 = vmatprep.subr.mxu0 0.0
      %1723 = vmatpush1.msra.mxu0 0.0
      %1724 = vmatprep.subr.mxu0 0.0
      %1725 = vmatpush1.msra.mxu0 0.0
      %1726 = vmatprep.subr.mxu0 0.0
      %1727 = vmatpush1.msra.mxu0 0.0
      %1728 = vmatprep.subr.mxu0 0.0
      %1729 = vmatpush1.msra.mxu0 0.0
      %1730 = vmatprep.subr.mxu0 0.0
      %1731 = vmatpush1.msra.mxu0 0.0
      %1732 = vmatprep.subr.mxu0 0.0
      %1733 = vmatpush1.msra.mxu0 0.0
      %1734 = vmatprep.subr.mxu0 0.0
      %1735 = vmatpush1.msra.mxu0 0.0
      %1736 = vmatprep.subr.mxu0 0.0
      %1737 = vmatpush1.msra.mxu0 0.0
      %1738 = vmatprep.subr.mxu0 0.0
      %1739 = vmatpush1.msra.mxu0 0.0
      %1740 = vmatprep.subr.mxu0 0.0
      %1741 = vmatpush1.msra.mxu0 0.0
      %1742 = vmatprep.subr.mxu0 0.0
      %1743 = vmatpush1.msra.mxu0 0.0
      %1744 = vmatprep.subr.mxu0 0.0
      %1745 = vmatpush1.msra.mxu0 0.0
      %1746 = vmatprep.subr.mxu0 0.0
      %1747 = vmatpush1.msra.mxu0 0.0
      %1748 = vmatprep.subr.mxu0 0.0
      %1749 = vmatpush1.msra.mxu0 0.0
      %1750 = vmatprep.mubr.f32.mxu0 0.0
      %1751 = vmatmul.mubr.f32.gmra.mrb[0].mxu0 %v1678
      %v1752 = vpop.f32.mrb[0].mxu0
      %v1753 = vadd.f32 %v1669, %v1752
      %v1754 = vpop.f32.mrb[0].mxu0
      %1755 = vmatprep.mubr.f32.mxu0 0.0
      %1756 = vmatmul.mubr.f32.gmra.mrb[0].mxu0 %v1681
      %v1757 = vpop.f32.mrb[0].mxu0
      %v1758 = vadd.f32 %v1674, %v1757
      %v1759 = vpop.f32.mrb[0].mxu0
      %1760 = vdwg.mxu0
      %vm1761 = vcmp.ge.s32.totalorder %v1345, 16
      %vm1762 = vcmp.lt.s32.totalorder %v1345, 24
      %vm1763 = vmand %vm1761, %vm1762
      %v1764 = vsel %vm1763, 1, 0
      %vm1765 = vcmp.eq.s32.totalorder %v1764, 1
      %v1766 = vsel %vm1765, %v1164, 0.0
      %v1767 = vsel %vm1765, %v1169, 0.0
      %v1768 = vsel %vm1765, %v1250, 0.0
      %v1769 = vsel %vm1765, %v1255, 0.0
      %v1770 = vsel %vm1765, %v1336, 0.0
      %v1771 = vsel %vm1765, %v1341, 0.0
      %v1773 = vsel %vm1035, %v1766, 0
      %v1776 = vsel %vm1035, %v1767, 0
      %v1779 = vsel %vm1035, %v1768, 0
      %v1782 = vsel %vm1035, %v1769, 0
      %1784 = vmatprep.subr.mxu0 0.0
      %1785 = vmatpush1.xpose.msra.mxu0 %v1779
      %1786 = vmatprep.subr.mxu0 0.0
      %1787 = vmatpush1.xpose.msra.mxu0 %v1782
      %1788 = vmatprep.subr.mxu0 0.0
      %1789 = vmatpush1.xpose.msra.mxu0 0.0
      %1790 = vmatprep.subr.mxu0 0.0
      %1791 = vmatpush1.xpose.msra.mxu0 0.0
      %1792 = vmatprep.subr.mxu0 0.0
      %1793 = vmatpush1.xpose.msra.mxu0 0.0
      %1794 = vmatprep.subr.mxu0 0.0
      %1795 = vmatpush1.xpose.msra.mxu0 0.0
      %1796 = vmatprep.subr.mxu0 0.0
      %1797 = vmatpush1.xpose.msra.mxu0 0.0
      %1798 = vmatprep.subr.mxu0 0.0
      %1799 = vmatpush1.xpose.msra.mxu0 0.0
      %1800 = vmatprep.subr.mxu0 0.0
      %1801 = vmatpush1.xpose.msra.mxu0 0.0
      %1802 = vmatprep.subr.mxu0 0.0
      %1803 = vmatpush1.xpose.msra.mxu0 0.0
      %1804 = vmatprep.subr.mxu0 0.0
      %1805 = vmatpush1.xpose.msra.mxu0 0.0
      %1806 = vmatprep.subr.mxu0 0.0
      %1807 = vmatpush1.xpose.msra.mxu0 0.0
      %1808 = vmatprep.subr.mxu0 0.0
      %1809 = vmatpush1.xpose.msra.mxu0 0.0
      %1810 = vmatprep.subr.mxu0 0.0
      %1811 = vmatpush1.xpose.msra.mxu0 0.0
      %1812 = vmatprep.subr.mxu0 0.0
      %1813 = vmatpush1.xpose.msra.mxu0 0.0
      %1814 = vmatprep.subr.mxu0 0.0
      %1815 = vmatpush1.xpose.msra.mxu0 0.0
      %1816 = vmatprep.subr.mxu0 0.0
      %1817 = vmatpush1.xpose.msra.mxu0 0.0
      %1818 = vmatprep.subr.mxu0 0.0
      %1819 = vmatpush1.xpose.msra.mxu0 0.0
      %1820 = vmatprep.subr.mxu0 0.0
      %1821 = vmatpush1.xpose.msra.mxu0 0.0
      %1822 = vmatprep.subr.mxu0 0.0
      %1823 = vmatpush1.xpose.msra.mxu0 0.0
      %1824 = vmatprep.subr.mxu0 0.0
      %1825 = vmatpush1.xpose.msra.mxu0 0.0
      %1826 = vmatprep.subr.mxu0 0.0
      %1827 = vmatpush1.xpose.msra.mxu0 0.0
      %1828 = vmatprep.subr.mxu0 0.0
      %1829 = vmatpush1.xpose.msra.mxu0 0.0
      %1830 = vmatprep.subr.mxu0 0.0
      %1831 = vmatpush1.xpose.msra.mxu0 0.0
      %1832 = vmatprep.subr.mxu0 0.0
      %1833 = vmatpush1.xpose.msra.mxu0 0.0
      %1834 = vmatprep.subr.mxu0 0.0
      %1835 = vmatpush1.xpose.msra.mxu0 0.0
      %1836 = vmatprep.subr.mxu0 0.0
      %1837 = vmatpush1.xpose.msra.mxu0 0.0
      %1838 = vmatprep.subr.mxu0 0.0
      %1839 = vmatpush1.xpose.msra.mxu0 0.0
      %1840 = vmatprep.subr.mxu0 0.0
      %1841 = vmatpush1.xpose.msra.mxu0 0.0
      %1842 = vmatprep.subr.mxu0 0.0
      %1843 = vmatpush1.xpose.msra.mxu0 0.0
      %1844 = vmatprep.subr.mxu0 0.0
      %1845 = vmatpush1.xpose.msra.mxu0 0.0
      %1846 = vmatprep.subr.mxu0 0.0
      %1847 = vmatpush1.xpose.msra.mxu0 0.0
      %1848 = vmatprep.mubr.f32.mxu0 0.0
      %1849 = vmatmul.mubr.f32.gmra.mrb[0].mxu0 %v1773
      %v1850 = vpop.f32.mrb[0].mxu0
      %v1851 = vadd.f32 0.0, %v1850
      %v1852 = vpop.f32.mrb[0].mxu0
      %1853 = vmatprep.mubr.f32.mxu0 0.0
      %1854 = vmatmul.mubr.f32.gmra.mrb[0].mxu0 %v1776
      %v1855 = vpop.f32.mrb[0].mxu0
      %v1856 = vadd.f32 0.0, %v1855
      %v1857 = vpop.f32.mrb[0].mxu0
      %1858 = vdwg.mxu0
      %v1859 = vmul.f32 %v1851, 0.35355338
      %v1860 = vmul.f32 %v1856, 0.35355338
      %v1861 = vsel %vm1446, %v1859, -inf
      %1862 = vmax.xlane.f32.xlu0 %v1861
      %v1863 = vpop.xlane.xlu0 %1862
      %v1864 = vsel %vm1450, %v1860, -inf
      %1865 = vmax.xlane.f32.xlu0 %v1864
      %v1866 = vpop.xlane.xlu0 %1865
      %v1867 = vsub.f32 %v1859, %v1863
      %v1868 = vsub.f32 %v1860, %v1866
      %v1869 = vmul.f32 %v1867, 1.442695
      %v1870 = vpow.pop %v1869
      %v1871 = vmul.f32 %v1868, 1.442695
      %v1872 = vpow.pop %v1871
      %v1873 = vsel %vm1446, %v1870, 0.0
      %1874 = vadd.xlane.f32.xlu0 %v1873
      %v1875 = vpop.xlane.xlu0 %1874
      %v1876 = vsel %vm1450, %v1872, 0.0
      %1877 = vadd.xlane.f32.xlu0 %v1876
      %v1878 = vpop.xlane.xlu0 %1877
      %v1879 = vrcp.pop %v1875
      %v1880 = vrcp.pop %v1878
      %v1881 = vmul.f32 %v1870, %v1879
      %v1882 = vmul.f32 %v1872, %v1880
      %v1884 = vsel %vm1446, %v1881, 0
      %v1887 = vsel %vm1446, %v1882, 0
      %v1890 = vsel %vm1598, %v1771, 0
      %1892 = vmatprep.subr.mxu0 0.0
      %1893 = vmatpush1.msra.mxu0 %v1770
      %1894 = vmatprep.subr.mxu0 0.0
      %1895 = vmatpush1.msra.mxu0 %v1890
      %1896 = vmatprep.subr.mxu0 0.0
      %1897 = vmatpush1.msra.mxu0 0.0
      %1898 = vmatprep.subr.mxu0 0.0
      %1899 = vmatpush1.msra.mxu0 0.0
      %1900 = vmatprep.subr.mxu0 0.0
      %1901 = vmatpush1.msra.mxu0 0.0
      %1902 = vmatprep.subr.mxu0 0.0
      %1903 = vmatpush1.msra.mxu0 0.0
      %1904 = vmatprep.subr.mxu0 0.0
      %1905 = vmatpush1.msra.mxu0 0.0
      %1906 = vmatprep.subr.mxu0 0.0
      %1907 = vmatpush1.msra.mxu0 0.0
      %1908 = vmatprep.subr.mxu0 0.0
      %1909 = vmatpush1.msra.mxu0 0.0
      %1910 = vmatprep.subr.mxu0 0.0
      %1911 = vmatpush1.msra.mxu0 0.0
      %1912 = vmatprep.subr.mxu0 0.0
      %1913 = vmatpush1.msra.mxu0 0.0
      %1914 = vmatprep.subr.mxu0 0.0
      %1915 = vmatpush1.msra.mxu0 0.0
      %1916 = vmatprep.subr.mxu0 0.0
      %1917 = vmatpush1.msra.mxu0 0.0
      %1918 = vmatprep.subr.mxu0 0.0
      %1919 = vmatpush1.msra.mxu0 0.0
      %1920 = vmatprep.subr.mxu0 0.0
      %1921 = vmatpush1.msra.mxu0 0.0
      %1922 = vmatprep.subr.mxu0 0.0
      %1923 = vmatpush1.msra.mxu0 0.0
      %1924 = vmatprep.subr.mxu0 0.0
      %1925 = vmatpush1.msra.mxu0 0.0
      %1926 = vmatprep.subr.mxu0 0.0
      %1927 = vmatpush1.msra.mxu0 0.0
      %1928 = vmatprep.subr.mxu0 0.0
      %1929 = vmatpush1.msra.mxu0 0.0
      %1930 = vmatprep.subr.mxu0 0.0
      %1931 = vmatpush1.msra.mxu0 0.0
      %1932 = vmatprep.subr.mxu0 0.0
      %1933 = vmatpush1.msra.mxu0 0.0
      %1934 = vmatprep.subr.mxu0 0.0
      %1935 = vmatpush1.msra.mxu0 0.0
      %1936 = vmatprep.subr.mxu0 0.0
      %1937 = vmatpush1.msra.mxu0 0.0
      %1938 = vmatprep.subr.mxu0 0.0
      %1939 = vmatpush1.msra.mxu0 0.0
      %1940 = vmatprep.subr.mxu0 0.0
      %1941 = vmatpush1.msra.mxu0 0.0
      %1942 = vmatprep.subr.mxu0 0.0
      %1943 = vmatpush1.msra.mxu0 0.0
      %1944 = vmatprep.subr.mxu0 0.0
      %1945 = vmatpush1.msra.mxu0 0.0
      %1946 = vmatprep.subr.mxu0 0.0
      %1947 = vmatpush1.msra.mxu0 0.0
      %1948 = vmatprep.subr.mxu0 0.0
      %1949 = vmatpush1.msra.mxu0 0.0
      %1950 = vmatprep.subr.mxu0 0.0
      %1951 = vmatpush1.msra.mxu0 0.0
      %1952 = vmatprep.subr.mxu0 0.0
      %1953 = vmatpush1.msra.mxu0 0.0
      %1954 = vmatprep.subr.mxu0 0.0
      %1955 = vmatpush1.msra.mxu0 0.0
      %1956 = vmatprep.mubr.f32.mxu0 0.0
      %1957 = vmatmul.mubr.f32.gmra.mrb[0].mxu0 %v1884
      %v1958 = vpop.f32.mrb[0].mxu0
      %v1959 = vadd.f32 0.0, %v1958
      %v1960 = vpop.f32.mrb[0].mxu0
      %1961 = vmatprep.mubr.f32.mxu0 0.0
      %1962 = vmatmul.mubr.f32.gmra.mrb[0].mxu0 %v1887
      %v1963 = vpop.f32.mrb[0].mxu0
      %v1964 = vadd.f32 0.0, %v1963
      %v1965 = vpop.f32.mrb[0].mxu0
      %1966 = vdwg.mxu0
      %v1967 = vadd.f32 %v1753, %v1959
      %v1968 = vadd.f32 %v1758, %v1964
      %vm1969 = vcmp.ge.s32.totalorder %v1345, 24
      %vm1970 = vcmp.lt.s32.totalorder %v1345, 32
      %vm1971 = vmand %vm1969, %vm1970
      %v1972 = vsel %vm1971, 1, 0
      %vm1973 = vcmp.eq.s32.totalorder %v1972, 1
      %v1974 = vsel %vm1973, %v1164, 0.0
      %v1975 = vsel %vm1973, %v1169, 0.0
      %v1976 = vsel %vm1973, %v1250, 0.0
      %v1977 = vsel %vm1973, %v1255, 0.0
      %v1978 = vsel %vm1973, %v1336, 0.0
      %v1979 = vsel %vm1973, %v1341, 0.0
      %v1981 = vsel %vm1035, %v1974, 0
      %v1984 = vsel %vm1035, %v1975, 0
      %v1987 = vsel %vm1035, %v1976, 0
      %v1990 = vsel %vm1035, %v1977, 0
      %1992 = vmatprep.subr.mxu0 0.0
      %1993 = vmatpush1.xpose.msra.mxu0 %v1987
      %1994 = vmatprep.subr.mxu0 0.0
      %1995 = vmatpush1.xpose.msra.mxu0 %v1990
      %1996 = vmatprep.subr.mxu0 0.0
      %1997 = vmatpush1.xpose.msra.mxu0 0.0
      %1998 = vmatprep.subr.mxu0 0.0
      %1999 = vmatpush1.xpose.msra.mxu0 0.0
      %2000 = vmatprep.subr.mxu0 0.0
      %2001 = vmatpush1.xpose.msra.mxu0 0.0
      %2002 = vmatprep.subr.mxu0 0.0
      %2003 = vmatpush1.xpose.msra.mxu0 0.0
      %2004 = vmatprep.subr.mxu0 0.0
      %2005 = vmatpush1.xpose.msra.mxu0 0.0
      %2006 = vmatprep.subr.mxu0 0.0
      %2007 = vmatpush1.xpose.msra.mxu0 0.0
      %2008 = vmatprep.subr.mxu0 0.0
      %2009 = vmatpush1.xpose.msra.mxu0 0.0
      %2010 = vmatprep.subr.mxu0 0.0
      %2011 = vmatpush1.xpose.msra.mxu0 0.0
      %2012 = vmatprep.subr.mxu0 0.0
      %2013 = vmatpush1.xpose.msra.mxu0 0.0
      %2014 = vmatprep.subr.mxu0 0.0
      %2015 = vmatpush1.xpose.msra.mxu0 0.0
      %2016 = vmatprep.subr.mxu0 0.0
      %2017 = vmatpush1.xpose.msra.mxu0 0.0
      %2018 = vmatprep.subr.mxu0 0.0
      %2019 = vmatpush1.xpose.msra.mxu0 0.0
      %2020 = vmatprep.subr.mxu0 0.0
      %2021 = vmatpush1.xpose.msra.mxu0 0.0
      %2022 = vmatprep.subr.mxu0 0.0
      %2023 = vmatpush1.xpose.msra.mxu0 0.0
      %2024 = vmatprep.subr.mxu0 0.0
      %2025 = vmatpush1.xpose.msra.mxu0 0.0
      %2026 = vmatprep.subr.mxu0 0.0
      %2027 = vmatpush1.xpose.msra.mxu0 0.0
      %2028 = vmatprep.subr.mxu0 0.0
      %2029 = vmatpush1.xpose.msra.mxu0 0.0
      %2030 = vmatprep.subr.mxu0 0.0
      %2031 = vmatpush1.xpose.msra.mxu0 0.0
      %2032 = vmatprep.subr.mxu0 0.0
      %2033 = vmatpush1.xpose.msra.mxu0 0.0
      %2034 = vmatprep.subr.mxu0 0.0
      %2035 = vmatpush1.xpose.msra.mxu0 0.0
      %2036 = vmatprep.subr.mxu0 0.0
      %2037 = vmatpush1.xpose.msra.mxu0 0.0
      %2038 = vmatprep.subr.mxu0 0.0
      %2039 = vmatpush1.xpose.msra.mxu0 0.0
      %2040 = vmatprep.subr.mxu0 0.0
      %2041 = vmatpush1.xpose.msra.mxu0 0.0
      %2042 = vmatprep.subr.mxu0 0.0
      %2043 = vmatpush1.xpose.msra.mxu0 0.0
      %2044 = vmatprep.subr.mxu0 0.0
      %2045 = vmatpush1.xpose.msra.mxu0 0.0
      %2046 = vmatprep.subr.mxu0 0.0
      %2047 = vmatpush1.xpose.msra.mxu0 0.0
      %2048 = vmatprep.subr.mxu0 0.0
      %2049 = vmatpush1.xpose.msra.mxu0 0.0
      %2050 = vmatprep.subr.mxu0 0.0
      %2051 = vmatpush1.xpose.msra.mxu0 0.0
      %2052 = vmatprep.subr.mxu0 0.0
      %2053 = vmatpush1.xpose.msra.mxu0 0.0
      %2054 = vmatprep.subr.mxu0 0.0
      %2055 = vmatpush1.xpose.msra.mxu0 0.0
      %2056 = vmatprep.mubr.f32.mxu0 0.0
      %2057 = vmatmul.mubr.f32.gmra.mrb[0].mxu0 %v1981
      %v2058 = vpop.f32.mrb[0].mxu0
      %v2059 = vadd.f32 0.0, %v2058
      %v2060 = vpop.f32.mrb[0].mxu0
      %2061 = vmatprep.mubr.f32.mxu0 0.0
      %2062 = vmatmul.mubr.f32.gmra.mrb[0].mxu0 %v1984
      %v2063 = vpop.f32.mrb[0].mxu0
      %v2064 = vadd.f32 0.0, %v2063
      %v2065 = vpop.f32.mrb[0].mxu0
      %2066 = vdwg.mxu0
      %v2067 = vmul.f32 %v2059, 0.35355338
      %v2068 = vmul.f32 %v2064, 0.35355338
      %v2069 = vsel %vm1446, %v2067, -inf
      %2070 = vmax.xlane.f32.xlu0 %v2069
      %v2071 = vpop.xlane.xlu0 %2070
      %v2072 = vsel %vm1450, %v2068, -inf
      %2073 = vmax.xlane.f32.xlu0 %v2072
      %v2074 = vpop.xlane.xlu0 %2073
      %v2075 = vsub.f32 %v2067, %v2071
      %v2076 = vsub.f32 %v2068, %v2074
      %v2077 = vmul.f32 %v2075, 1.442695
      %v2078 = vpow.pop %v2077
      %v2079 = vmul.f32 %v2076, 1.442695
      %v2080 = vpow.pop %v2079
      %v2081 = vsel %vm1446, %v2078, 0.0
      %2082 = vadd.xlane.f32.xlu0 %v2081
      %v2083 = vpop.xlane.xlu0 %2082
      %v2084 = vsel %vm1450, %v2080, 0.0
      %2085 = vadd.xlane.f32.xlu0 %v2084
      %v2086 = vpop.xlane.xlu0 %2085
      %v2087 = vrcp.pop %v2083
      %v2088 = vrcp.pop %v2086
      %v2089 = vmul.f32 %v2078, %v2087
      %v2090 = vmul.f32 %v2080, %v2088
      %v2092 = vsel %vm1446, %v2089, 0
      %v2095 = vsel %vm1446, %v2090, 0
      %v2098 = vsel %vm1598, %v1979, 0
      %2100 = vmatprep.subr.mxu0 0.0
      %2101 = vmatpush1.msra.mxu0 %v1978
      %2102 = vmatprep.subr.mxu0 0.0
      %2103 = vmatpush1.msra.mxu0 %v2098
      %2104 = vmatprep.subr.mxu0 0.0
      %2105 = vmatpush1.msra.mxu0 0.0
      %2106 = vmatprep.subr.mxu0 0.0
      %2107 = vmatpush1.msra.mxu0 0.0
      %2108 = vmatprep.subr.mxu0 0.0
      %2109 = vmatpush1.msra.mxu0 0.0
      %2110 = vmatprep.subr.mxu0 0.0
      %2111 = vmatpush1.msra.mxu0 0.0
      %2112 = vmatprep.subr.mxu0 0.0
      %2113 = vmatpush1.msra.mxu0 0.0
      %2114 = vmatprep.subr.mxu0 0.0
      %2115 = vmatpush1.msra.mxu0 0.0
      %2116 = vmatprep.subr.mxu0 0.0
      %2117 = vmatpush1.msra.mxu0 0.0
      %2118 = vmatprep.subr.mxu0 0.0
      %2119 = vmatpush1.msra.mxu0 0.0
      %2120 = vmatprep.subr.mxu0 0.0
      %2121 = vmatpush1.msra.mxu0 0.0
      %2122 = vmatprep.subr.mxu0 0.0
      %2123 = vmatpush1.msra.mxu0 0.0
      %2124 = vmatprep.subr.mxu0 0.0
      %2125 = vmatpush1.msra.mxu0 0.0
      %2126 = vmatprep.subr.mxu0 0.0
      %2127 = vmatpush1.msra.mxu0 0.0
      %2128 = vmatprep.subr.mxu0 0.0
      %2129 = vmatpush1.msra.mxu0 0.0
      %2130 = vmatprep.subr.mxu0 0.0
      %2131 = vmatpush1.msra.mxu0 0.0
      %2132 = vmatprep.subr.mxu0 0.0
      %2133 = vmatpush1.msra.mxu0 0.0
      %2134 = vmatprep.subr.mxu0 0.0
      %2135 = vmatpush1.msra.mxu0 0.0
      %2136 = vmatprep.subr.mxu0 0.0
      %2137 = vmatpush1.msra.mxu0 0.0
      %2138 = vmatprep.subr.mxu0 0.0
      %2139 = vmatpush1.msra.mxu0 0.0
      %2140 = vmatprep.subr.mxu0 0.0
      %2141 = vmatpush1.msra.mxu0 0.0
      %2142 = vmatprep.subr.mxu0 0.0
      %2143 = vmatpush1.msra.mxu0 0.0
      %2144 = vmatprep.subr.mxu0 0.0
      %2145 = vmatpush1.msra.mxu0 0.0
      %2146 = vmatprep.subr.mxu0 0.0
      %2147 = vmatpush1.msra.mxu0 0.0
      %2148 = vmatprep.subr.mxu0 0.0
      %2149 = vmatpush1.msra.mxu0 0.0
      %2150 = vmatprep.subr.mxu0 0.0
      %2151 = vmatpush1.msra.mxu0 0.0
      %2152 = vmatprep.subr.mxu0 0.0
      %2153 = vmatpush1.msra.mxu0 0.0
      %2154 = vmatprep.subr.mxu0 0.0
      %2155 = vmatpush1.msra.mxu0 0.0
      %2156 = vmatprep.subr.mxu0 0.0
      %2157 = vmatpush1.msra.mxu0 0.0
      %2158 = vmatprep.subr.mxu0 0.0
      %2159 = vmatpush1.msra.mxu0 0.0
      %2160 = vmatprep.subr.mxu0 0.0
      %2161 = vmatpush1.msra.mxu0 0.0
      %2162 = vmatprep.subr.mxu0 0.0
      %2163 = vmatpush1.msra.mxu0 0.0
      %2164 = vmatprep.mubr.f32.mxu0 0.0
      %2165 = vmatmul.mubr.f32.gmra.mrb[0].mxu0 %v2092
      %v2166 = vpop.f32.mrb[0].mxu0
      %v2167 = vadd.f32 0.0, %v2166
      %v2168 = vpop.f32.mrb[0].mxu0
      %2169 = vmatprep.mubr.f32.mxu0 0.0
      %2170 = vmatmul.mubr.f32.gmra.mrb[0].mxu0 %v2095
      %v2171 = vpop.f32.mrb[0].mxu0
      %v2172 = vadd.f32 0.0, %v2171
      %v2173 = vpop.f32.mrb[0].mxu0
      %2174 = vdwg.mxu0
      %v2175 = vadd.f32 %v1967, %v2167
      %v2176 = vadd.f32 %v1968, %v2172
      %v2177 = vld [vmem:[%s898] sm:$0xff]
      %v2178 = vld [vmem:[%s898 + $0x8] sm:$0xff]
      %v2179 = vld [vmem:[%s898 + $0x10] sm:$0xff]
      %v2180 = vld [vmem:[%s898 + $0x18] sm:$0xff]
      %v2181 = vld [vmem:[%s901] sm:$0x1]
      %v2183 = vlaneseq
      %v2184 = vshrl.u32 %v2183, 7
      %v2185 = vsub.s32 0, %v2184
      %v2186 = vrot.slane %v2181, %v2185
      %v2189 = vsel %vm1035, %v2175, 0
      %v2192 = vsel %vm1035, %v2176, 0
      %2194 = vmatprep.subr.mxu0 0.0
      %2195 = vmatpush1.msra.mxu0 %v2177
      %2196 = vmatprep.subr.mxu0 0.0
      %2197 = vmatpush1.msra.mxu0 %v2178
      %2198 = vmatprep.subr.mxu0 0.0
      %2199 = vmatpush1.msra.mxu0 %v2179
      %2200 = vmatprep.subr.mxu0 0.0
      %2201 = vmatpush1.msra.mxu0 %v2180
      %2202 = vmatprep.subr.mxu0 0.0
      %2203 = vmatpush1.msra.mxu0 0.0
      %2204 = vmatprep.subr.mxu0 0.0
      %2205 = vmatpush1.msra.mxu0 0.0
      %2206 = vmatprep.subr.mxu0 0.0
      %2207 = vmatpush1.msra.mxu0 0.0
      %2208 = vmatprep.subr.mxu0 0.0
      %2209 = vmatpush1.msra.mxu0 0.0
      %2210 = vmatprep.subr.mxu0 0.0
      %2211 = vmatpush1.msra.mxu0 0.0
      %2212 = vmatprep.subr.mxu0 0.0
      %2213 = vmatpush1.msra.mxu0 0.0
      %2214 = vmatprep.subr.mxu0 0.0
      %2215 = vmatpush1.msra.mxu0 0.0
      %2216 = vmatprep.subr.mxu0 0.0
      %2217 = vmatpush1.msra.mxu0 0.0
      %2218 = vmatprep.subr.mxu0 0.0
      %2219 = vmatpush1.msra.mxu0 0.0
      %2220 = vmatprep.subr.mxu0 0.0
      %2221 = vmatpush1.msra.mxu0 0.0
      %2222 = vmatprep.subr.mxu0 0.0
      %2223 = vmatpush1.msra.mxu0 0.0
      %2224 = vmatprep.subr.mxu0 0.0
      %2225 = vmatpush1.msra.mxu0 0.0
      %2226 = vmatprep.subr.mxu0 0.0
      %2227 = vmatpush1.msra.mxu0 0.0
      %2228 = vmatprep.subr.mxu0 0.0
      %2229 = vmatpush1.msra.mxu0 0.0
      %2230 = vmatprep.subr.mxu0 0.0
      %2231 = vmatpush1.msra.mxu0 0.0
      %2232 = vmatprep.subr.mxu0 0.0
      %2233 = vmatpush1.msra.mxu0 0.0
      %2234 = vmatprep.subr.mxu0 0.0
      %2235 = vmatpush1.msra.mxu0 0.0
      %2236 = vmatprep.subr.mxu0 0.0
      %2237 = vmatpush1.msra.mxu0 0.0
      %2238 = vmatprep.subr.mxu0 0.0
      %2239 = vmatpush1.msra.mxu0 0.0
      %2240 = vmatprep.subr.mxu0 0.0
      %2241 = vmatpush1.msra.mxu0 0.0
      %2242 = vmatprep.subr.mxu0 0.0
      %2243 = vmatpush1.msra.mxu0 0.0
      %2244 = vmatprep.subr.mxu0 0.0
      %2245 = vmatpush1.msra.mxu0 0.0
      %2246 = vmatprep.subr.mxu0 0.0
      %2247 = vmatpush1.msra.mxu0 0.0
      %2248 = vmatprep.subr.mxu0 0.0
      %2249 = vmatpush1.msra.mxu0 0.0
      %2250 = vmatprep.subr.mxu0 0.0
      %2251 = vmatpush1.msra.mxu0 0.0
      %2252 = vmatprep.subr.mxu0 0.0
      %2253 = vmatpush1.msra.mxu0 0.0
      %2254 = vmatprep.subr.mxu0 0.0
      %2255 = vmatpush1.msra.mxu0 0.0
      %2256 = vmatprep.subr.mxu0 0.0
      %2257 = vmatpush1.msra.mxu0 0.0
      %2258 = vmatprep.mubr.f32.mxu0 0.0
      %2259 = vmatmul.mubr.f32.gmra.mrb[0].mxu0 %v2189
      %v2260 = vpop.f32.mrb[0].mxu0
      %v2261 = vadd.f32 %v2186, %v2260
      %v2262 = vpop.f32.mrb[0].mxu0
      %2263 = vmatprep.mubr.f32.mxu0 0.0
      %2264 = vmatmul.mubr.f32.gmra.mrb[0].mxu0 %v2192
      %v2265 = vpop.f32.mrb[0].mxu0
      %v2266 = vadd.f32 %v2186, %v2265
      %v2267 = vpop.f32.mrb[0].mxu0
      %2268 = vdwg.mxu0
      %v2269 = vadd.f32 %v1031, %v2261
      %v2270 = vadd.f32 %v1032, %v2266
      %v2271 = vld [vmem:[%s904] sm:$0x1]
      %v2272 = vld [vmem:[%s907] sm:$0x1]
      %v2273 = vsel %vm1035, %v2269, 0.0
      %2274 = vadd.xlane.f32.xlu0 %v2273
      %v2275 = vpop.xlane.xlu0 %2274
      %v2276 = vsel %vm1039, %v2270, 0.0
      %2277 = vadd.xlane.f32.xlu0 %v2276
      %v2278 = vpop.xlane.xlu0 %2277
      %v2279 = vmul.f32 %v2275, %v1043
      %v2280 = vmul.f32 %v2278, %v1043
      %v2281 = vsub.f32 %v2269, %v2279
      %v2282 = vsub.f32 %v2270, %v2280
      %v2283 = vmul.f32 %v2281, %v2281
      %v2284 = vmul.f32 %v2282, %v2282
      %v2285 = vsel %vm1035, %v2283, 0.0
      %2286 = vadd.xlane.f32.xlu0 %v2285
      %v2287 = vpop.xlane.xlu0 %2286
      %v2288 = vsel %vm1039, %v2284, 0.0
      %2289 = vadd.xlane.f32.xlu0 %v2288
      %v2290 = vpop.xlane.xlu0 %2289
      %v2291 = vmul.f32 %v2287, %v1043
      %v2292 = vmul.f32 %v2290, %v1043
      %v2293 = vadd.f32 %v2291, 1e-06
      %v2294 = vadd.f32 %v2292, 1e-06
      %v2295 = vrsqrt.pop %v2293
      %v2296 = vrsqrt.pop %v2294
      %v2297 = vmul.f32 %v2281, %v2295
      %v2298 = vmul.f32 %v2282, %v2296
      %v2300 = vlaneseq
      %v2301 = vshrl.u32 %v2300, 7
      %v2302 = vsub.s32 0, %v2301
      %v2303 = vrot.slane %v2271, %v2302
      %v2305 = vmul.f32 %v2297, %v2303
      %v2306 = vmul.f32 %v2298, %v2303
      %v2308 = vlaneseq
      %v2309 = vshrl.u32 %v2308, 7
      %v2310 = vsub.s32 0, %v2309
      %v2311 = vrot.slane %v2272, %v2310
      %v2313 = vadd.f32 %v2305, %v2311
      %v2314 = vadd.f32 %v2306, %v2311
      %v2315 = vld [vmem:[%s912] sm:$0xff]
      %v2316 = vld [vmem:[%s912 + $0x8] sm:$0xff]
      %v2317 = vld [vmem:[%s912 + $0x10] sm:$0xff]
      %v2318 = vld [vmem:[%s912 + $0x18] sm:$0xff]
      %v2319 = vld [vmem:[%s915] sm:$0x1]
      %v2321 = vlaneseq
      %v2322 = vshrl.u32 %v2321, 7
      %v2323 = vsub.s32 0, %v2322
      %v2324 = vrot.slane %v2319, %v2323
      %v2327 = vsel %vm1035, %v2313, 0
      %v2330 = vsel %vm1035, %v2314, 0
      %2332 = vmatprep.subr.mxu0 0.0
      %2333 = vmatpush1.msra.mxu0 %v2315
      %2334 = vmatprep.subr.mxu0 0.0
      %2335 = vmatpush1.msra.mxu0 %v2316
      %2336 = vmatprep.subr.mxu0 0.0
      %2337 = vmatpush1.msra.mxu0 %v2317
      %2338 = vmatprep.subr.mxu0 0.0
      %2339 = vmatpush1.msra.mxu0 %v2318
      %2340 = vmatprep.subr.mxu0 0.0
      %2341 = vmatpush1.msra.mxu0 0.0
      %2342 = vmatprep.subr.mxu0 0.0
      %2343 = vmatpush1.msra.mxu0 0.0
      %2344 = vmatprep.subr.mxu0 0.0
      %2345 = vmatpush1.msra.mxu0 0.0
      %2346 = vmatprep.subr.mxu0 0.0
      %2347 = vmatpush1.msra.mxu0 0.0
      %2348 = vmatprep.subr.mxu0 0.0
      %2349 = vmatpush1.msra.mxu0 0.0
      %2350 = vmatprep.subr.mxu0 0.0
      %2351 = vmatpush1.msra.mxu0 0.0
      %2352 = vmatprep.subr.mxu0 0.0
      %2353 = vmatpush1.msra.mxu0 0.0
      %2354 = vmatprep.subr.mxu0 0.0
      %2355 = vmatpush1.msra.mxu0 0.0
      %2356 = vmatprep.subr.mxu0 0.0
      %2357 = vmatpush1.msra.mxu0 0.0
      %2358 = vmatprep.subr.mxu0 0.0
      %2359 = vmatpush1.msra.mxu0 0.0
      %2360 = vmatprep.subr.mxu0 0.0
      %2361 = vmatpush1.msra.mxu0 0.0
      %2362 = vmatprep.subr.mxu0 0.0
      %2363 = vmatpush1.msra.mxu0 0.0
      %2364 = vmatprep.subr.mxu0 0.0
      %2365 = vmatpush1.msra.mxu0 0.0
      %2366 = vmatprep.subr.mxu0 0.0
      %2367 = vmatpush1.msra.mxu0 0.0
      %2368 = vmatprep.subr.mxu0 0.0
      %2369 = vmatpush1.msra.mxu0 0.0
      %2370 = vmatprep.subr.mxu0 0.0
      %2371 = vmatpush1.msra.mxu0 0.0
      %2372 = vmatprep.subr.mxu0 0.0
      %2373 = vmatpush1.msra.mxu0 0.0
      %2374 = vmatprep.subr.mxu0 0.0
      %2375 = vmatpush1.msra.mxu0 0.0
      %2376 = vmatprep.subr.mxu0 0.0
      %2377 = vmatpush1.msra.mxu0 0.0
      %2378 = vmatprep.subr.mxu0 0.0
      %2379 = vmatpush1.msra.mxu0 0.0
      %2380 = vmatprep.subr.mxu0 0.0
      %2381 = vmatpush1.msra.mxu0 0.0
      %2382 = vmatprep.subr.mxu0 0.0
      %2383 = vmatpush1.msra.mxu0 0.0
      %2384 = vmatprep.subr.mxu0 0.0
      %2385 = vmatpush1.msra.mxu0 0.0
      %2386 = vmatprep.subr.mxu0 0.0
      %2387 = vmatpush1.msra.mxu0 0.0
      %2388 = vmatprep.subr.mxu0 0.0
      %2389 = vmatpush1.msra.mxu0 0.0
      %2390 = vmatprep.subr.mxu0 0.0
      %2391 = vmatpush1.msra.mxu0 0.0
      %2392 = vmatprep.subr.mxu0 0.0
      %2393 = vmatpush1.msra.mxu0 0.0
      %2394 = vmatprep.subr.mxu0 0.0
      %2395 = vmatpush1.msra.mxu0 0.0
      %2396 = vmatprep.mubr.f32.mxu0 0.0
      %2397 = vmatmul.mubr.f32.gmra.mrb[0].mxu0 %v2327
      %v2398 = vpop.f32.mrb[0].mxu0
      %v2399 = vadd.f32 %v2324, %v2398
      %v2400 = vpop.f32.mrb[0].mxu0
      %2401 = vmatprep.mubr.f32.mxu0 0.0
      %2402 = vmatmul.mubr.f32.gmra.mrb[0].mxu0 %v2330
      %v2403 = vpop.f32.mrb[0].mxu0
      %v2404 = vadd.f32 %v2324, %v2403
      %v2405 = vpop.f32.mrb[0].mxu0
      %2406 = vdwg.mxu0
      %v2407 = vmul.f32 %v2399, 0.5
      %v2408 = vmul.f32 %v2404, 0.5
      %v2409 = vmul.f32 %v2399, 0.044715
      %v2410 = vmul.f32 %v2404, 0.044715
      %v2411 = vmul.f32 %v2409, %v2399
      %v2412 = vmul.f32 %v2410, %v2404
      %v2413 = vmul.f32 %v2411, %v2399
      %v2414 = vmul.f32 %v2412, %v2404
      %v2415 = vadd.f32 %v2399, %v2413
      %v2416 = vadd.f32 %v2404, %v2414
      %v2417 = vmul.f32 %v2415, 0.7978846
      %v2418 = vmul.f32 %v2416, 0.7978846
      %v2419 = vtanh.pop %v2417
      %v2420 = vtanh.pop %v2418
      %v2421 = vadd.f32 %v2419, 1.0
      %v2422 = vadd.f32 %v2420, 1.0
      %v2423 = vmul.f32 %v2407, %v2421
      %v2424 = vmul.f32 %v2408, %v2422
      %v2425 = vld [vmem:[%s920] sm:$0xff]
      %v2426 = vld [vmem:[%s920 + $0x8] sm:$0xff]
      %v2427 = vld [vmem:[%s920 + $0x10] sm:$0xff]
      %v2428 = vld [vmem:[%s920 + $0x18] sm:$0xff]
      %v2429 = vld [vmem:[%s920 + $0x20] sm:$0xff]
      %v2430 = vld [vmem:[%s920 + $0x28] sm:$0xff]
      %v2431 = vld [vmem:[%s920 + $0x30] sm:$0xff]
      %v2432 = vld [vmem:[%s920 + $0x38] sm:$0xff]
      %v2433 = vld [vmem:[%s920 + $0x40] sm:$0xff]
      %v2434 = vld [vmem:[%s920 + $0x48] sm:$0xff]
      %v2435 = vld [vmem:[%s920 + $0x50] sm:$0xff]
      %v2436 = vld [vmem:[%s920 + $0x58] sm:$0xff]
      %v2437 = vld [vmem:[%s920 + $0x60] sm:$0xff]
      %v2438 = vld [vmem:[%s920 + $0x68] sm:$0xff]
      %v2439 = vld [vmem:[%s920 + $0x70] sm:$0xff]
      %v2440 = vld [vmem:[%s920 + $0x78] sm:$0xff]
      %v2441 = vld [vmem:[%s923] sm:$0x1]
      %v2443 = vlaneseq
      %v2444 = vshrl.u32 %v2443, 7
      %v2445 = vsub.s32 0, %v2444
      %v2446 = vrot.slane %v2441, %v2445
      %2448 = vmatprep.subr.mxu0 0.0
      %2449 = vmatpush1.msra.mxu0 %v2425
      %2450 = vmatprep.subr.mxu0 0.0
      %2451 = vmatpush1.msra.mxu0 %v2426
      %2452 = vmatprep.subr.mxu0 0.0
      %2453 = vmatpush1.msra.mxu0 %v2427
      %2454 = vmatprep.subr.mxu0 0.0
      %2455 = vmatpush1.msra.mxu0 %v2428
      %2456 = vmatprep.subr.mxu0 0.0
      %2457 = vmatpush1.msra.mxu0 %v2429
      %2458 = vmatprep.subr.mxu0 0.0
      %2459 = vmatpush1.msra.mxu0 %v2430
      %2460 = vmatprep.subr.mxu0 0.0
      %2461 = vmatpush1.msra.mxu0 %v2431
      %2462 = vmatprep.subr.mxu0 0.0
      %2463 = vmatpush1.msra.mxu0 %v2432
      %2464 = vmatprep.subr.mxu0 0.0
      %2465 = vmatpush1.msra.mxu0 %v2433
      %2466 = vmatprep.subr.mxu0 0.0
      %2467 = vmatpush1.msra.mxu0 %v2434
      %2468 = vmatprep.subr.mxu0 0.0
      %2469 = vmatpush1.msra.mxu0 %v2435
      %2470 = vmatprep.subr.mxu0 0.0
      %2471 = vmatpush1.msra.mxu0 %v2436
      %2472 = vmatprep.subr.mxu0 0.0
      %2473 = vmatpush1.msra.mxu0 %v2437
      %2474 = vmatprep.subr.mxu0 0.0
      %2475 = vmatpush1.msra.mxu0 %v2438
      %2476 = vmatprep.subr.mxu0 0.0
      %2477 = vmatpush1.msra.mxu0 %v2439
      %2478 = vmatprep.subr.mxu0 0.0
      %2479 = vmatpush1.msra.mxu0 %v2440
      %2480 = vmatprep.subr.mxu0 0.0
      %2481 = vmatpush1.msra.mxu0 0.0
      %2482 = vmatprep.subr.mxu0 0.0
      %2483 = vmatpush1.msra.mxu0 0.0
      %2484 = vmatprep.subr.mxu0 0.0
      %2485 = vmatpush1.msra.mxu0 0.0
      %2486 = vmatprep.subr.mxu0 0.0
      %2487 = vmatpush1.msra.mxu0 0.0
      %2488 = vmatprep.subr.mxu0 0.0
      %2489 = vmatpush1.msra.mxu0 0.0
      %2490 = vmatprep.subr.mxu0 0.0
      %2491 = vmatpush1.msra.mxu0 0.0
      %2492 = vmatprep.subr.mxu0 0.0
      %2493 = vmatpush1.msra.mxu0 0.0
      %2494 = vmatprep.subr.mxu0 0.0
      %2495 = vmatpush1.msra.mxu0 0.0
      %2496 = vmatprep.subr.mxu0 0.0
      %2497 = vmatpush1.msra.mxu0 0.0
      %2498 = vmatprep.subr.mxu0 0.0
      %2499 = vmatpush1.msra.mxu0 0.0
      %2500 = vmatprep.subr.mxu0 0.0
      %2501 = vmatpush1.msra.mxu0 0.0
      %2502 = vmatprep.subr.mxu0 0.0
      %2503 = vmatpush1.msra.mxu0 0.0
      %2504 = vmatprep.subr.mxu0 0.0
      %2505 = vmatpush1.msra.mxu0 0.0
      %2506 = vmatprep.subr.mxu0 0.0
      %2507 = vmatpush1.msra.mxu0 0.0
      %2508 = vmatprep.subr.mxu0 0.0
      %2509 = vmatpush1.msra.mxu0 0.0
      %2510 = vmatprep.subr.mxu0 0.0
      %2511 = vmatpush1.msra.mxu0 0.0
      %2512 = vmatprep.mubr.f32.mxu0 0.0
      %2513 = vmatmul.mubr.f32.gmra.mrb[0].mxu0 %v2423
      %v2514 = vpop.f32.mrb[0].mxu0
      %v2515 = vadd.f32 %v2446, %v2514
      %v2516 = vpop.f32.mrb[0].mxu0
      %2517 = vmatprep.mubr.f32.mxu0 0.0
      %2518 = vmatmul.mubr.f32.gmra.mrb[0].mxu0 %v2424
      %v2519 = vpop.f32.mrb[0].mxu0
      %v2520 = vadd.f32 %v2446, %v2519
      %v2521 = vpop.f32.mrb[0].mxu0
      %2522 = vdwg.mxu0
      %v2523 = vadd.f32 %v2269, %v2515
      %v2524 = vadd.f32 %v2270, %v2520
      %2525 = vst.msk [vmem:[#allocation2] sm:$0xff] %vm1035, %v2523
      %2526 = vst.msk [vmem:[#allocation2 + $0x8] sm:$0x1] %vm1039, %v2524
      %p2527 = scmp.eq.s32.totalorder %s37, 1
      // Predicated region
      $region109: #{_lambda_.3} parent=103 // pred_check
        %p2528 = pneg %p2527
      $region110: #{_lambda_.3} parent=103 // pred_check_branch
        %2530 = sbr.rel (%p2528) target = $region112
      $region111: #{_lambda_.3} parent=103 // pred_region
        %v2531 = vld [vmem:[%s19] sm:$0x1]
        %v2532 = vld [vmem:[%s20] sm:$0x1]
        %v2533 = vsel %vm1035, %v2523, 0.0
        %2534 = vadd.xlane.f32.xlu0 %v2533
        %v2535 = vpop.xlane.xlu0 %2534
        %v2536 = vsel %vm1039, %v2524, 0.0
        %2537 = vadd.xlane.f32.xlu0 %v2536
        %v2538 = vpop.xlane.xlu0 %2537
        %v2539 = vmul.f32 %v2535, %v1043
        %v2540 = vmul.f32 %v2538, %v1043
        %v2541 = vsub.f32 %v2523, %v2539
        %v2542 = vsub.f32 %v2524, %v2540
        %v2543 = vmul.f32 %v2541, %v2541
        %v2544 = vmul.f32 %v2542, %v2542
        %v2545 = vsel %vm1035, %v2543, 0.0
        %2546 = vadd.xlane.f32.xlu0 %v2545
        %v2547 = vpop.xlane.xlu0 %2546
        %v2548 = vsel %vm1039, %v2544, 0.0
        %2549 = vadd.xlane.f32.xlu0 %v2548
        %v2550 = vpop.xlane.xlu0 %2549
        %v2551 = vmul.f32 %v2547, %v1043
        %v2552 = vmul.f32 %v2550, %v1043
        %v2553 = vadd.f32 %v2551, 1e-06
        %v2554 = vadd.f32 %v2552, 1e-06
        %v2555 = vrsqrt.pop %v2553
        %v2556 = vrsqrt.pop %v2554
        %v2557 = vmul.f32 %v2541, %v2555
        %v2558 = vmul.f32 %v2542, %v2556
        %v2560 = vlaneseq
        %v2561 = vshrl.u32 %v2560, 7
        %v2562 = vsub.s32 0, %v2561
        %v2563 = vrot.slane %v2531, %v2562
        %v2565 = vmul.f32 %v2557, %v2563
        %v2566 = vmul.f32 %v2558, %v2563
        %v2568 = vlaneseq
        %v2569 = vshrl.u32 %v2568, 7
        %v2570 = vsub.s32 0, %v2569
        %v2571 = vrot.slane %v2532, %v2570
        %v2573 = vadd.f32 %v2565, %v2571
        %v2574 = vadd.f32 %v2566, %v2571
        %2575 = vst.msk [vmem:[%s928] sm:$0xff] %vm1035, %v2573
        %2576 = vst.msk [vmem:[%s928 + $0x8] sm:$0x1] %vm1039, %v2574
      $region112: #{_lambda_.3} parent=103 // pred_fallthru
        _
      %p2577 = scmp.lt.s32.totalorder %s36, 1
      %s2578 = scalar_select %p2577, %s36, 1
      %s2579 = smul.addr %s2578, 2
      %s2580 = smul.addr %s2579, 8
      %s2581 = scalar_lea.vmem %s21, %s2580
      // Predicated region
      $region113: #{_lambda_.3} parent=103 // pred_check
        %p2582 = pneg %p588
      $region114: #{_lambda_.3} parent=103 // pred_check_branch
        %2584 = sbr.rel (%p2582) target = $region116
      $region115: #{_lambda_.3} parent=103 // pred_region
        _
      $region116: #{_lambda_.3} parent=103 // pred_fallthru
        _
    $region104: #{_lambda_.3} parent=5 // pred_fallthru
      _
    %p2585 = scmp.le.s32.totalorder 2, %s27
    // Predicated region
    $region117: #{_lambda_.3} parent=5 // pred_check
      %p2586 = pneg %p2585
    $region118: #{_lambda_.3} parent=5 // pred_check_branch
      %2588 = sbr.rel (%p2586) target = $region120
    $region119: #{_lambda_.3} parent=5 // pred_region
      %s2589 = ssub.s32 %s27, 2
      // Predicated region
      $region121: #{_lambda_.3} parent=119 // pred_check
        %p2590 = pneg %p594
      $region122: #{_lambda_.3} parent=119 // pred_check_branch
        %2592 = sbr.rel (%p2590) target = $region124
      $region123: #{_lambda_.3} parent=119 // pred_region
        %p2593 = scmp.lt.s32.totalorder %s38, 1
        %s2594 = scalar_select %p2593, %s38, 1
        %s2595 = smul.addr %s2594, 2
        %s2596 = smul.addr %s2595, 8
        %s2597 = scalar_lea.vmem %s21, %s2596
      $region124: #{_lambda_.3} parent=119 // pred_fallthru
        _
    $region120: #{_lambda_.3} parent=5 // pred_fallthru
      _
  $region6: #{_lambda_.3} parent=0 // loop_footer
    %s31 = sadd.s32 1, %s27
  $region7: #{_lambda_.3} parent=0 // loop_footer_branch
    %26 = sbr.rel target = $region3
  $region8: #{_lambda_.3} parent=0 // loop_exit
    _

</llo_original>
